<compile_context>
chip_gen: v7x
topology: tpu7x:2x2x1
jax: 0.10.0
libtpu: 0.0.40
codegen_flags: <defaults>
</compile_context>

<pallas_src>
import jax
import jax.numpy as jnp
from jax import lax
from jax.experimental import pallas as pl
from jax.experimental.pallas import tpu as pltpu

IMG_SHAPE = (3, 128, 128)
IMG_NUMEL = IMG_SHAPE[0] * IMG_SHAPE[1] * IMG_SHAPE[2]   # 49152
LATENT_DIM = 100
BN_EPS = 0.8           # nn.BatchNorm1d(out_feat, 0.8): 2nd positional arg is eps
LEAKY_SLOPE = 0.2

K_FINAL = 1024         # final-layer contraction dim
TN = 8192              # final-layer output tile (lane dim)
N_TILES = IMG_NUMEL // TN     # 6 streaming grid steps
SUB = 1024             # in-kernel dequant/matmul column chunk
N_SUB = TN // SUB      # 8 inner iterations per grid step


# ---------------------------------------------------------------------------
# Kernel helpers
# ---------------------------------------------------------------------------
def _lrelu(y):
    return jnp.where(y >= 0, y, LEAKY_SLOPE * y)


def _bn_lrelu(y, gamma, beta):
    # BatchNorm1d (training mode, biased batch variance) folded into one
    # scale/shift: var = E[y^2] - mean^2; out = y*inv + (beta - mean*inv).
    mean = jnp.mean(y, axis=0, keepdims=True)
    mean_sq = jnp.mean(y * y, axis=0, keepdims=True)
    var = mean_sq - mean * mean
    inv = gamma * lax.rsqrt(var + BN_EPS)
    return _lrelu(y * inv + (beta - mean * inv))


# ---------------------------------------------------------------------------
# Fused generator kernel
# ---------------------------------------------------------------------------
def _generator_kernel(z_ref,
                      w0_ref, b0_ref,
                      w1_ref, b1_ref, g1_ref, be1_ref,
                      w2_ref, b2_ref, g2_ref, be2_ref,
                      w3_ref, b3_ref, g3_ref, be3_ref,
                      wq_ref, sc_ref, b4_ref,
                      o_ref, h_ref):
    j = pl.program_id(0)

    # ---- one-time hidden stack (intermediates never leave VMEM/vregs) ----
    @pl.when(j == 0)
    def _():
        x = jnp.dot(z_ref[...], w0_ref[...],
                    preferred_element_type=jnp.float32) + b0_ref[...]
        x = _lrelu(x)

        x = jnp.dot(x, w1_ref[...], preferred_element_type=jnp.float32) + b1_ref[...]
        x = _bn_lrelu(x, g1_ref[...], be1_ref[...])

        x = jnp.dot(x, w2_ref[...], preferred_element_type=jnp.float32) + b2_ref[...]
        x = _bn_lrelu(x, g2_ref[...], be2_ref[...])

        x = jnp.dot(x, w3_ref[...], preferred_element_type=jnp.float32) + b3_ref[...]
        x = _bn_lrelu(x, g3_ref[...], be3_ref[...])

        h_ref[...] = x.astype(jnp.bfloat16)    # MXU-ready dtype, resident scratch

    # ---- streaming step: one (K, TN) int8 weight slab -> one output tile ----
    h = h_ref[...]                             # (B, K) bf16

    def sub_step(c, carry):
        c0 = pl.multiple_of(c * SUB, SUB)
        # int8 values are exact in bf16; dequant scale is applied after the
        # f32 accumulate (per output channel).
        w_bf = (wq_ref[:, pl.ds(c0, SUB)]
                .astype(jnp.float32).astype(jnp.bfloat16))          # (K, SUB)
        y = jnp.dot(h, w_bf, preferred_element_type=jnp.float32)    # (B, SUB)
        y = y * sc_ref[:, pl.ds(c0, SUB)] + b4_ref[:, pl.ds(c0, SUB)]
        o_ref[:, pl.ds(c0, SUB)] = jnp.tanh(y)
        return carry

    lax.fori_loop(0, N_SUB, sub_step, 0)


# ---------------------------------------------------------------------------
# Wrapper
# ---------------------------------------------------------------------------
def generator_forward(z, params):
    B = z.shape[0]

    def row(v):
        return v.reshape(1, -1)

    args = (
        z,
        params["w0"], row(params["b0"]),
        params["w1"], row(params["b1"]), row(params["g1"]), row(params["be1"]),
        params["w2"], row(params["b2"]), row(params["g2"]), row(params["be2"]),
        params["w3"], row(params["b3"]), row(params["g3"]), row(params["be3"]),
        params["wq4"], row(params["scale4"]), row(params["b4"]),
    )

    # Small (constant-index) operands: loaded once, stay resident in VMEM.
    in_specs = [pl.BlockSpec(a.shape, lambda j: (0, 0)) for a in args[:-3]]
    # Streamed operands: contiguous int8 weight slab + its scale / bias tiles.
    in_specs += [
        pl.BlockSpec((None, K_FINAL, TN), lambda j: (j, 0, 0)),  # (K, TN) in-kernel
        pl.BlockSpec((1, TN), lambda j: (0, j)),                 # per-col scale
        pl.BlockSpec((1, TN), lambda j: (0, j)),                 # bias
    ]

    img_flat = pl.pallas_call(
        _generator_kernel,
        out_shape=jax.ShapeDtypeStruct((B, IMG_NUMEL), jnp.float32),
        grid=(N_TILES,),
        in_specs=in_specs,
        out_specs=pl.BlockSpec((B, TN), lambda j: (0, j)),
        scratch_shapes=[pltpu.VMEM((B, K_FINAL), jnp.bfloat16)],   # persistent h
        compiler_params=pltpu.CompilerParams(
            # "arbitrary": the pl.when(step==0) hidden compute + persistent
            # scratch must run sequentially on one core; the kernel is
            # HBM-bound so a megacore split would not help anyway.
            dimension_semantics=("arbitrary",),
            vmem_limit_bytes=48 * 1024 * 1024,
        ),
    )(*args)
    return img_flat.reshape(B, *IMG_SHAPE)


# ---------------------------------------------------------------------------
# Parameter init (deterministic, synthetic) + pure-JAX f32 reference
# ---------------------------------------------------------------------------
def init_params(key):
    layer_dims = [
        (LATENT_DIM, 128),
        (128, 256),
        (256, 512),
        (512, 1024),
        (1024, IMG_NUMEL),
    ]
    raw = {}
    keys = jax.random.split(key, 2 * len(layer_dims))
    for i, (fin, fout) in enumerate(layer_dims):
        kw, kb = keys[2 * i], keys[2 * i + 1]
        raw[f"w{i}"] = (jax.random.normal(kw, (fin, fout), jnp.float32)
                        * (1.0 / jnp.sqrt(float(fin))))
        raw[f"b{i}"] = 0.01 * jax.random.normal(kb, (fout,), jnp.float32)
    # BatchNorm affine params (PyTorch default init: gamma=1, beta=0)
    for i, fout in zip((1, 2, 3), (256, 512, 1024)):
        raw[f"g{i}"] = jnp.ones((fout,), jnp.float32)
        raw[f"be{i}"] = jnp.zeros((fout,), jnp.float32)

    packed = {k: v for k, v in raw.items() if k != "w4"}

    # Per-output-channel symmetric int8 quantization of the final weight,
    # pre-blocked into contiguous (N_TILES, K, TN) slabs (one linear DMA per
    # grid step).  Dequant scale applied in-kernel after the f32 accumulate.
    w4 = raw["w4"]                                             # (K, N) f32
    absmax = jnp.max(jnp.abs(w4), axis=0, keepdims=True)       # (1, N)
    scale = jnp.maximum(absmax / 127.0, 1e-12)
    wq = jnp.clip(jnp.round(w4 / scale), -127.0, 127.0).astype(jnp.int8)
    packed["wq4"] = (wq.reshape(K_FINAL, N_TILES, TN)
                       .transpose(1, 0, 2))                    # (N_TILES, K, TN)
    packed["scale4"] = scale.reshape(-1)                       # (N,)
    return raw, packed


def reference_forward(z, raw):
    """Pure-JAX f32 reference matching the PyTorch module (train-mode BN)."""
    x = _lrelu(z @ raw["w0"] + raw["b0"])
    for i in (1, 2, 3):
        y = x @ raw[f"w{i}"] + raw[f"b{i}"]
        mean = y.mean(axis=0)
        var = ((y - mean) ** 2).mean(axis=0)          # biased batch variance
        y = raw[f"g{i}"] * (y - mean) / jnp.sqrt(var + BN_EPS) + raw[f"be{i}"]
        x = _lrelu(y)
    y = x @ raw["w4"] + raw["b4"]
    return jnp.tanh(y).reshape(z.shape[0], *IMG_SHAPE)


if __name__ == "__main__":
    key = jax.random.PRNGKey(0)
    k_z, k_p = jax.random.split(key)

    # z ~ Normal(0, 3) with shape (2, 100), matching the reference script.
    z = 3.0 * jax.random.normal(k_z, (2, LATENT_DIM), jnp.float32)
    raw, packed = init_params(k_p)

    img = jax.jit(generator_forward)(z, packed)
    img = jax.block_until_ready(img)

    assert img.shape == (2, *IMG_SHAPE), img.shape
    assert img.dtype == jnp.float32
    assert bool(jnp.all(jnp.isfinite(img)))

    # Loose check vs. the f32 reference (int8 weights + bf16 activations
    # introduce small, bounded error after tanh).
    ref = reference_forward(z, raw)
    max_err = float(jnp.max(jnp.abs(img - ref)))
    mean_err = float(jnp.mean(jnp.abs(img - ref)))
    assert max_err < 0.25 and mean_err < 0.03, (max_err, mean_err)

    print("KERNEL_OK")
</pallas_src>

<mosaic_0001>
module attributes {stable_mosaic.version = 11 : i64} {
  func.func @_generator_kernel(%arg0: i32, %arg1: memref<2x100xf32, #tpu.memory_space<vmem>>, %arg2: memref<100x128xf32, #tpu.memory_space<vmem>>, %arg3: memref<1x128xf32, #tpu.memory_space<vmem>>, %arg4: memref<128x256xf32, #tpu.memory_space<vmem>>, %arg5: memref<1x256xf32, #tpu.memory_space<vmem>>, %arg6: memref<1x256xf32, #tpu.memory_space<vmem>>, %arg7: memref<1x256xf32, #tpu.memory_space<vmem>>, %arg8: memref<256x512xf32, #tpu.memory_space<vmem>>, %arg9: memref<1x512xf32, #tpu.memory_space<vmem>>, %arg10: memref<1x512xf32, #tpu.memory_space<vmem>>, %arg11: memref<1x512xf32, #tpu.memory_space<vmem>>, %arg12: memref<512x1024xf32, #tpu.memory_space<vmem>>, %arg13: memref<1x1024xf32, #tpu.memory_space<vmem>>, %arg14: memref<1x1024xf32, #tpu.memory_space<vmem>>, %arg15: memref<1x1024xf32, #tpu.memory_space<vmem>>, %arg16: memref<1x1024x8192xi8, #tpu.memory_space<vmem>>, %arg17: memref<1x8192xf32, #tpu.memory_space<vmem>>, %arg18: memref<1x8192xf32, #tpu.memory_space<vmem>>, %arg19: memref<2x8192xf32, #tpu.memory_space<vmem>>, %arg20: memref<2x1024xbf16, #tpu.memory_space<vmem>>) attributes {dimension_semantics = [#tpu.dimension_semantics<arbitrary>], iteration_bounds = array<i64: 6>, scalar_prefetch = 0 : i64, scratch_operands = 1 : i64, tpu.core_type = #tpu.core_type<tc>, window_params = [{pipeline_mode = #tpu.pipeline_mode<synchronous>, transform_indices = @transform_0, window_bounds = array<i64: 2, 100>}, {pipeline_mode = #tpu.pipeline_mode<synchronous>, transform_indices = @transform_1, window_bounds = array<i64: 100, 128>}, {pipeline_mode = #tpu.pipeline_mode<synchronous>, transform_indices = @transform_2, window_bounds = array<i64: 1, 128>}, {pipeline_mode = #tpu.pipeline_mode<synchronous>, transform_indices = @transform_3, window_bounds = array<i64: 128, 256>}, {pipeline_mode = #tpu.pipeline_mode<synchronous>, transform_indices = @transform_4, window_bounds = array<i64: 1, 256>}, {pipeline_mode = #tpu.pipeline_mode<synchronous>, transform_indices = @transform_5, window_bounds = array<i64: 1, 256>}, {pipeline_mode = #tpu.pipeline_mode<synchronous>, transform_indices = @transform_6, window_bounds = array<i64: 1, 256>}, {pipeline_mode = #tpu.pipeline_mode<synchronous>, transform_indices = @transform_7, window_bounds = array<i64: 256, 512>}, {pipeline_mode = #tpu.pipeline_mode<synchronous>, transform_indices = @transform_8, window_bounds = array<i64: 1, 512>}, {pipeline_mode = #tpu.pipeline_mode<synchronous>, transform_indices = @transform_9, window_bounds = array<i64: 1, 512>}, {pipeline_mode = #tpu.pipeline_mode<synchronous>, transform_indices = @transform_10, window_bounds = array<i64: 1, 512>}, {pipeline_mode = #tpu.pipeline_mode<synchronous>, transform_indices = @transform_11, window_bounds = array<i64: 512, 1024>}, {pipeline_mode = #tpu.pipeline_mode<synchronous>, transform_indices = @transform_12, window_bounds = array<i64: 1, 1024>}, {pipeline_mode = #tpu.pipeline_mode<synchronous>, transform_indices = @transform_13, window_bounds = array<i64: 1, 1024>}, {pipeline_mode = #tpu.pipeline_mode<synchronous>, transform_indices = @transform_14, window_bounds = array<i64: 1, 1024>}, {transform_indices = @transform_15, window_bounds = array<i64: 1, 1024, 8192>}, {transform_indices = @transform_16, window_bounds = array<i64: 1, 8192>}, {transform_indices = @transform_17, window_bounds = array<i64: 1, 8192>}, {transform_indices = @transform_18, window_bounds = array<i64: 2, 8192>}]} {
    %c0_i32 = arith.constant 0 : i32
    %0 = arith.cmpi eq, %arg0, %c0_i32 : i32
    %1 = arith.extui %0 : i1 to i32
    %c0_i32_0 = arith.constant 0 : i32
    %2 = arith.cmpi ne, %1, %c0_i32_0 : i32
    scf.if %2 {
      %c0_4 = arith.constant 0 : index
      %c0_5 = arith.constant 0 : index
      %5 = vector.load %arg1[%c0_4, %c0_5] : memref<2x100xf32, #tpu.memory_space<vmem>>, vector<2x100xf32>
      %c0_6 = arith.constant 0 : index
      %c0_7 = arith.constant 0 : index
      %6 = vector.load %arg2[%c0_6, %c0_7] : memref<100x128xf32, #tpu.memory_space<vmem>>, vector<100x128xf32>
      %cst = arith.constant dense<0.000000e+00> : vector<2x128xf32>
      %7 = tpu.matmul %5, %6, %cst {dimension_numbers = #tpu.dot_dimension_numbers<[1], [0], [0], [1], [0, 0, 1, 1], [], []>} : vector<2x100xf32>, vector<100x128xf32>, vector<2x128xf32> -> vector<2x128xf32>
      %c0_8 = arith.constant 0 : index
      %c0_9 = arith.constant 0 : index
      %8 = vector.load %arg3[%c0_8, %c0_9] : memref<1x128xf32, #tpu.memory_space<vmem>>, vector<1x128xf32>
      %9 = vector.broadcast %8 : vector<1x128xf32> to vector<2x128xf32>
      %10 = arith.addf %7, %9 : vector<2x128xf32>
      %cst_10 = arith.constant 0.000000e+00 : f32
      %11 = vector.broadcast %cst_10 : f32 to vector<2x128xf32>
      %12 = arith.cmpf oge, %10, %11 : vector<2x128xf32>
      %cst_11 = arith.constant 2.000000e-01 : f32
      %13 = vector.broadcast %cst_11 : f32 to vector<2x128xf32>
      %14 = arith.mulf %13, %10 : vector<2x128xf32>
      %15 = arith.select %12, %10, %14 : vector<2x128xi1>, vector<2x128xf32>
      %c0_12 = arith.constant 0 : index
      %c0_13 = arith.constant 0 : index
      %16 = vector.load %arg4[%c0_12, %c0_13] : memref<128x256xf32, #tpu.memory_space<vmem>>, vector<128x256xf32>
      %cst_14 = arith.constant dense<0.000000e+00> : vector<2x256xf32>
      %17 = tpu.matmul %15, %16, %cst_14 {dimension_numbers = #tpu.dot_dimension_numbers<[1], [0], [0], [1], [0, 0, 1, 1], [], []>} : vector<2x128xf32>, vector<128x256xf32>, vector<2x256xf32> -> vector<2x256xf32>
      %c0_15 = arith.constant 0 : index
      %c0_16 = arith.constant 0 : index
      %18 = vector.load %arg5[%c0_15, %c0_16] : memref<1x256xf32, #tpu.memory_space<vmem>>, vector<1x256xf32>
      %19 = vector.broadcast %18 : vector<1x256xf32> to vector<2x256xf32>
      %20 = arith.addf %17, %19 : vector<2x256xf32>
      %c0_17 = arith.constant 0 : index
      %c0_18 = arith.constant 0 : index
      %21 = vector.load %arg6[%c0_17, %c0_18] : memref<1x256xf32, #tpu.memory_space<vmem>>, vector<1x256xf32>
      %c0_19 = arith.constant 0 : index
      %c0_20 = arith.constant 0 : index
      %22 = vector.load %arg7[%c0_19, %c0_20] : memref<1x256xf32, #tpu.memory_space<vmem>>, vector<1x256xf32>
      %cst_21 = arith.constant dense<0.000000e+00> : vector<256xf32>
      %23 = vector.multi_reduction <add>, %20, %cst_21 [0] : vector<2x256xf32> to vector<256xf32>
      %24 = vector.shape_cast %23 : vector<256xf32> to vector<1x256xf32>
      %cst_22 = arith.constant 2.000000e+00 : f32
      %25 = vector.broadcast %cst_22 : f32 to vector<1x256xf32>
      %26 = arith.divf %24, %25 : vector<1x256xf32>
      %27 = arith.mulf %20, %20 : vector<2x256xf32>
      %cst_23 = arith.constant dense<0.000000e+00> : vector<256xf32>
      %28 = vector.multi_reduction <add>, %27, %cst_23 [0] : vector<2x256xf32> to vector<256xf32>
      %29 = vector.shape_cast %28 : vector<256xf32> to vector<1x256xf32>
      %cst_24 = arith.constant 2.000000e+00 : f32
      %30 = vector.broadcast %cst_24 : f32 to vector<1x256xf32>
      %31 = arith.divf %29, %30 : vector<1x256xf32>
      %32 = arith.mulf %26, %26 : vector<1x256xf32>
      %33 = arith.subf %31, %32 : vector<1x256xf32>
      %cst_25 = arith.constant 8.000000e-01 : f32
      %34 = vector.broadcast %cst_25 : f32 to vector<1x256xf32>
      %35 = arith.addf %33, %34 : vector<1x256xf32>
      %36 = math.rsqrt %35 : vector<1x256xf32>
      %37 = arith.mulf %21, %36 : vector<1x256xf32>
      %38 = vector.broadcast %37 : vector<1x256xf32> to vector<2x256xf32>
      %39 = arith.mulf %20, %38 : vector<2x256xf32>
      %40 = arith.mulf %26, %37 : vector<1x256xf32>
      %41 = arith.subf %22, %40 : vector<1x256xf32>
      %42 = vector.broadcast %41 : vector<1x256xf32> to vector<2x256xf32>
      %43 = arith.addf %39, %42 : vector<2x256xf32>
      %cst_26 = arith.constant 0.000000e+00 : f32
      %44 = vector.broadcast %cst_26 : f32 to vector<2x256xf32>
      %45 = arith.cmpf oge, %43, %44 : vector<2x256xf32>
      %cst_27 = arith.constant 2.000000e-01 : f32
      %46 = vector.broadcast %cst_27 : f32 to vector<2x256xf32>
      %47 = arith.mulf %46, %43 : vector<2x256xf32>
      %48 = arith.select %45, %43, %47 : vector<2x256xi1>, vector<2x256xf32>
      %c0_28 = arith.constant 0 : index
      %c0_29 = arith.constant 0 : index
      %49 = vector.load %arg8[%c0_28, %c0_29] : memref<256x512xf32, #tpu.memory_space<vmem>>, vector<256x512xf32>
      %cst_30 = arith.constant dense<0.000000e+00> : vector<2x512xf32>
      %50 = tpu.matmul %48, %49, %cst_30 {dimension_numbers = #tpu.dot_dimension_numbers<[1], [0], [0], [1], [0, 0, 1, 1], [], []>} : vector<2x256xf32>, vector<256x512xf32>, vector<2x512xf32> -> vector<2x512xf32>
      %c0_31 = arith.constant 0 : index
      %c0_32 = arith.constant 0 : index
      %51 = vector.load %arg9[%c0_31, %c0_32] : memref<1x512xf32, #tpu.memory_space<vmem>>, vector<1x512xf32>
      %52 = vector.broadcast %51 : vector<1x512xf32> to vector<2x512xf32>
      %53 = arith.addf %50, %52 : vector<2x512xf32>
      %c0_33 = arith.constant 0 : index
      %c0_34 = arith.constant 0 : index
      %54 = vector.load %arg10[%c0_33, %c0_34] : memref<1x512xf32, #tpu.memory_space<vmem>>, vector<1x512xf32>
      %c0_35 = arith.constant 0 : index
      %c0_36 = arith.constant 0 : index
      %55 = vector.load %arg11[%c0_35, %c0_36] : memref<1x512xf32, #tpu.memory_space<vmem>>, vector<1x512xf32>
      %cst_37 = arith.constant dense<0.000000e+00> : vector<512xf32>
      %56 = vector.multi_reduction <add>, %53, %cst_37 [0] : vector<2x512xf32> to vector<512xf32>
      %57 = vector.shape_cast %56 : vector<512xf32> to vector<1x512xf32>
      %cst_38 = arith.constant 2.000000e+00 : f32
      %58 = vector.broadcast %cst_38 : f32 to vector<1x512xf32>
      %59 = arith.divf %57, %58 : vector<1x512xf32>
      %60 = arith.mulf %53, %53 : vector<2x512xf32>
      %cst_39 = arith.constant dense<0.000000e+00> : vector<512xf32>
      %61 = vector.multi_reduction <add>, %60, %cst_39 [0] : vector<2x512xf32> to vector<512xf32>
      %62 = vector.shape_cast %61 : vector<512xf32> to vector<1x512xf32>
      %cst_40 = arith.constant 2.000000e+00 : f32
      %63 = vector.broadcast %cst_40 : f32 to vector<1x512xf32>
      %64 = arith.divf %62, %63 : vector<1x512xf32>
      %65 = arith.mulf %59, %59 : vector<1x512xf32>
      %66 = arith.subf %64, %65 : vector<1x512xf32>
      %cst_41 = arith.constant 8.000000e-01 : f32
      %67 = vector.broadcast %cst_41 : f32 to vector<1x512xf32>
      %68 = arith.addf %66, %67 : vector<1x512xf32>
      %69 = math.rsqrt %68 : vector<1x512xf32>
      %70 = arith.mulf %54, %69 : vector<1x512xf32>
      %71 = vector.broadcast %70 : vector<1x512xf32> to vector<2x512xf32>
      %72 = arith.mulf %53, %71 : vector<2x512xf32>
      %73 = arith.mulf %59, %70 : vector<1x512xf32>
      %74 = arith.subf %55, %73 : vector<1x512xf32>
      %75 = vector.broadcast %74 : vector<1x512xf32> to vector<2x512xf32>
      %76 = arith.addf %72, %75 : vector<2x512xf32>
      %cst_42 = arith.constant 0.000000e+00 : f32
      %77 = vector.broadcast %cst_42 : f32 to vector<2x512xf32>
      %78 = arith.cmpf oge, %76, %77 : vector<2x512xf32>
      %cst_43 = arith.constant 2.000000e-01 : f32
      %79 = vector.broadcast %cst_43 : f32 to vector<2x512xf32>
      %80 = arith.mulf %79, %76 : vector<2x512xf32>
      %81 = arith.select %78, %76, %80 : vector<2x512xi1>, vector<2x512xf32>
      %c0_44 = arith.constant 0 : index
      %c0_45 = arith.constant 0 : index
      %82 = vector.load %arg12[%c0_44, %c0_45] : memref<512x1024xf32, #tpu.memory_space<vmem>>, vector<512x1024xf32>
      %cst_46 = arith.constant dense<0.000000e+00> : vector<2x1024xf32>
      %83 = tpu.matmul %81, %82, %cst_46 {dimension_numbers = #tpu.dot_dimension_numbers<[1], [0], [0], [1], [0, 0, 1, 1], [], []>} : vector<2x512xf32>, vector<512x1024xf32>, vector<2x1024xf32> -> vector<2x1024xf32>
      %c0_47 = arith.constant 0 : index
      %c0_48 = arith.constant 0 : index
      %84 = vector.load %arg13[%c0_47, %c0_48] : memref<1x1024xf32, #tpu.memory_space<vmem>>, vector<1x1024xf32>
      %85 = vector.broadcast %84 : vector<1x1024xf32> to vector<2x1024xf32>
      %86 = arith.addf %83, %85 : vector<2x1024xf32>
      %c0_49 = arith.constant 0 : index
      %c0_50 = arith.constant 0 : index
      %87 = vector.load %arg14[%c0_49, %c0_50] : memref<1x1024xf32, #tpu.memory_space<vmem>>, vector<1x1024xf32>
      %c0_51 = arith.constant 0 : index
      %c0_52 = arith.constant 0 : index
      %88 = vector.load %arg15[%c0_51, %c0_52] : memref<1x1024xf32, #tpu.memory_space<vmem>>, vector<1x1024xf32>
      %cst_53 = arith.constant dense<0.000000e+00> : vector<1024xf32>
      %89 = vector.multi_reduction <add>, %86, %cst_53 [0] : vector<2x1024xf32> to vector<1024xf32>
      %90 = vector.shape_cast %89 : vector<1024xf32> to vector<1x1024xf32>
      %cst_54 = arith.constant 2.000000e+00 : f32
      %91 = vector.broadcast %cst_54 : f32 to vector<1x1024xf32>
      %92 = arith.divf %90, %91 : vector<1x1024xf32>
      %93 = arith.mulf %86, %86 : vector<2x1024xf32>
      %cst_55 = arith.constant dense<0.000000e+00> : vector<1024xf32>
      %94 = vector.multi_reduction <add>, %93, %cst_55 [0] : vector<2x1024xf32> to vector<1024xf32>
      %95 = vector.shape_cast %94 : vector<1024xf32> to vector<1x1024xf32>
      %cst_56 = arith.constant 2.000000e+00 : f32
      %96 = vector.broadcast %cst_56 : f32 to vector<1x1024xf32>
      %97 = arith.divf %95, %96 : vector<1x1024xf32>
      %98 = arith.mulf %92, %92 : vector<1x1024xf32>
      %99 = arith.subf %97, %98 : vector<1x1024xf32>
      %cst_57 = arith.constant 8.000000e-01 : f32
      %100 = vector.broadcast %cst_57 : f32 to vector<1x1024xf32>
      %101 = arith.addf %99, %100 : vector<1x1024xf32>
      %102 = math.rsqrt %101 : vector<1x1024xf32>
      %103 = arith.mulf %87, %102 : vector<1x1024xf32>
      %104 = vector.broadcast %103 : vector<1x1024xf32> to vector<2x1024xf32>
      %105 = arith.mulf %86, %104 : vector<2x1024xf32>
      %106 = arith.mulf %92, %103 : vector<1x1024xf32>
      %107 = arith.subf %88, %106 : vector<1x1024xf32>
      %108 = vector.broadcast %107 : vector<1x1024xf32> to vector<2x1024xf32>
      %109 = arith.addf %105, %108 : vector<2x1024xf32>
      %cst_58 = arith.constant 0.000000e+00 : f32
      %110 = vector.broadcast %cst_58 : f32 to vector<2x1024xf32>
      %111 = arith.cmpf oge, %109, %110 : vector<2x1024xf32>
      %cst_59 = arith.constant 2.000000e-01 : f32
      %112 = vector.broadcast %cst_59 : f32 to vector<2x1024xf32>
      %113 = arith.mulf %112, %109 : vector<2x1024xf32>
      %114 = arith.select %111, %109, %113 : vector<2x1024xi1>, vector<2x1024xf32>
      %115 = arith.truncf %114 : vector<2x1024xf32> to vector<2x1024xbf16>
      %c0_60 = arith.constant 0 : index
      %c0_61 = arith.constant 0 : index
      %116 = vector.load %arg20[%c0_60, %c0_61] : memref<2x1024xbf16, #tpu.memory_space<vmem>>, vector<2x1024xbf16>
      tpu.vector_store %arg20[%c0_60, %c0_61], %115 {strides = array<i32>} : memref<2x1024xbf16, #tpu.memory_space<vmem>>, vector<2x1024xbf16>,
    } else {
    }
    %c0 = arith.constant 0 : index
    %c0_1 = arith.constant 0 : index
    %3 = vector.load %arg20[%c0, %c0_1] : memref<2x1024xbf16, #tpu.memory_space<vmem>>, vector<2x1024xbf16>
    %c0_i32_2 = arith.constant 0 : i32
    %c8_i32 = arith.constant 8 : i32
    %4 = arith.addi %c0_i32_2, %c8_i32 : i32
    %c1_i32 = arith.constant 1 : i32
    scf.for %arg21 = %c0_i32_2 to %4 step %c1_i32  : i32 {
      %c1024_i32 = arith.constant 1024 : i32
      %5 = arith.muli %arg21, %c1024_i32 : i32
      %6 = tpu.assume_multiple %5, 1024 : i32
      %c0_4 = arith.constant 0 : index
      %c0_5 = arith.constant 0 : index
      %7 = arith.index_cast %6 : i32 to index
      %8 = vector.load %arg16[%c0_4, %c0_5, %7] : memref<1x1024x8192xi8, #tpu.memory_space<vmem>>, vector<1x1024x1024xi8>
      %9 = vector.shape_cast %8 : vector<1x1024x1024xi8> to vector<1024x1024xi8>
      %10 = arith.sitofp %9 : vector<1024x1024xi8> to vector<1024x1024xf32>
      %11 = arith.truncf %10 : vector<1024x1024xf32> to vector<1024x1024xbf16>
      %cst = arith.constant dense<0.000000e+00> : vector<2x1024xf32>
      %12 = tpu.matmul %3, %11, %cst {dimension_numbers = #tpu.dot_dimension_numbers<[1], [0], [0], [1], [0, 0, 1, 1], [], []>} : vector<2x1024xbf16>, vector<1024x1024xbf16>, vector<2x1024xf32> -> vector<2x1024xf32>
      %c0_6 = arith.constant 0 : index
      %13 = arith.index_cast %6 : i32 to index
      %14 = vector.load %arg17[%c0_6, %13] : memref<1x8192xf32, #tpu.memory_space<vmem>>, vector<1x1024xf32>
      %15 = vector.broadcast %14 : vector<1x1024xf32> to vector<2x1024xf32>
      %16 = arith.mulf %12, %15 : vector<2x1024xf32>
      %c0_7 = arith.constant 0 : index
      %17 = arith.index_cast %6 : i32 to index
      %18 = vector.load %arg18[%c0_7, %17] : memref<1x8192xf32, #tpu.memory_space<vmem>>, vector<1x1024xf32>
      %19 = vector.broadcast %18 : vector<1x1024xf32> to vector<2x1024xf32>
      %20 = arith.addf %16, %19 : vector<2x1024xf32>
      %21 = math.tanh %20 : vector<2x1024xf32>
      %c0_8 = arith.constant 0 : index
      %22 = arith.index_cast %6 : i32 to index
      %23 = vector.load %arg19[%c0_8, %22] : memref<2x8192xf32, #tpu.memory_space<vmem>>, vector<2x1024xf32>
      tpu.vector_store %arg19[%c0_8, %22], %21 {strides = array<i32>} : memref<2x8192xf32, #tpu.memory_space<vmem>>, vector<2x1024xf32>,
    }
    %c8_i32_3 = arith.constant 8 : i32
    return
  }
  func.func @transform_0(%arg0: i32) -> (i32, i32) {
    %c0_i32 = arith.constant 0 : i32
    %c0_i32_0 = arith.constant 0 : i32
    %c0_i32_1 = arith.constant 0 : i32
    return %c0_i32, %c0_i32_0 : i32, i32
  }
  func.func @transform_1(%arg0: i32) -> (i32, i32) {
    %c0_i32 = arith.constant 0 : i32
    %c0_i32_0 = arith.constant 0 : i32
    %c0_i32_1 = arith.constant 0 : i32
    return %c0_i32, %c0_i32_0 : i32, i32
  }
  func.func @transform_2(%arg0: i32) -> (i32, i32) {
    %c0_i32 = arith.constant 0 : i32
    %c0_i32_0 = arith.constant 0 : i32
    %c0_i32_1 = arith.constant 0 : i32
    return %c0_i32, %c0_i32_0 : i32, i32
  }
  func.func @transform_3(%arg0: i32) -> (i32, i32) {
    %c0_i32 = arith.constant 0 : i32
    %c0_i32_0 = arith.constant 0 : i32
    %c0_i32_1 = arith.constant 0 : i32
    return %c0_i32, %c0_i32_0 : i32, i32
  }
  func.func @transform_4(%arg0: i32) -> (i32, i32) {
    %c0_i32 = arith.constant 0 : i32
    %c0_i32_0 = arith.constant 0 : i32
    %c0_i32_1 = arith.constant 0 : i32
    return %c0_i32, %c0_i32_0 : i32, i32
  }
  func.func @transform_5(%arg0: i32) -> (i32, i32) {
    %c0_i32 = arith.constant 0 : i32
    %c0_i32_0 = arith.constant 0 : i32
    %c0_i32_1 = arith.constant 0 : i32
    return %c0_i32, %c0_i32_0 : i32, i32
  }
  func.func @transform_6(%arg0: i32) -> (i32, i32) {
    %c0_i32 = arith.constant 0 : i32
    %c0_i32_0 = arith.constant 0 : i32
    %c0_i32_1 = arith.constant 0 : i32
    return %c0_i32, %c0_i32_0 : i32, i32
  }
  func.func @transform_7(%arg0: i32) -> (i32, i32) {
    %c0_i32 = arith.constant 0 : i32
    %c0_i32_0 = arith.constant 0 : i32
    %c0_i32_1 = arith.constant 0 : i32
    return %c0_i32, %c0_i32_0 : i32, i32
  }
  func.func @transform_8(%arg0: i32) -> (i32, i32) {
    %c0_i32 = arith.constant 0 : i32
    %c0_i32_0 = arith.constant 0 : i32
    %c0_i32_1 = arith.constant 0 : i32
    return %c0_i32, %c0_i32_0 : i32, i32
  }
  func.func @transform_9(%arg0: i32) -> (i32, i32) {
    %c0_i32 = arith.constant 0 : i32
    %c0_i32_0 = arith.constant 0 : i32
    %c0_i32_1 = arith.constant 0 : i32
    return %c0_i32, %c0_i32_0 : i32, i32
  }
  func.func @transform_10(%arg0: i32) -> (i32, i32) {
    %c0_i32 = arith.constant 0 : i32
    %c0_i32_0 = arith.constant 0 : i32
    %c0_i32_1 = arith.constant 0 : i32
    return %c0_i32, %c0_i32_0 : i32, i32
  }
  func.func @transform_11(%arg0: i32) -> (i32, i32) {
    %c0_i32 = arith.constant 0 : i32
    %c0_i32_0 = arith.constant 0 : i32
    %c0_i32_1 = arith.constant 0 : i32
    return %c0_i32, %c0_i32_0 : i32, i32
  }
  func.func @transform_12(%arg0: i32) -> (i32, i32) {
    %c0_i32 = arith.constant 0 : i32
    %c0_i32_0 = arith.constant 0 : i32
    %c0_i32_1 = arith.constant 0 : i32
    return %c0_i32, %c0_i32_0 : i32, i32
  }
  func.func @transform_13(%arg0: i32) -> (i32, i32) {
    %c0_i32 = arith.constant 0 : i32
    %c0_i32_0 = arith.constant 0 : i32
    %c0_i32_1 = arith.constant 0 : i32
    return %c0_i32, %c0_i32_0 : i32, i32
  }
  func.func @transform_14(%arg0: i32) -> (i32, i32) {
    %c0_i32 = arith.constant 0 : i32
    %c0_i32_0 = arith.constant 0 : i32
    %c0_i32_1 = arith.constant 0 : i32
    return %c0_i32, %c0_i32_0 : i32, i32
  }
  func.func @transform_15(%arg0: i32) -> (i32, i32, i32) {
    %c0_i32 = arith.constant 0 : i32
    %c0_i32_0 = arith.constant 0 : i32
    %c0_i32_1 = arith.constant 0 : i32
    return %arg0, %c0_i32, %c0_i32_0 : i32, i32, i32
  }
  func.func @transform_16(%arg0: i32) -> (i32, i32) {
    %c0_i32 = arith.constant 0 : i32
    %c0_i32_0 = arith.constant 0 : i32
    return %c0_i32, %arg0 : i32, i32
  }
  func.func @transform_17(%arg0: i32) -> (i32, i32) {
    %c0_i32 = arith.constant 0 : i32
    %c0_i32_0 = arith.constant 0 : i32
    return %c0_i32, %arg0 : i32, i32
  }
  func.func @transform_18(%arg0: i32) -> (i32, i32) {
    %c0_i32 = arith.constant 0 : i32
    %c0_i32_0 = arith.constant 0 : i32
    return %c0_i32, %arg0 : i32, i32
  }
}

</mosaic_0001>

<llo_original>
// kernel: generator_forward.1
$region0: #{generator_forward.1}
  #allocation0 [shape = 'u32[]', space=smem, size = 0x4, offset = 0x4, fixed_abs, tag = 'smem constant byte address 0x4 - core index']
  #allocation1 [shape = 'u32[144,128]{1,0:T(1,128)}', space=vmem, size = 0x12000, scoped, tag = 'internal scratch']
  #allocation2 [shape = 'bf16[2,1024]{1,0:T(2,128)(2,1)}', space=vmem, size = 0x1000, scoped, tag = 'scratch operand']
  %s0 = inlined_call_operand.hbm [shape: f32[2,100], index: 0, kind: input, shape index: {}]
  %s1 = inlined_call_operand.hbm [shape: f32[100,128], index: 1, kind: input, shape index: {}]
  %s2 = inlined_call_operand.hbm [shape: f32[1,128], index: 2, kind: input, shape index: {}]
  %s3 = inlined_call_operand.hbm [shape: f32[128,256], index: 3, kind: input, shape index: {}]
  %s4 = inlined_call_operand.hbm [shape: f32[1,256], index: 4, kind: input, shape index: {}]
  %s5 = inlined_call_operand.hbm [shape: f32[1,256], index: 5, kind: input, shape index: {}]
  %s6 = inlined_call_operand.hbm [shape: f32[1,256], index: 6, kind: input, shape index: {}]
  %s7 = inlined_call_operand.hbm [shape: f32[256,512], index: 7, kind: input, shape index: {}]
  %s8 = inlined_call_operand.hbm [shape: f32[1,512], index: 8, kind: input, shape index: {}]
  %s9 = inlined_call_operand.hbm [shape: f32[1,512], index: 9, kind: input, shape index: {}]
  %s10 = inlined_call_operand.hbm [shape: f32[1,512], index: 10, kind: input, shape index: {}]
  %s11 = inlined_call_operand.hbm [shape: f32[512,1024], index: 11, kind: input, shape index: {}]
  %s12 = inlined_call_operand.hbm [shape: f32[1,1024], index: 12, kind: input, shape index: {}]
  %s13 = inlined_call_operand.hbm [shape: f32[1,1024], index: 13, kind: input, shape index: {}]
  %s14 = inlined_call_operand.hbm [shape: f32[1,1024], index: 14, kind: input, shape index: {}]
  %s15 = inlined_call_operand.hbm [shape: s8[6,1024,8192], index: 15, kind: input, shape index: {}]
  %s16 = inlined_call_operand.hbm [shape: f32[1,49152], index: 16, kind: input, shape index: {}]
  %s17 = inlined_call_operand.hbm [shape: f32[1,49152], index: 17, kind: input, shape index: {}]
  %s18 = inlined_call_operand.vmem [shape: f32[2,49152], index: 18, kind: output, shape index: {}]
  %s19 = sld [smem:[#allocation0]]
  $region188: #{generator_forward.1} parent=0
    _
  %s21 = ssub.s32 1, %s19
  %s22 = scalar_select 0, %s21, %s19
  $region1: #{generator_forward.1} parent=0
    #allocation3 [shape = 'u8[1024]{0}', space=vmem, size = 0x400, scoped, tag = 'input window, operand 0, single buffered']
    #allocation4 [shape = 's32[2]{0}', space=sflag, size = 0x8, scoped, tag = 'scoped memory for generator_forward.1']
    #allocation5 [shape = 'u8[53248]{0}', space=vmem, size = 0xd000, scoped, tag = 'input window, operand 1, single buffered']
    #allocation6 [shape = 's32[1]{0}', space=sflag, size = 0x4, scoped, tag = 'scoped memory for generator_forward.1']
    #allocation7 [shape = 'u8[512]{0}', space=vmem, size = 0x400, scoped, tag = 'input window, operand 2, single buffered']
    #allocation8 [shape = 'u8[131072]{0}', space=vmem, size = 0x20000, scoped, tag = 'input window, operand 3, single buffered']
    #allocation9 [shape = 's32[1]{0}', space=sflag, size = 0x4, scoped, tag = 'scoped memory for generator_forward.1']
    #allocation10 [shape = 'u8[1024]{0}', space=vmem, size = 0x400, scoped, tag = 'input window, operand 4, single buffered']
    #allocation11 [shape = 'u8[1024]{0}', space=vmem, size = 0x400, scoped, tag = 'input window, operand 5, single buffered']
    #allocation12 [shape = 's32[1]{0}', space=sflag, size = 0x4, scoped, tag = 'scoped memory for generator_forward.1']
    #allocation13 [shape = 'u8[1024]{0}', space=vmem, size = 0x400, scoped, tag = 'input window, operand 6, single buffered']
    #allocation14 [shape = 'u8[524288]{0}', space=vmem, size = 0x80000, scoped, tag = 'input window, operand 7, single buffered']
    #allocation15 [shape = 's32[1]{0}', space=sflag, size = 0x4, scoped, tag = 'scoped memory for generator_forward.1']
    #allocation16 [shape = 'u8[2048]{0}', space=vmem, size = 0x800, scoped, tag = 'input window, operand 8, single buffered']
    #allocation17 [shape = 'u8[2048]{0}', space=vmem, size = 0x800, scoped, tag = 'input window, operand 9, single buffered']
    #allocation18 [shape = 's32[1]{0}', space=sflag, size = 0x4, scoped, tag = 'scoped memory for generator_forward.1']
    #allocation19 [shape = 'u8[2048]{0}', space=vmem, size = 0x800, scoped, tag = 'input window, operand 10, single buffered']
    #allocation20 [shape = 'u8[2097152]{0}', space=vmem, size = 0x200000, scoped, tag = 'input window, operand 11, single buffered']
    #allocation21 [shape = 's32[1]{0}', space=sflag, size = 0x4, scoped, tag = 'scoped memory for generator_forward.1']
    #allocation22 [shape = 'u8[4096]{0}', space=vmem, size = 0x1000, scoped, tag = 'input window, operand 12, single buffered']
    #allocation23 [shape = 'u8[4096]{0}', space=vmem, size = 0x1000, scoped, tag = 'input window, operand 13, single buffered']
    #allocation24 [shape = 's32[1]{0}', space=sflag, size = 0x4, scoped, tag = 'scoped memory for generator_forward.1']
    #allocation25 [shape = 'u8[4096]{0}', space=vmem, size = 0x1000, scoped, tag = 'input window, operand 14, single buffered']
    #allocation26 [shape = 'u8[16777216]{0}', space=vmem, size = 0x1000000, scoped, tag = 'input window, operand 15']
    #allocation27 [shape = 's32[2]{0}', space=sflag, size = 0x8, scoped, tag = 'scoped memory for generator_forward.1']
    #allocation28 [shape = 'u8[65536]{0}', space=vmem, size = 0x10000, scoped, tag = 'input window, operand 16']
    #allocation29 [shape = 'u8[65536]{0}', space=vmem, size = 0x10000, scoped, tag = 'input window, operand 17']
    #allocation30 [shape = 's32[2]{0}', space=sflag, size = 0x8, scoped, tag = 'scoped memory for generator_forward.1']
    %23 = vsyncpa [#allocation4], 0
    %24 = vsyncpa [#allocation6], 0
    %25 = vsyncpa [#allocation9], 0
    %26 = vsyncpa [#allocation12], 0
    %27 = vsyncpa [#allocation15], 0
    %28 = vsyncpa [#allocation18], 0
    %29 = vsyncpa [#allocation21], 0
    %30 = vsyncpa [#allocation24], 0
    %31 = vsyncpa [#allocation27], 0
    %s32 = scalar_lea.sflag [#allocation27], 1
    %33 = vsyncpa %s32, 0
    %34 = vsyncpa [#allocation30], 0
    %s35 = scalar_lea.sflag [#allocation30], 1
    %36 = vsyncpa %s35, 0
    loop: start=0, step=1, limit=8
    $region2: #{generator_forward.1} parent=1 // loop_pre_header
      _
    $region3: #{generator_forward.1} parent=1 // loop_header
      %s38 = sphi 0, %s42
      %p39 = scmp.ge.s32.totalorder %s38, 8
      %s46 = sphi 0, %s46
      %s48 = sphi 0, %s46
      %s49 = sphi 0, %s48
      %s63 = sphi 0, %s49
      %s67 = sphi 0, %s67
      %s69 = sphi 0, %s67
      %s70 = sphi 0, %s69
      %s84 = sphi 0, %s70
      %s88 = sphi 0, %s88
      %s90 = sphi 0, %s88
      %s91 = sphi 0, %s90
      %s105 = sphi 0, %s91
      %s109 = sphi 0, %s109
      %s111 = sphi 0, %s109
      %s112 = sphi 0, %s111
      %s126 = sphi 0, %s112
      %s130 = sphi 0, %s130
      %s132 = sphi 0, %s130
      %s133 = sphi 0, %s132
      %s147 = sphi 0, %s133
      %s151 = sphi 0, %s151
      %s153 = sphi 0, %s151
      %s154 = sphi 0, %s153
      %s168 = sphi 0, %s154
      %s172 = sphi 0, %s172
      %s174 = sphi 0, %s172
      %s175 = sphi 0, %s174
      %s189 = sphi 0, %s175
      %s193 = sphi 0, %s193
      %s195 = sphi 0, %s193
      %s196 = sphi 0, %s195
      %s210 = sphi 0, %s196
      %s214 = sphi 0, %s214
      %s216 = sphi 0, %s214
      %s217 = sphi 0, %s216
      %s231 = sphi 0, %s217
      %s235 = sphi 0, %s235
      %s237 = sphi 0, %s235
      %s238 = sphi 0, %s237
      %s252 = sphi 0, %s238
      %s256 = sphi 0, %s256
      %s258 = sphi 0, %s256
      %s259 = sphi 0, %s258
      %s273 = sphi 0, %s259
      %s277 = sphi 0, %s277
      %s279 = sphi 0, %s277
      %s280 = sphi 0, %s279
      %s294 = sphi 0, %s280
      %s298 = sphi 0, %s298
      %s300 = sphi 0, %s298
      %s301 = sphi 0, %s300
      %s315 = sphi 0, %s301
      %s319 = sphi 0, %s319
      %s321 = sphi 0, %s319
      %s322 = sphi 0, %s321
      %s336 = sphi 0, %s322
      %s340 = sphi 0, %s340
      %s342 = sphi 0, %s340
      %s343 = sphi 0, %s342
      %s357 = sphi 0, %s343
      %s363 = sphi 0, %s365
      %s366 = sphi 0, %s363
      %s367 = sphi 0, %s366
      %s383 = sphi 0, %s367
      %s389 = sphi 0, %s391
      %s392 = sphi 0, %s389
      %s393 = sphi 0, %s392
      %s409 = sphi 0, %s393
      %s415 = sphi 0, %s417
      %s418 = sphi 0, %s415
      %s419 = sphi 0, %s418
      %s435 = sphi 0, %s419
      %s441 = sphi 0, %s443
      %s444 = sphi 0, %s441
      %s445 = sphi 0, %s444
      %s461 = sphi 0, %s445
    $region4: #{generator_forward.1} parent=1 // loop_header_branch
      %41 = sbr.rel (%p39) target = $region8
    $region5: #{generator_forward.1} parent=1 // loop_body
      %s43 = ssub.s32 %s38, 1
      %s44 = ssub.s32 %s38, 2
      %s45 = sadd.s32 %s38, 1
      %s47 = sadd.s32 %s46, 1
      %p50 = scmp.eq.s32.totalorder %s38, 5
      %p51 = scmp.ne.s32.totalorder %s46, %s48
      %p52 = scmp.eq.s32.totalorder %s38, 0
      %p53 = por %p51, %p52
      %p54 = scmp.ne.s32.totalorder %s46, %s48
      %p55 = scmp.eq.s32.totalorder %s43, 5
      %p56 = por %p54, %p55
      %p57 = scmp.ne.s32.totalorder %s48, %s49
      %p58 = scmp.eq.s32.totalorder %s43, 0
      %p59 = por %p57, %p58
      %p60 = scmp.ne.s32.totalorder %s48, %s49
      %p61 = scmp.eq.s32.totalorder %s44, 5
      %p62 = por %p60, %p61
      %p64 = scmp.ne.s32.totalorder %s49, %s63
      %p65 = scmp.eq.s32.totalorder %s44, 0
      %p66 = por %p64, %p65
      %s68 = sadd.s32 %s67, 1
      %p71 = scmp.eq.s32.totalorder %s38, 5
      %p72 = scmp.ne.s32.totalorder %s67, %s69
      %p73 = scmp.eq.s32.totalorder %s38, 0
      %p74 = por %p72, %p73
      %p75 = scmp.ne.s32.totalorder %s67, %s69
      %p76 = scmp.eq.s32.totalorder %s43, 5
      %p77 = por %p75, %p76
      %p78 = scmp.ne.s32.totalorder %s69, %s70
      %p79 = scmp.eq.s32.totalorder %s43, 0
      %p80 = por %p78, %p79
      %p81 = scmp.ne.s32.totalorder %s69, %s70
      %p82 = scmp.eq.s32.totalorder %s44, 5
      %p83 = por %p81, %p82
      %p85 = scmp.ne.s32.totalorder %s70, %s84
      %p86 = scmp.eq.s32.totalorder %s44, 0
      %p87 = por %p85, %p86
      %s89 = sadd.s32 %s88, 1
      %p92 = scmp.eq.s32.totalorder %s38, 5
      %p93 = scmp.ne.s32.totalorder %s88, %s90
      %p94 = scmp.eq.s32.totalorder %s38, 0
      %p95 = por %p93, %p94
      %p96 = scmp.ne.s32.totalorder %s88, %s90
      %p97 = scmp.eq.s32.totalorder %s43, 5
      %p98 = por %p96, %p97
      %p99 = scmp.ne.s32.totalorder %s90, %s91
      %p100 = scmp.eq.s32.totalorder %s43, 0
      %p101 = por %p99, %p100
      %p102 = scmp.ne.s32.totalorder %s90, %s91
      %p103 = scmp.eq.s32.totalorder %s44, 5
      %p104 = por %p102, %p103
      %p106 = scmp.ne.s32.totalorder %s91, %s105
      %p107 = scmp.eq.s32.totalorder %s44, 0
      %p108 = por %p106, %p107
      %s110 = sadd.s32 %s109, 1
      %p113 = scmp.eq.s32.totalorder %s38, 5
      %p114 = scmp.ne.s32.totalorder %s109, %s111
      %p115 = scmp.eq.s32.totalorder %s38, 0
      %p116 = por %p114, %p115
      %p117 = scmp.ne.s32.totalorder %s109, %s111
      %p118 = scmp.eq.s32.totalorder %s43, 5
      %p119 = por %p117, %p118
      %p120 = scmp.ne.s32.totalorder %s111, %s112
      %p121 = scmp.eq.s32.totalorder %s43, 0
      %p122 = por %p120, %p121
      %p123 = scmp.ne.s32.totalorder %s111, %s112
      %p124 = scmp.eq.s32.totalorder %s44, 5
      %p125 = por %p123, %p124
      %p127 = scmp.ne.s32.totalorder %s112, %s126
      %p128 = scmp.eq.s32.totalorder %s44, 0
      %p129 = por %p127, %p128
      %s131 = sadd.s32 %s130, 1
      %p134 = scmp.eq.s32.totalorder %s38, 5
      %p135 = scmp.ne.s32.totalorder %s130, %s132
      %p136 = scmp.eq.s32.totalorder %s38, 0
      %p137 = por %p135, %p136
      %p138 = scmp.ne.s32.totalorder %s130, %s132
      %p139 = scmp.eq.s32.totalorder %s43, 5
      %p140 = por %p138, %p139
      %p141 = scmp.ne.s32.totalorder %s132, %s133
      %p142 = scmp.eq.s32.totalorder %s43, 0
      %p143 = por %p141, %p142
      %p144 = scmp.ne.s32.totalorder %s132, %s133
      %p145 = scmp.eq.s32.totalorder %s44, 5
      %p146 = por %p144, %p145
      %p148 = scmp.ne.s32.totalorder %s133, %s147
      %p149 = scmp.eq.s32.totalorder %s44, 0
      %p150 = por %p148, %p149
      %s152 = sadd.s32 %s151, 1
      %p155 = scmp.eq.s32.totalorder %s38, 5
      %p156 = scmp.ne.s32.totalorder %s151, %s153
      %p157 = scmp.eq.s32.totalorder %s38, 0
      %p158 = por %p156, %p157
      %p159 = scmp.ne.s32.totalorder %s151, %s153
      %p160 = scmp.eq.s32.totalorder %s43, 5
      %p161 = por %p159, %p160
      %p162 = scmp.ne.s32.totalorder %s153, %s154
      %p163 = scmp.eq.s32.totalorder %s43, 0
      %p164 = por %p162, %p163
      %p165 = scmp.ne.s32.totalorder %s153, %s154
      %p166 = scmp.eq.s32.totalorder %s44, 5
      %p167 = por %p165, %p166
      %p169 = scmp.ne.s32.totalorder %s154, %s168
      %p170 = scmp.eq.s32.totalorder %s44, 0
      %p171 = por %p169, %p170
      %s173 = sadd.s32 %s172, 1
      %p176 = scmp.eq.s32.totalorder %s38, 5
      %p177 = scmp.ne.s32.totalorder %s172, %s174
      %p178 = scmp.eq.s32.totalorder %s38, 0
      %p179 = por %p177, %p178
      %p180 = scmp.ne.s32.totalorder %s172, %s174
      %p181 = scmp.eq.s32.totalorder %s43, 5
      %p182 = por %p180, %p181
      %p183 = scmp.ne.s32.totalorder %s174, %s175
      %p184 = scmp.eq.s32.totalorder %s43, 0
      %p185 = por %p183, %p184
      %p186 = scmp.ne.s32.totalorder %s174, %s175
      %p187 = scmp.eq.s32.totalorder %s44, 5
      %p188 = por %p186, %p187
      %p190 = scmp.ne.s32.totalorder %s175, %s189
      %p191 = scmp.eq.s32.totalorder %s44, 0
      %p192 = por %p190, %p191
      %s194 = sadd.s32 %s193, 1
      %p197 = scmp.eq.s32.totalorder %s38, 5
      %p198 = scmp.ne.s32.totalorder %s193, %s195
      %p199 = scmp.eq.s32.totalorder %s38, 0
      %p200 = por %p198, %p199
      %p201 = scmp.ne.s32.totalorder %s193, %s195
      %p202 = scmp.eq.s32.totalorder %s43, 5
      %p203 = por %p201, %p202
      %p204 = scmp.ne.s32.totalorder %s195, %s196
      %p205 = scmp.eq.s32.totalorder %s43, 0
      %p206 = por %p204, %p205
      %p207 = scmp.ne.s32.totalorder %s195, %s196
      %p208 = scmp.eq.s32.totalorder %s44, 5
      %p209 = por %p207, %p208
      %p211 = scmp.ne.s32.totalorder %s196, %s210
      %p212 = scmp.eq.s32.totalorder %s44, 0
      %p213 = por %p211, %p212
      %s215 = sadd.s32 %s214, 1
      %p218 = scmp.eq.s32.totalorder %s38, 5
      %p219 = scmp.ne.s32.totalorder %s214, %s216
      %p220 = scmp.eq.s32.totalorder %s38, 0
      %p221 = por %p219, %p220
      %p222 = scmp.ne.s32.totalorder %s214, %s216
      %p223 = scmp.eq.s32.totalorder %s43, 5
      %p224 = por %p222, %p223
      %p225 = scmp.ne.s32.totalorder %s216, %s217
      %p226 = scmp.eq.s32.totalorder %s43, 0
      %p227 = por %p225, %p226
      %p228 = scmp.ne.s32.totalorder %s216, %s217
      %p229 = scmp.eq.s32.totalorder %s44, 5
      %p230 = por %p228, %p229
      %p232 = scmp.ne.s32.totalorder %s217, %s231
      %p233 = scmp.eq.s32.totalorder %s44, 0
      %p234 = por %p232, %p233
      %s236 = sadd.s32 %s235, 1
      %p239 = scmp.eq.s32.totalorder %s38, 5
      %p240 = scmp.ne.s32.totalorder %s235, %s237
      %p241 = scmp.eq.s32.totalorder %s38, 0
      %p242 = por %p240, %p241
      %p243 = scmp.ne.s32.totalorder %s235, %s237
      %p244 = scmp.eq.s32.totalorder %s43, 5
      %p245 = por %p243, %p244
      %p246 = scmp.ne.s32.totalorder %s237, %s238
      %p247 = scmp.eq.s32.totalorder %s43, 0
      %p248 = por %p246, %p247
      %p249 = scmp.ne.s32.totalorder %s237, %s238
      %p250 = scmp.eq.s32.totalorder %s44, 5
      %p251 = por %p249, %p250
      %p253 = scmp.ne.s32.totalorder %s238, %s252
      %p254 = scmp.eq.s32.totalorder %s44, 0
      %p255 = por %p253, %p254
      %s257 = sadd.s32 %s256, 1
      %p260 = scmp.eq.s32.totalorder %s38, 5
      %p261 = scmp.ne.s32.totalorder %s256, %s258
      %p262 = scmp.eq.s32.totalorder %s38, 0
      %p263 = por %p261, %p262
      %p264 = scmp.ne.s32.totalorder %s256, %s258
      %p265 = scmp.eq.s32.totalorder %s43, 5
      %p266 = por %p264, %p265
      %p267 = scmp.ne.s32.totalorder %s258, %s259
      %p268 = scmp.eq.s32.totalorder %s43, 0
      %p269 = por %p267, %p268
      %p270 = scmp.ne.s32.totalorder %s258, %s259
      %p271 = scmp.eq.s32.totalorder %s44, 5
      %p272 = por %p270, %p271
      %p274 = scmp.ne.s32.totalorder %s259, %s273
      %p275 = scmp.eq.s32.totalorder %s44, 0
      %p276 = por %p274, %p275
      %s278 = sadd.s32 %s277, 1
      %p281 = scmp.eq.s32.totalorder %s38, 5
      %p282 = scmp.ne.s32.totalorder %s277, %s279
      %p283 = scmp.eq.s32.totalorder %s38, 0
      %p284 = por %p282, %p283
      %p285 = scmp.ne.s32.totalorder %s277, %s279
      %p286 = scmp.eq.s32.totalorder %s43, 5
      %p287 = por %p285, %p286
      %p288 = scmp.ne.s32.totalorder %s279, %s280
      %p289 = scmp.eq.s32.totalorder %s43, 0
      %p290 = por %p288, %p289
      %p291 = scmp.ne.s32.totalorder %s279, %s280
      %p292 = scmp.eq.s32.totalorder %s44, 5
      %p293 = por %p291, %p292
      %p295 = scmp.ne.s32.totalorder %s280, %s294
      %p296 = scmp.eq.s32.totalorder %s44, 0
      %p297 = por %p295, %p296
      %s299 = sadd.s32 %s298, 1
      %p302 = scmp.eq.s32.totalorder %s38, 5
      %p303 = scmp.ne.s32.totalorder %s298, %s300
      %p304 = scmp.eq.s32.totalorder %s38, 0
      %p305 = por %p303, %p304
      %p306 = scmp.ne.s32.totalorder %s298, %s300
      %p307 = scmp.eq.s32.totalorder %s43, 5
      %p308 = por %p306, %p307
      %p309 = scmp.ne.s32.totalorder %s300, %s301
      %p310 = scmp.eq.s32.totalorder %s43, 0
      %p311 = por %p309, %p310
      %p312 = scmp.ne.s32.totalorder %s300, %s301
      %p313 = scmp.eq.s32.totalorder %s44, 5
      %p314 = por %p312, %p313
      %p316 = scmp.ne.s32.totalorder %s301, %s315
      %p317 = scmp.eq.s32.totalorder %s44, 0
      %p318 = por %p316, %p317
      %s320 = sadd.s32 %s319, 1
      %p323 = scmp.eq.s32.totalorder %s38, 5
      %p324 = scmp.ne.s32.totalorder %s319, %s321
      %p325 = scmp.eq.s32.totalorder %s38, 0
      %p326 = por %p324, %p325
      %p327 = scmp.ne.s32.totalorder %s319, %s321
      %p328 = scmp.eq.s32.totalorder %s43, 5
      %p329 = por %p327, %p328
      %p330 = scmp.ne.s32.totalorder %s321, %s322
      %p331 = scmp.eq.s32.totalorder %s43, 0
      %p332 = por %p330, %p331
      %p333 = scmp.ne.s32.totalorder %s321, %s322
      %p334 = scmp.eq.s32.totalorder %s44, 5
      %p335 = por %p333, %p334
      %p337 = scmp.ne.s32.totalorder %s322, %s336
      %p338 = scmp.eq.s32.totalorder %s44, 0
      %p339 = por %p337, %p338
      %s341 = sadd.s32 %s340, 1
      %p344 = scmp.eq.s32.totalorder %s38, 5
      %p345 = scmp.ne.s32.totalorder %s340, %s342
      %p346 = scmp.eq.s32.totalorder %s38, 0
      %p347 = por %p345, %p346
      %p348 = scmp.ne.s32.totalorder %s340, %s342
      %p349 = scmp.eq.s32.totalorder %s43, 5
      %p350 = por %p348, %p349
      %p351 = scmp.ne.s32.totalorder %s342, %s343
      %p352 = scmp.eq.s32.totalorder %s43, 0
      %p353 = por %p351, %p352
      %p354 = scmp.ne.s32.totalorder %s342, %s343
      %p355 = scmp.eq.s32.totalorder %s44, 5
      %p356 = por %p354, %p355
      %p358 = scmp.ne.s32.totalorder %s343, %s357
      %p359 = scmp.eq.s32.totalorder %s44, 0
      %p360 = por %p358, %p359
      %s361 = ssub.s32 %s38, %s45
      %p362 = scmp.eq.s32.totalorder %s361, 0
      %s364 = sadd.s32 %s363, 1
      %s365 = scalar_select %p362, %s363, %s364
      %p368 = pneg %p362
      %p369 = scmp.eq.s32.totalorder %s38, 5
      %p370 = por %p368, %p369
      %p371 = scmp.ne.s32.totalorder %s363, %s366
      %p372 = scmp.eq.s32.totalorder %s38, 0
      %p373 = por %p371, %p372
      %p374 = scmp.ne.s32.totalorder %s363, %s366
      %p375 = scmp.eq.s32.totalorder %s43, 5
      %p376 = por %p374, %p375
      %p377 = scmp.ne.s32.totalorder %s366, %s367
      %p378 = scmp.eq.s32.totalorder %s43, 0
      %p379 = por %p377, %p378
      %p380 = scmp.ne.s32.totalorder %s366, %s367
      %p381 = scmp.eq.s32.totalorder %s44, 5
      %p382 = por %p380, %p381
      %p384 = scmp.ne.s32.totalorder %s367, %s383
      %p385 = scmp.eq.s32.totalorder %s44, 0
      %p386 = por %p384, %p385
      %s387 = ssub.s32 %s38, %s45
      %p388 = scmp.eq.s32.totalorder %s387, 0
      %s390 = sadd.s32 %s389, 1
      %s391 = scalar_select %p388, %s389, %s390
      %p394 = pneg %p388
      %p395 = scmp.eq.s32.totalorder %s38, 5
      %p396 = por %p394, %p395
      %p397 = scmp.ne.s32.totalorder %s389, %s392
      %p398 = scmp.eq.s32.totalorder %s38, 0
      %p399 = por %p397, %p398
      %p400 = scmp.ne.s32.totalorder %s389, %s392
      %p401 = scmp.eq.s32.totalorder %s43, 5
      %p402 = por %p400, %p401
      %p403 = scmp.ne.s32.totalorder %s392, %s393
      %p404 = scmp.eq.s32.totalorder %s43, 0
      %p405 = por %p403, %p404
      %p406 = scmp.ne.s32.totalorder %s392, %s393
      %p407 = scmp.eq.s32.totalorder %s44, 5
      %p408 = por %p406, %p407
      %p410 = scmp.ne.s32.totalorder %s393, %s409
      %p411 = scmp.eq.s32.totalorder %s44, 0
      %p412 = por %p410, %p411
      %s413 = ssub.s32 %s38, %s45
      %p414 = scmp.eq.s32.totalorder %s413, 0
      %s416 = sadd.s32 %s415, 1
      %s417 = scalar_select %p414, %s415, %s416
      %p420 = pneg %p414
      %p421 = scmp.eq.s32.totalorder %s38, 5
      %p422 = por %p420, %p421
      %p423 = scmp.ne.s32.totalorder %s415, %s418
      %p424 = scmp.eq.s32.totalorder %s38, 0
      %p425 = por %p423, %p424
      %p426 = scmp.ne.s32.totalorder %s415, %s418
      %p427 = scmp.eq.s32.totalorder %s43, 5
      %p428 = por %p426, %p427
      %p429 = scmp.ne.s32.totalorder %s418, %s419
      %p430 = scmp.eq.s32.totalorder %s43, 0
      %p431 = por %p429, %p430
      %p432 = scmp.ne.s32.totalorder %s418, %s419
      %p433 = scmp.eq.s32.totalorder %s44, 5
      %p434 = por %p432, %p433
      %p436 = scmp.ne.s32.totalorder %s419, %s435
      %p437 = scmp.eq.s32.totalorder %s44, 0
      %p438 = por %p436, %p437
      %s439 = ssub.s32 %s38, %s45
      %p440 = scmp.eq.s32.totalorder %s439, 0
      %s442 = sadd.s32 %s441, 1
      %s443 = scalar_select %p440, %s441, %s442
      %p446 = pneg %p440
      %p447 = scmp.eq.s32.totalorder %s38, 5
      %p448 = por %p446, %p447
      %p449 = scmp.ne.s32.totalorder %s441, %s444
      %p450 = scmp.eq.s32.totalorder %s38, 0
      %p451 = por %p449, %p450
      %p452 = scmp.ne.s32.totalorder %s441, %s444
      %p453 = scmp.eq.s32.totalorder %s43, 5
      %p454 = por %p452, %p453
      %p455 = scmp.ne.s32.totalorder %s444, %s445
      %p456 = scmp.eq.s32.totalorder %s43, 0
      %p457 = por %p455, %p456
      %p458 = scmp.ne.s32.totalorder %s444, %s445
      %p459 = scmp.eq.s32.totalorder %s44, 5
      %p460 = por %p458, %p459
      %p462 = scmp.ne.s32.totalorder %s445, %s461
      %p463 = scmp.eq.s32.totalorder %s44, 0
      %p464 = por %p462, %p463
      %p465 = scmp.le.s32.totalorder 1, %s38
      %p466 = scmp.lt.s32.totalorder %s38, 7
      %p467 = pnand %p465, %p466
      %p468 = pneg %p467
      // Predicated region
      $region9: #{generator_forward.1} parent=5 // pred_check
        _
      $region10: #{generator_forward.1} parent=5 // pred_check_branch
        %470 = sbr.rel (%p467) target = $region12
      $region11: #{generator_forward.1} parent=5 // pred_region
        %s471 = ssub.s32 %s38, 1
        // Predicated region
        $region13: #{generator_forward.1} parent=11 // pred_check
          %p472 = pneg %p59
        $region14: #{generator_forward.1} parent=11 // pred_check_branch
          %474 = sbr.rel (%p472) target = $region16
        $region15: #{generator_forward.1} parent=11 // pred_region
          %s476 = ssub.s32 32, 32
          %477 = vsyncadd [#allocation4], %s476
          %s479 = sshll.u32 [#allocation3], 4
          %s480 = int_to_ptr.vmem [resolvable:$true] %s479
          %482 = dma.hbm_to_vmem [thread:$0]  %s0, 32, %s480, [#allocation4]
        $region16: #{generator_forward.1} parent=11 // pred_fallthru
          _
        // Predicated region
        $region17: #{generator_forward.1} parent=11 // pred_check
          %p483 = pneg %p80
        $region18: #{generator_forward.1} parent=11 // pred_check_branch
          %485 = sbr.rel (%p483) target = $region20
        $region19: #{generator_forward.1} parent=11 // pred_region
          %s487 = ssub.s32 1664, 1664
          %488 = vsyncadd [#allocation6], %s487
          %s489 = sshll.u32 [#allocation5], 4
          %s490 = int_to_ptr.vmem [resolvable:$true] %s489
          %495 = dma.hbm_to_vmem [thread:$0]  %s1, 1664, %s490, [#allocation6], 128, 128, 8
        $region20: #{generator_forward.1} parent=11 // pred_fallthru
          _
        // Predicated region
        $region21: #{generator_forward.1} parent=11 // pred_check
          %p496 = pneg %p101
        $region22: #{generator_forward.1} parent=11 // pred_check_branch
          %498 = sbr.rel (%p496) target = $region24
        $region23: #{generator_forward.1} parent=11 // pred_region
          %s500 = ssub.s32 16, 16
          %501 = vsyncadd [#allocation6], %s500
          %s503 = sshll.u32 [#allocation7], 4
          %s504 = int_to_ptr.vmem [resolvable:$true] %s503
          %506 = dma.hbm_to_vmem [thread:$0]  %s2, 16, %s504, [#allocation6]
        $region24: #{generator_forward.1} parent=11 // pred_fallthru
          _
        // Predicated region
        $region25: #{generator_forward.1} parent=11 // pred_check
          %p507 = pneg %p122
        $region26: #{generator_forward.1} parent=11 // pred_check_branch
          %509 = sbr.rel (%p507) target = $region28
        $region27: #{generator_forward.1} parent=11 // pred_region
          %s511 = ssub.s32 4096, 4096
          %512 = vsyncadd [#allocation9], %s511
          %s513 = sshll.u32 [#allocation8], 4
          %s514 = int_to_ptr.vmem [resolvable:$true] %s513
          %519 = dma.hbm_to_vmem [thread:$0]  %s3, 4096, %s514, [#allocation9], 256, 256, 16
        $region28: #{generator_forward.1} parent=11 // pred_fallthru
          _
        // Predicated region
        $region29: #{generator_forward.1} parent=11 // pred_check
          %p520 = pneg %p143
        $region30: #{generator_forward.1} parent=11 // pred_check_branch
          %522 = sbr.rel (%p520) target = $region32
        $region31: #{generator_forward.1} parent=11 // pred_region
          %s524 = ssub.s32 32, 32
          %525 = vsyncadd [#allocation9], %s524
          %s527 = sshll.u32 [#allocation10], 4
          %s528 = int_to_ptr.vmem [resolvable:$true] %s527
          %530 = dma.hbm_to_vmem [thread:$0]  %s4, 32, %s528, [#allocation9]
        $region32: #{generator_forward.1} parent=11 // pred_fallthru
          _
        // Predicated region
        $region33: #{generator_forward.1} parent=11 // pred_check
          %p531 = pneg %p164
        $region34: #{generator_forward.1} parent=11 // pred_check_branch
          %533 = sbr.rel (%p531) target = $region36
        $region35: #{generator_forward.1} parent=11 // pred_region
          %s535 = ssub.s32 32, 32
          %536 = vsyncadd [#allocation12], %s535
          %s538 = sshll.u32 [#allocation11], 4
          %s539 = int_to_ptr.vmem [resolvable:$true] %s538
          %541 = dma.hbm_to_vmem [thread:$0]  %s5, 32, %s539, [#allocation12]
        $region36: #{generator_forward.1} parent=11 // pred_fallthru
          _
        // Predicated region
        $region37: #{generator_forward.1} parent=11 // pred_check
          %p542 = pneg %p185
        $region38: #{generator_forward.1} parent=11 // pred_check_branch
          %544 = sbr.rel (%p542) target = $region40
        $region39: #{generator_forward.1} parent=11 // pred_region
          %s546 = ssub.s32 32, 32
          %547 = vsyncadd [#allocation12], %s546
          %s549 = sshll.u32 [#allocation13], 4
          %s550 = int_to_ptr.vmem [resolvable:$true] %s549
          %552 = dma.hbm_to_vmem [thread:$0]  %s6, 32, %s550, [#allocation12]
        $region40: #{generator_forward.1} parent=11 // pred_fallthru
          _
        // Predicated region
        $region41: #{generator_forward.1} parent=11 // pred_check
          %p553 = pneg %p206
        $region42: #{generator_forward.1} parent=11 // pred_check_branch
          %555 = sbr.rel (%p553) target = $region44
        $region43: #{generator_forward.1} parent=11 // pred_region
          %s557 = ssub.s32 16384, 16384
          %558 = vsyncadd [#allocation15], %s557
          %s559 = sshll.u32 [#allocation14], 4
          %s560 = int_to_ptr.vmem [resolvable:$true] %s559
          %565 = dma.hbm_to_vmem [thread:$0]  %s7, 16384, %s560, [#allocation15], 512, 512, 32
        $region44: #{generator_forward.1} parent=11 // pred_fallthru
          _
        // Predicated region
        $region45: #{generator_forward.1} parent=11 // pred_check
          %p566 = pneg %p227
        $region46: #{generator_forward.1} parent=11 // pred_check_branch
          %568 = sbr.rel (%p566) target = $region48
        $region47: #{generator_forward.1} parent=11 // pred_region
          %s570 = ssub.s32 64, 64
          %571 = vsyncadd [#allocation15], %s570
          %s573 = sshll.u32 [#allocation16], 4
          %s574 = int_to_ptr.vmem [resolvable:$true] %s573
          %576 = dma.hbm_to_vmem [thread:$0]  %s8, 64, %s574, [#allocation15]
        $region48: #{generator_forward.1} parent=11 // pred_fallthru
          _
        // Predicated region
        $region49: #{generator_forward.1} parent=11 // pred_check
          %p577 = pneg %p248
        $region50: #{generator_forward.1} parent=11 // pred_check_branch
          %579 = sbr.rel (%p577) target = $region52
        $region51: #{generator_forward.1} parent=11 // pred_region
          %s581 = ssub.s32 64, 64
          %582 = vsyncadd [#allocation18], %s581
          %s584 = sshll.u32 [#allocation17], 4
          %s585 = int_to_ptr.vmem [resolvable:$true] %s584
          %587 = dma.hbm_to_vmem [thread:$0]  %s9, 64, %s585, [#allocation18]
        $region52: #{generator_forward.1} parent=11 // pred_fallthru
          _
        // Predicated region
        $region53: #{generator_forward.1} parent=11 // pred_check
          %p588 = pneg %p269
        $region54: #{generator_forward.1} parent=11 // pred_check_branch
          %590 = sbr.rel (%p588) target = $region56
        $region55: #{generator_forward.1} parent=11 // pred_region
          %s592 = ssub.s32 64, 64
          %593 = vsyncadd [#allocation18], %s592
          %s595 = sshll.u32 [#allocation19], 4
          %s596 = int_to_ptr.vmem [resolvable:$true] %s595
          %598 = dma.hbm_to_vmem [thread:$0]  %s10, 64, %s596, [#allocation18]
        $region56: #{generator_forward.1} parent=11 // pred_fallthru
          _
        // Predicated region
        $region57: #{generator_forward.1} parent=11 // pred_check
          %p599 = pneg %p290
        $region58: #{generator_forward.1} parent=11 // pred_check_branch
          %601 = sbr.rel (%p599) target = $region60
        $region59: #{generator_forward.1} parent=11 // pred_region
          %s603 = ssub.s32 65536, 65536
          %604 = vsyncadd [#allocation21], %s603
          %s605 = sshll.u32 [#allocation20], 4
          %s606 = int_to_ptr.vmem [resolvable:$true] %s605
          %611 = dma.hbm_to_vmem [thread:$0]  %s11, 65536, %s606, [#allocation21], 1024, 1024, 64
        $region60: #{generator_forward.1} parent=11 // pred_fallthru
          _
        // Predicated region
        $region61: #{generator_forward.1} parent=11 // pred_check
          %p612 = pneg %p311
        $region62: #{generator_forward.1} parent=11 // pred_check_branch
          %614 = sbr.rel (%p612) target = $region64
        $region63: #{generator_forward.1} parent=11 // pred_region
          %s616 = ssub.s32 128, 128
          %617 = vsyncadd [#allocation21], %s616
          %s619 = sshll.u32 [#allocation22], 4
          %s620 = int_to_ptr.vmem [resolvable:$true] %s619
          %622 = dma.hbm_to_vmem [thread:$0]  %s12, 128, %s620, [#allocation21]
        $region64: #{generator_forward.1} parent=11 // pred_fallthru
          _
        // Predicated region
        $region65: #{generator_forward.1} parent=11 // pred_check
          %p623 = pneg %p332
        $region66: #{generator_forward.1} parent=11 // pred_check_branch
          %625 = sbr.rel (%p623) target = $region68
        $region67: #{generator_forward.1} parent=11 // pred_region
          %s627 = ssub.s32 128, 128
          %628 = vsyncadd [#allocation24], %s627
          %s630 = sshll.u32 [#allocation23], 4
          %s631 = int_to_ptr.vmem [resolvable:$true] %s630
          %633 = dma.hbm_to_vmem [thread:$0]  %s13, 128, %s631, [#allocation24]
        $region68: #{generator_forward.1} parent=11 // pred_fallthru
          _
        // Predicated region
        $region69: #{generator_forward.1} parent=11 // pred_check
          %p634 = pneg %p353
        $region70: #{generator_forward.1} parent=11 // pred_check_branch
          %636 = sbr.rel (%p634) target = $region72
        $region71: #{generator_forward.1} parent=11 // pred_region
          %s638 = ssub.s32 128, 128
          %639 = vsyncadd [#allocation24], %s638
          %s641 = sshll.u32 [#allocation25], 4
          %s642 = int_to_ptr.vmem [resolvable:$true] %s641
          %644 = dma.hbm_to_vmem [thread:$0]  %s14, 128, %s642, [#allocation24]
        $region72: #{generator_forward.1} parent=11 // pred_fallthru
          _
      $region12: #{generator_forward.1} parent=5 // pred_fallthru
        _
      %p645 = scmp.lt.s32.totalorder %s38, 6
      // Predicated region
      $region73: #{generator_forward.1} parent=5 // pred_check
        %p646 = pneg %p645
      $region74: #{generator_forward.1} parent=5 // pred_check_branch
        %648 = sbr.rel (%p646) target = $region76
      $region75: #{generator_forward.1} parent=5 // pred_region
        // Predicated region
        $region77: #{generator_forward.1} parent=75 // pred_check
          %p649 = pneg %p373
        $region78: #{generator_forward.1} parent=75 // pred_check_branch
          %651 = sbr.rel (%p649) target = $region80
        $region79: #{generator_forward.1} parent=75 // pred_region
          %s652 = sand.u32 %s38, 1
          %s653 = scalar_lea.sflag [#allocation27], %s652
          %s654 = sand.u32 %s363, 1
          %s655 = smul.addr %s654, 16384
          %s656 = scalar_lea.vmem [#allocation26], %s655
          %s658 = ssub.s32 262144, 262144
          %659 = vsyncadd %s653, %s658
          %s660 = smul.addr %s38, 2048
          %s661 = smul.addr %s660, 128
          %s662 = scalar_lea.hbm %s15, %s661
          %s663 = sshll.u32 %s656, 4
          %s664 = int_to_ptr.vmem [resolvable:$true] %s663
          %669 = dma.hbm_to_vmem [thread:$0]  %s662, 262144, %s664, %s653, 8192, 8192, 512
        $region80: #{generator_forward.1} parent=75 // pred_fallthru
          _
        // Predicated region
        $region81: #{generator_forward.1} parent=75 // pred_check
          %p670 = pneg %p399
        $region82: #{generator_forward.1} parent=75 // pred_check_branch
          %672 = sbr.rel (%p670) target = $region84
        $region83: #{generator_forward.1} parent=75 // pred_region
          %s673 = sand.u32 %s38, 1
          %s674 = scalar_lea.sflag [#allocation27], %s673
          %s675 = sand.u32 %s389, 1
          %s676 = smul.addr %s675, 64
          %s677 = scalar_lea.vmem [#allocation28], %s676
          %s678 = smul.u32 64, %s38
          %s680 = ssub.s32 1024, 1024
          %681 = vsyncadd %s674, %s680
          %s682 = smul.addr %s678, 16
          %s683 = scalar_lea.hbm %s16, %s682
          %s685 = sshll.u32 %s677, 4
          %s686 = int_to_ptr.vmem [resolvable:$true] %s685
          %688 = dma.hbm_to_vmem [thread:$0]  %s683, 1024, %s686, %s674
        $region84: #{generator_forward.1} parent=75 // pred_fallthru
          _
        // Predicated region
        $region85: #{generator_forward.1} parent=75 // pred_check
          %p689 = pneg %p425
        $region86: #{generator_forward.1} parent=75 // pred_check_branch
          %691 = sbr.rel (%p689) target = $region88
        $region87: #{generator_forward.1} parent=75 // pred_region
          %s692 = sand.u32 %s415, 1
          %s693 = scalar_lea.sflag [#allocation30], %s692
          %s694 = sand.u32 %s415, 1
          %s695 = smul.addr %s694, 64
          %s696 = scalar_lea.vmem [#allocation29], %s695
          %s697 = smul.u32 64, %s38
          %s699 = ssub.s32 1024, 1024
          %700 = vsyncadd %s693, %s699
          %s701 = smul.addr %s697, 16
          %s702 = scalar_lea.hbm %s17, %s701
          %s704 = sshll.u32 %s696, 4
          %s705 = int_to_ptr.vmem [resolvable:$true] %s704
          %707 = dma.hbm_to_vmem [thread:$0]  %s702, 1024, %s705, %s693
        $region88: #{generator_forward.1} parent=75 // pred_fallthru
          _
      $region76: #{generator_forward.1} parent=5 // pred_fallthru
        _
      %p708 = scmp.le.s32.totalorder 1, %s38
      %p709 = scmp.lt.s32.totalorder %s38, 7
      %p710 = pnand %p708, %p709
      %p711 = pneg %p710
      // Predicated region
      $region89: #{generator_forward.1} parent=5 // pred_check
        _
      $region90: #{generator_forward.1} parent=5 // pred_check_branch
        %713 = sbr.rel (%p710) target = $region92
      $region91: #{generator_forward.1} parent=5 // pred_region
        %s714 = ssub.s32 %s38, 1
        // Predicated region
        $region93: #{generator_forward.1} parent=91 // pred_check
          %p715 = pneg %p59
        $region94: #{generator_forward.1} parent=91 // pred_check_branch
          %717 = sbr.rel (%p715) target = $region96
        $region95: #{generator_forward.1} parent=91 // pred_region
          %718 = dma.done [#allocation4], 32
        $region96: #{generator_forward.1} parent=91 // pred_fallthru
          _
        // Predicated region
        $region97: #{generator_forward.1} parent=91 // pred_check
          %p719 = pneg %p80
        $region98: #{generator_forward.1} parent=91 // pred_check_branch
          %721 = sbr.rel (%p719) target = $region100
        $region99: #{generator_forward.1} parent=91 // pred_region
          %722 = dma.done [#allocation6], 1664
        $region100: #{generator_forward.1} parent=91 // pred_fallthru
          _
        // Predicated region
        $region101: #{generator_forward.1} parent=91 // pred_check
          %p723 = pneg %p101
        $region102: #{generator_forward.1} parent=91 // pred_check_branch
          %725 = sbr.rel (%p723) target = $region104
        $region103: #{generator_forward.1} parent=91 // pred_region
          %726 = dma.done [#allocation6], 16
        $region104: #{generator_forward.1} parent=91 // pred_fallthru
          _
        // Predicated region
        $region105: #{generator_forward.1} parent=91 // pred_check
          %p727 = pneg %p122
        $region106: #{generator_forward.1} parent=91 // pred_check_branch
          %729 = sbr.rel (%p727) target = $region108
        $region107: #{generator_forward.1} parent=91 // pred_region
          %730 = dma.done [#allocation9], 4096
        $region108: #{generator_forward.1} parent=91 // pred_fallthru
          _
        // Predicated region
        $region109: #{generator_forward.1} parent=91 // pred_check
          %p731 = pneg %p143
        $region110: #{generator_forward.1} parent=91 // pred_check_branch
          %733 = sbr.rel (%p731) target = $region112
        $region111: #{generator_forward.1} parent=91 // pred_region
          %734 = dma.done [#allocation9], 32
        $region112: #{generator_forward.1} parent=91 // pred_fallthru
          _
        // Predicated region
        $region113: #{generator_forward.1} parent=91 // pred_check
          %p735 = pneg %p164
        $region114: #{generator_forward.1} parent=91 // pred_check_branch
          %737 = sbr.rel (%p735) target = $region116
        $region115: #{generator_forward.1} parent=91 // pred_region
          %738 = dma.done [#allocation12], 32
        $region116: #{generator_forward.1} parent=91 // pred_fallthru
          _
        // Predicated region
        $region117: #{generator_forward.1} parent=91 // pred_check
          %p739 = pneg %p185
        $region118: #{generator_forward.1} parent=91 // pred_check_branch
          %741 = sbr.rel (%p739) target = $region120
        $region119: #{generator_forward.1} parent=91 // pred_region
          %742 = dma.done [#allocation12], 32
        $region120: #{generator_forward.1} parent=91 // pred_fallthru
          _
        // Predicated region
        $region121: #{generator_forward.1} parent=91 // pred_check
          %p743 = pneg %p206
        $region122: #{generator_forward.1} parent=91 // pred_check_branch
          %745 = sbr.rel (%p743) target = $region124
        $region123: #{generator_forward.1} parent=91 // pred_region
          %746 = dma.done [#allocation15], 16384
        $region124: #{generator_forward.1} parent=91 // pred_fallthru
          _
        // Predicated region
        $region125: #{generator_forward.1} parent=91 // pred_check
          %p747 = pneg %p227
        $region126: #{generator_forward.1} parent=91 // pred_check_branch
          %749 = sbr.rel (%p747) target = $region128
        $region127: #{generator_forward.1} parent=91 // pred_region
          %750 = dma.done [#allocation15], 64
        $region128: #{generator_forward.1} parent=91 // pred_fallthru
          _
        // Predicated region
        $region129: #{generator_forward.1} parent=91 // pred_check
          %p751 = pneg %p248
        $region130: #{generator_forward.1} parent=91 // pred_check_branch
          %753 = sbr.rel (%p751) target = $region132
        $region131: #{generator_forward.1} parent=91 // pred_region
          %754 = dma.done [#allocation18], 64
        $region132: #{generator_forward.1} parent=91 // pred_fallthru
          _
        // Predicated region
        $region133: #{generator_forward.1} parent=91 // pred_check
          %p755 = pneg %p269
        $region134: #{generator_forward.1} parent=91 // pred_check_branch
          %757 = sbr.rel (%p755) target = $region136
        $region135: #{generator_forward.1} parent=91 // pred_region
          %758 = dma.done [#allocation18], 64
        $region136: #{generator_forward.1} parent=91 // pred_fallthru
          _
        // Predicated region
        $region137: #{generator_forward.1} parent=91 // pred_check
          %p759 = pneg %p290
        $region138: #{generator_forward.1} parent=91 // pred_check_branch
          %761 = sbr.rel (%p759) target = $region140
        $region139: #{generator_forward.1} parent=91 // pred_region
          %762 = dma.done [#allocation21], 65536
        $region140: #{generator_forward.1} parent=91 // pred_fallthru
          _
        // Predicated region
        $region141: #{generator_forward.1} parent=91 // pred_check
          %p763 = pneg %p311
        $region142: #{generator_forward.1} parent=91 // pred_check_branch
          %765 = sbr.rel (%p763) target = $region144
        $region143: #{generator_forward.1} parent=91 // pred_region
          %766 = dma.done [#allocation21], 128
        $region144: #{generator_forward.1} parent=91 // pred_fallthru
          _
        // Predicated region
        $region145: #{generator_forward.1} parent=91 // pred_check
          %p767 = pneg %p332
        $region146: #{generator_forward.1} parent=91 // pred_check_branch
          %769 = sbr.rel (%p767) target = $region148
        $region147: #{generator_forward.1} parent=91 // pred_region
          %770 = dma.done [#allocation24], 128
        $region148: #{generator_forward.1} parent=91 // pred_fallthru
          _
        // Predicated region
        $region149: #{generator_forward.1} parent=91 // pred_check
          %p771 = pneg %p353
        $region150: #{generator_forward.1} parent=91 // pred_check_branch
          %773 = sbr.rel (%p771) target = $region152
        $region151: #{generator_forward.1} parent=91 // pred_region
          %774 = dma.done [#allocation24], 128
        $region152: #{generator_forward.1} parent=91 // pred_fallthru
          _
        %s775 = sand.u32 %s43, 1
        %s776 = scalar_lea.sflag [#allocation27], %s775
        %s777 = sand.u32 %s366, 1
        %s778 = smul.addr %s777, 16384
        %s779 = scalar_lea.vmem [#allocation26], %s778
        // Predicated region
        $region153: #{generator_forward.1} parent=91 // pred_check
          %p780 = pneg %p379
        $region154: #{generator_forward.1} parent=91 // pred_check_branch
          %782 = sbr.rel (%p780) target = $region156
        $region155: #{generator_forward.1} parent=91 // pred_region
          %783 = dma.done %s776, 262144
        $region156: #{generator_forward.1} parent=91 // pred_fallthru
          _
        %s784 = sand.u32 %s43, 1
        %s785 = scalar_lea.sflag [#allocation27], %s784
        %s786 = sand.u32 %s392, 1
        %s787 = smul.addr %s786, 64
        %s788 = scalar_lea.vmem [#allocation28], %s787
        // Predicated region
        $region157: #{generator_forward.1} parent=91 // pred_check
          %p789 = pneg %p405
        $region158: #{generator_forward.1} parent=91 // pred_check_branch
          %791 = sbr.rel (%p789) target = $region160
        $region159: #{generator_forward.1} parent=91 // pred_region
          %792 = dma.done %s785, 1024
        $region160: #{generator_forward.1} parent=91 // pred_fallthru
          _
        %s793 = sand.u32 %s418, 1
        %s794 = scalar_lea.sflag [#allocation30], %s793
        %s795 = sand.u32 %s418, 1
        %s796 = smul.addr %s795, 64
        %s797 = scalar_lea.vmem [#allocation29], %s796
        // Predicated region
        $region161: #{generator_forward.1} parent=91 // pred_check
          %p798 = pneg %p431
        $region162: #{generator_forward.1} parent=91 // pred_check_branch
          %800 = sbr.rel (%p798) target = $region164
        $region163: #{generator_forward.1} parent=91 // pred_region
          %801 = dma.done %s794, 1024
        $region164: #{generator_forward.1} parent=91 // pred_fallthru
          _
        %p802 = pneg %p59
        %p803 = pneg %p56
        %p804 = pneg %p80
        %p805 = pneg %p77
        %p806 = pneg %p101
        %p807 = pneg %p98
        %p808 = pneg %p122
        %p809 = pneg %p119
        %p810 = pneg %p143
        %p811 = pneg %p140
        %p812 = pneg %p164
        %p813 = pneg %p161
        %p814 = pneg %p185
        %p815 = pneg %p182
        %p816 = pneg %p206
        %p817 = pneg %p203
        %p818 = pneg %p227
        %p819 = pneg %p224
        %p820 = pneg %p248
        %p821 = pneg %p245
        %p822 = pneg %p269
        %p823 = pneg %p266
        %p824 = pneg %p290
        %p825 = pneg %p287
        %p826 = pneg %p311
        %p827 = pneg %p308
        %p828 = pneg %p332
        %p829 = pneg %p329
        %p830 = pneg %p353
        %p831 = pneg %p350
        %s832 = sand.u32 %s43, 1
        %s833 = scalar_lea.sflag [#allocation27], %s832
        %s834 = sand.u32 %s366, 1
        %s835 = smul.addr %s834, 16384
        %s836 = scalar_lea.vmem [#allocation26], %s835
        %p837 = pneg %p379
        %p838 = pneg %p376
        %s839 = sand.u32 %s43, 1
        %s840 = scalar_lea.sflag [#allocation27], %s839
        %s841 = sand.u32 %s392, 1
        %s842 = smul.addr %s841, 64
        %s843 = scalar_lea.vmem [#allocation28], %s842
        %p844 = pneg %p405
        %p845 = pneg %p402
        %s846 = sand.u32 %s418, 1
        %s847 = scalar_lea.sflag [#allocation30], %s846
        %s848 = sand.u32 %s418, 1
        %s849 = smul.addr %s848, 64
        %s850 = scalar_lea.vmem [#allocation29], %s849
        %p851 = pneg %p431
        %p852 = pneg %p428
        %p853 = pneg %p457
        %p854 = pneg %p454
        %s855 = smul.u32 64, %s43
        %p856 = scmp.lt.s32.totalorder %s855, 383
        %s857 = scalar_select %p856, %s855, 383
        %s858 = smul.addr %s857, 2
        %s859 = scalar_lea.vmem %s18, %s858
        %s860 = smul.u32 64, %s43
        %s861 = smul.u32 64, %s43
        %s862 = smul.u32 64, %s43
        %p863 = scmp.lt.s32.totalorder %s862, 383
        %s864 = scalar_select %p863, %s862, 383
        %s865 = smul.addr %s864, 2
        %s866 = scalar_lea.vmem %s18, %s865
        %s867 = smul.u32 64, %s43
        %p868 = scmp.eq.s32.totalorder %s43, 0
        // Predicated region
        $region165: #{generator_forward.1} parent=91 // pred_check
          %p869 = pneg %p868
        $region166: #{generator_forward.1} parent=91 // pred_check_branch
          %871 = sbr.rel (%p869) target = $region168
        $region167: #{generator_forward.1} parent=91 // pred_region
          %v872 = vld [vmem:[#allocation3] sm:$0x3]
          %v873 = vld [vmem:[#allocation5] sm:$0xff]
          %v874 = vld [vmem:[#allocation5 + $0x8] sm:$0xff]
          %v875 = vld [vmem:[#allocation5 + $0x10] sm:$0xff]
          %v876 = vld [vmem:[#allocation5 + $0x18] sm:$0xff]
          %v877 = vld [vmem:[#allocation5 + $0x20] sm:$0xff]
          %v878 = vld [vmem:[#allocation5 + $0x28] sm:$0xff]
          %v879 = vld [vmem:[#allocation5 + $0x30] sm:$0xff]
          %v880 = vld [vmem:[#allocation5 + $0x38] sm:$0xff]
          %v881 = vld [vmem:[#allocation5 + $0x40] sm:$0xff]
          %v882 = vld [vmem:[#allocation5 + $0x48] sm:$0xff]
          %v883 = vld [vmem:[#allocation5 + $0x50] sm:$0xff]
          %v884 = vld [vmem:[#allocation5 + $0x58] sm:$0xff]
          %v885 = vld [vmem:[#allocation5 + $0x60] sm:$0xf]
          %v886 = vld [vmem:[#allocation7] sm:$0x1]
          %v888 = vlaneseq
          %v889 = vshrl.u32 %v888, 7
          %v890 = vsub.s32 0, %v889
          %v891 = vrot.slane %v886, %v890
          %vm893 = vcmask 818176
          %v895 = vsel %vm893, %v872, 0
          %vm897 = vcmask 1043456
          %v899 = vsel %vm897, %v885, 0
          %901 = vmatprep.subr.mxu0 0.0
          %902 = vmatpush1.msra.mxu0 %v873
          %903 = vmatprep.subr.mxu0 0.0
          %904 = vmatpush1.msra.mxu0 %v874
          %905 = vmatprep.subr.mxu0 0.0
          %906 = vmatpush1.msra.mxu0 %v875
          %907 = vmatprep.subr.mxu0 0.0
          %908 = vmatpush1.msra.mxu0 %v876
          %909 = vmatprep.subr.mxu0 0.0
          %910 = vmatpush1.msra.mxu0 %v877
          %911 = vmatprep.subr.mxu0 0.0
          %912 = vmatpush1.msra.mxu0 %v878
          %913 = vmatprep.subr.mxu0 0.0
          %914 = vmatpush1.msra.mxu0 %v879
          %915 = vmatprep.subr.mxu0 0.0
          %916 = vmatpush1.msra.mxu0 %v880
          %917 = vmatprep.subr.mxu0 0.0
          %918 = vmatpush1.msra.mxu0 %v881
          %919 = vmatprep.subr.mxu0 0.0
          %920 = vmatpush1.msra.mxu0 %v882
          %921 = vmatprep.subr.mxu0 0.0
          %922 = vmatpush1.msra.mxu0 %v883
          %923 = vmatprep.subr.mxu0 0.0
          %924 = vmatpush1.msra.mxu0 %v884
          %925 = vmatprep.subr.mxu0 0.0
          %926 = vmatpush1.msra.mxu0 %v899
          %927 = vmatprep.subr.mxu0 0.0
          %928 = vmatpush1.msra.mxu0 0.0
          %929 = vmatprep.subr.mxu0 0.0
          %930 = vmatpush1.msra.mxu0 0.0
          %931 = vmatprep.subr.mxu0 0.0
          %932 = vmatpush1.msra.mxu0 0.0
          %933 = vmatprep.subr.mxu0 0.0
          %934 = vmatpush1.msra.mxu0 0.0
          %935 = vmatprep.subr.mxu0 0.0
          %936 = vmatpush1.msra.mxu0 0.0
          %937 = vmatprep.subr.mxu0 0.0
          %938 = vmatpush1.msra.mxu0 0.0
          %939 = vmatprep.subr.mxu0 0.0
          %940 = vmatpush1.msra.mxu0 0.0
          %941 = vmatprep.subr.mxu0 0.0
          %942 = vmatpush1.msra.mxu0 0.0
          %943 = vmatprep.subr.mxu0 0.0
          %944 = vmatpush1.msra.mxu0 0.0
          %945 = vmatprep.subr.mxu0 0.0
          %946 = vmatpush1.msra.mxu0 0.0
          %947 = vmatprep.subr.mxu0 0.0
          %948 = vmatpush1.msra.mxu0 0.0
          %949 = vmatprep.subr.mxu0 0.0
          %950 = vmatpush1.msra.mxu0 0.0
          %951 = vmatprep.subr.mxu0 0.0
          %952 = vmatpush1.msra.mxu0 0.0
          %953 = vmatprep.subr.mxu0 0.0
          %954 = vmatpush1.msra.mxu0 0.0
          %955 = vmatprep.subr.mxu0 0.0
          %956 = vmatpush1.msra.mxu0 0.0
          %957 = vmatprep.subr.mxu0 0.0
          %958 = vmatpush1.msra.mxu0 0.0
          %959 = vmatprep.subr.mxu0 0.0
          %960 = vmatpush1.msra.mxu0 0.0
          %961 = vmatprep.subr.mxu0 0.0
          %962 = vmatpush1.msra.mxu0 0.0
          %963 = vmatprep.subr.mxu0 0.0
          %964 = vmatpush1.msra.mxu0 0.0
          %965 = vmatprep.mubr.f32.mxu0 0.0
          %966 = vmatmul.mubr.f32.gmra.mrb[0].mxu0 %v895
          %v967 = vpop.f32.mrb[0].mxu0
          %v968 = vadd.f32 %v891, %v967
          %v969 = vpop.f32.mrb[0].mxu0
          %970 = vdwg.mxu0
          %vm971 = vcmp.ge.f32.partialorder %v968, 0.0
          %v972 = vmul.f32 %v968, 0.2
          %v973 = vsel %vm971, %v968, %v972
          %v974 = vld [vmem:[#allocation8] sm:$0xff]
          %v975 = vld [vmem:[#allocation8 + $0x8] sm:$0xff]
          %v976 = vld [vmem:[#allocation8 + $0x10] sm:$0xff]
          %v977 = vld [vmem:[#allocation8 + $0x18] sm:$0xff]
          %v978 = vld [vmem:[#allocation8 + $0x20] sm:$0xff]
          %v979 = vld [vmem:[#allocation8 + $0x28] sm:$0xff]
          %v980 = vld [vmem:[#allocation8 + $0x30] sm:$0xff]
          %v981 = vld [vmem:[#allocation8 + $0x38] sm:$0xff]
          %v982 = vld [vmem:[#allocation8 + $0x40] sm:$0xff]
          %v983 = vld [vmem:[#allocation8 + $0x48] sm:$0xff]
          %v984 = vld [vmem:[#allocation8 + $0x50] sm:$0xff]
          %v985 = vld [vmem:[#allocation8 + $0x58] sm:$0xff]
          %v986 = vld [vmem:[#allocation8 + $0x60] sm:$0xff]
          %v987 = vld [vmem:[#allocation8 + $0x68] sm:$0xff]
          %v988 = vld [vmem:[#allocation8 + $0x70] sm:$0xff]
          %v989 = vld [vmem:[#allocation8 + $0x78] sm:$0xff]
          %v990 = vld [vmem:[#allocation8 + $0x80] sm:$0xff]
          %v991 = vld [vmem:[#allocation8 + $0x88] sm:$0xff]
          %v992 = vld [vmem:[#allocation8 + $0x90] sm:$0xff]
          %v993 = vld [vmem:[#allocation8 + $0x98] sm:$0xff]
          %v994 = vld [vmem:[#allocation8 + $0xa0] sm:$0xff]
          %v995 = vld [vmem:[#allocation8 + $0xa8] sm:$0xff]
          %v996 = vld [vmem:[#allocation8 + $0xb0] sm:$0xff]
          %v997 = vld [vmem:[#allocation8 + $0xb8] sm:$0xff]
          %v998 = vld [vmem:[#allocation8 + $0xc0] sm:$0xff]
          %v999 = vld [vmem:[#allocation8 + $0xc8] sm:$0xff]
          %v1000 = vld [vmem:[#allocation8 + $0xd0] sm:$0xff]
          %v1001 = vld [vmem:[#allocation8 + $0xd8] sm:$0xff]
          %v1002 = vld [vmem:[#allocation8 + $0xe0] sm:$0xff]
          %v1003 = vld [vmem:[#allocation8 + $0xe8] sm:$0xff]
          %v1004 = vld [vmem:[#allocation8 + $0xf0] sm:$0xff]
          %v1005 = vld [vmem:[#allocation8 + $0xf8] sm:$0xff]
          %v1006 = vld [vmem:[#allocation10] sm:$0x3]
          %v1008 = vlaneseq
          %v1009 = vshrl.u32 %v1008, 7
          %v1010 = vsub.s32 0, %v1009
          %v1011 = vrot.slane %v1006, %v1010
          %v1012 = vlaneseq
          %v1013 = vshrl.u32 %v1012, 7
          %v1014 = vsub.s32 1, %v1013
          %v1015 = vrot.slane %v1006, %v1014
          %1018 = vmatprep.subr.mxu0 %v975
          %1019 = vmatpush1.msra.mxu0 %v974
          %1020 = vmatprep.subr.mxu0 %v977
          %1021 = vmatpush1.msra.mxu0 %v976
          %1022 = vmatprep.subr.mxu0 %v979
          %1023 = vmatpush1.msra.mxu0 %v978
          %1024 = vmatprep.subr.mxu0 %v981
          %1025 = vmatpush1.msra.mxu0 %v980
          %1026 = vmatprep.subr.mxu0 %v983
          %1027 = vmatpush1.msra.mxu0 %v982
          %1028 = vmatprep.subr.mxu0 %v985
          %1029 = vmatpush1.msra.mxu0 %v984
          %1030 = vmatprep.subr.mxu0 %v987
          %1031 = vmatpush1.msra.mxu0 %v986
          %1032 = vmatprep.subr.mxu0 %v989
          %1033 = vmatpush1.msra.mxu0 %v988
          %1034 = vmatprep.subr.mxu0 %v991
          %1035 = vmatpush1.msra.mxu0 %v990
          %1036 = vmatprep.subr.mxu0 %v993
          %1037 = vmatpush1.msra.mxu0 %v992
          %1038 = vmatprep.subr.mxu0 %v995
          %1039 = vmatpush1.msra.mxu0 %v994
          %1040 = vmatprep.subr.mxu0 %v997
          %1041 = vmatpush1.msra.mxu0 %v996
          %1042 = vmatprep.subr.mxu0 %v999
          %1043 = vmatpush1.msra.mxu0 %v998
          %1044 = vmatprep.subr.mxu0 %v1001
          %1045 = vmatpush1.msra.mxu0 %v1000
          %1046 = vmatprep.subr.mxu0 %v1003
          %1047 = vmatpush1.msra.mxu0 %v1002
          %1048 = vmatprep.subr.mxu0 %v1005
          %1049 = vmatpush1.msra.mxu0 %v1004
          %1050 = vmatprep.subr.mxu0 0.0
          %1051 = vmatpush1.msra.mxu0 0.0
          %1052 = vmatprep.subr.mxu0 0.0
          %1053 = vmatpush1.msra.mxu0 0.0
          %1054 = vmatprep.subr.mxu0 0.0
          %1055 = vmatpush1.msra.mxu0 0.0
          %1056 = vmatprep.subr.mxu0 0.0
          %1057 = vmatpush1.msra.mxu0 0.0
          %1058 = vmatprep.subr.mxu0 0.0
          %1059 = vmatpush1.msra.mxu0 0.0
          %1060 = vmatprep.subr.mxu0 0.0
          %1061 = vmatpush1.msra.mxu0 0.0
          %1062 = vmatprep.subr.mxu0 0.0
          %1063 = vmatpush1.msra.mxu0 0.0
          %1064 = vmatprep.subr.mxu0 0.0
          %1065 = vmatpush1.msra.mxu0 0.0
          %1066 = vmatprep.subr.mxu0 0.0
          %1067 = vmatpush1.msra.mxu0 0.0
          %1068 = vmatprep.subr.mxu0 0.0
          %1069 = vmatpush1.msra.mxu0 0.0
          %1070 = vmatprep.subr.mxu0 0.0
          %1071 = vmatpush1.msra.mxu0 0.0
          %1072 = vmatprep.subr.mxu0 0.0
          %1073 = vmatpush1.msra.mxu0 0.0
          %1074 = vmatprep.subr.mxu0 0.0
          %1075 = vmatpush1.msra.mxu0 0.0
          %1076 = vmatprep.subr.mxu0 0.0
          %1077 = vmatpush1.msra.mxu0 0.0
          %1078 = vmatprep.subr.mxu0 0.0
          %1079 = vmatpush1.msra.mxu0 0.0
          %1080 = vmatprep.subr.mxu0 0.0
          %1081 = vmatpush1.msra.mxu0 0.0
          %1082 = vmatprep.mubr.f32.mxu0 0.0
          %1083 = vmatmul.mubr.f32.gmra.mrb[0].mxu0 %v973
          %v1084 = vpop.f32.mrb[0].mxu0
          %v1085 = vadd.f32 %v1011, %v1084
          %v1086 = vpop.f32.mrb[0].mxu0
          %v1087 = vadd.f32 %v1015, %v1086
          %1088 = vdwg.mxu0
          %v1089 = vld [vmem:[#allocation11] sm:$0x3]
          %v1090 = vld [vmem:[#allocation13] sm:$0x3]
          %vm1091 = vcmask 1041408
          %v1092 = vsel %vm1091, %v1085, 0.0
          %v1093 = vrot.slane %v1092, 4
          %v1094 = vadd.f32 %v1092, %v1093
          %v1095 = vrot.slane %v1094, 2
          %v1096 = vadd.f32 %v1094, %v1095
          %v1097 = vrot.slane %v1096, 1
          %v1098 = vadd.f32 %v1096, %v1097
          %v1099 = vsel %vm1091, %v1087, 0.0
          %v1100 = vrot.slane %v1099, 4
          %v1101 = vadd.f32 %v1099, %v1100
          %v1102 = vrot.slane %v1101, 2
          %v1103 = vadd.f32 %v1101, %v1102
          %v1104 = vrot.slane %v1103, 1
          %v1105 = vadd.f32 %v1103, %v1104
          %v1106 = vrcp.pop 2.0
          %v1107 = vmul.f32 %v1098, %v1106
          %v1108 = vmul.f32 %v1105, %v1106
          %v1109 = vmul.f32 %v1085, %v1085
          %v1110 = vmul.f32 %v1087, %v1087
          %v1111 = vsel %vm1091, %v1109, 0.0
          %v1112 = vrot.slane %v1111, 4
          %v1113 = vadd.f32 %v1111, %v1112
          %v1114 = vrot.slane %v1113, 2
          %v1115 = vadd.f32 %v1113, %v1114
          %v1116 = vrot.slane %v1115, 1
          %v1117 = vadd.f32 %v1115, %v1116
          %v1118 = vsel %vm1091, %v1110, 0.0
          %v1119 = vrot.slane %v1118, 4
          %v1120 = vadd.f32 %v1118, %v1119
          %v1121 = vrot.slane %v1120, 2
          %v1122 = vadd.f32 %v1120, %v1121
          %v1123 = vrot.slane %v1122, 1
          %v1124 = vadd.f32 %v1122, %v1123
          %v1125 = vmul.f32 %v1117, %v1106
          %v1126 = vmul.f32 %v1124, %v1106
          %v1127 = vmul.f32 %v1107, %v1107
          %v1128 = vmul.f32 %v1108, %v1108
          %v1129 = vsub.f32 %v1125, %v1127
          %v1130 = vsub.f32 %v1126, %v1128
          %v1131 = vadd.f32 %v1129, 0.8
          %v1132 = vadd.f32 %v1130, 0.8
          %v1133 = vrsqrt.pop %v1131
          %v1134 = vrsqrt.pop %v1132
          %v1137 = vcombine.low %v1133, %v1134
          %v1139 = vunpack.c.l.s4 1966171168
          %v1140 = vunpack.c.0.s8 %v1139
          %v1141 = vlaneseq
          %v1142 = vshrl.u32 %v1141, 7
          %v1143 = vsub.s32 %v1140, %v1142
          %v1144 = vrot.slane %v1137, %v1143
          %v1146 = vunpack.c.l.s4 1966171168
          %v1147 = vunpack.c.0.s8 %v1146
          %v1148 = vlaneseq
          %v1149 = vshrl.u32 %v1148, 7
          %v1150 = vsub.s32 %v1147, %v1149
          %v1151 = vrot.slane %v1144, %v1150
          %v1153 = vmul.f32 %v1089, %v1151
          %v1155 = vlaneseq
          %v1156 = vshrl.u32 %v1155, 7
          %v1157 = vsub.s32 0, %v1156
          %v1158 = vrot.slane %v1153, %v1157
          %v1159 = vlaneseq
          %v1160 = vshrl.u32 %v1159, 7
          %v1161 = vsub.s32 1, %v1160
          %v1162 = vrot.slane %v1153, %v1161
          %v1165 = vmul.f32 %v1085, %v1158
          %v1166 = vmul.f32 %v1087, %v1162
          %v1167 = vmul.f32 %v1107, %v1158
          %v1168 = vmul.f32 %v1108, %v1162
          %v1171 = vcombine.low %v1167, %v1168
          %v1173 = vunpack.c.l.s4 1966171168
          %v1174 = vunpack.c.0.s8 %v1173
          %v1175 = vlaneseq
          %v1176 = vshrl.u32 %v1175, 7
          %v1177 = vsub.s32 %v1174, %v1176
          %v1178 = vrot.slane %v1171, %v1177
          %v1180 = vunpack.c.l.s4 1966171168
          %v1181 = vunpack.c.0.s8 %v1180
          %v1182 = vlaneseq
          %v1183 = vshrl.u32 %v1182, 7
          %v1184 = vsub.s32 %v1181, %v1183
          %v1185 = vrot.slane %v1178, %v1184
          %v1187 = vsub.f32 %v1090, %v1185
          %v1189 = vlaneseq
          %v1190 = vshrl.u32 %v1189, 7
          %v1191 = vsub.s32 0, %v1190
          %v1192 = vrot.slane %v1187, %v1191
          %v1193 = vlaneseq
          %v1194 = vshrl.u32 %v1193, 7
          %v1195 = vsub.s32 1, %v1194
          %v1196 = vrot.slane %v1187, %v1195
          %v1199 = vadd.f32 %v1165, %v1192
          %v1200 = vadd.f32 %v1166, %v1196
          %vm1201 = vcmp.ge.f32.partialorder %v1199, 0.0
          %vm1202 = vcmp.ge.f32.partialorder %v1200, 0.0
          %v1203 = vmul.f32 %v1199, 0.2
          %v1204 = vmul.f32 %v1200, 0.2
          %v1205 = vsel %vm1201, %v1199, %v1203
          %v1206 = vsel %vm1202, %v1200, %v1204
          %v1207 = vld [vmem:[#allocation14] sm:$0xff]
          %v1208 = vld [vmem:[#allocation14 + $0x8] sm:$0xff]
          %v1209 = vld [vmem:[#allocation14 + $0x10] sm:$0xff]
          %v1210 = vld [vmem:[#allocation14 + $0x18] sm:$0xff]
          %v1211 = vld [vmem:[#allocation14 + $0x20] sm:$0xff]
          %v1212 = vld [vmem:[#allocation14 + $0x28] sm:$0xff]
          %v1213 = vld [vmem:[#allocation14 + $0x30] sm:$0xff]
          %v1214 = vld [vmem:[#allocation14 + $0x38] sm:$0xff]
          %v1215 = vld [vmem:[#allocation14 + $0x40] sm:$0xff]
          %v1216 = vld [vmem:[#allocation14 + $0x48] sm:$0xff]
          %v1217 = vld [vmem:[#allocation14 + $0x50] sm:$0xff]
          %v1218 = vld [vmem:[#allocation14 + $0x58] sm:$0xff]
          %v1219 = vld [vmem:[#allocation14 + $0x60] sm:$0xff]
          %v1220 = vld [vmem:[#allocation14 + $0x68] sm:$0xff]
          %v1221 = vld [vmem:[#allocation14 + $0x70] sm:$0xff]
          %v1222 = vld [vmem:[#allocation14 + $0x78] sm:$0xff]
          %v1223 = vld [vmem:[#allocation14 + $0x80] sm:$0xff]
          %v1224 = vld [vmem:[#allocation14 + $0x88] sm:$0xff]
          %v1225 = vld [vmem:[#allocation14 + $0x90] sm:$0xff]
          %v1226 = vld [vmem:[#allocation14 + $0x98] sm:$0xff]
          %v1227 = vld [vmem:[#allocation14 + $0xa0] sm:$0xff]
          %v1228 = vld [vmem:[#allocation14 + $0xa8] sm:$0xff]
          %v1229 = vld [vmem:[#allocation14 + $0xb0] sm:$0xff]
          %v1230 = vld [vmem:[#allocation14 + $0xb8] sm:$0xff]
          %v1231 = vld [vmem:[#allocation14 + $0xc0] sm:$0xff]
          %v1232 = vld [vmem:[#allocation14 + $0xc8] sm:$0xff]
          %v1233 = vld [vmem:[#allocation14 + $0xd0] sm:$0xff]
          %v1234 = vld [vmem:[#allocation14 + $0xd8] sm:$0xff]
          %v1235 = vld [vmem:[#allocation14 + $0xe0] sm:$0xff]
          %v1236 = vld [vmem:[#allocation14 + $0xe8] sm:$0xff]
          %v1237 = vld [vmem:[#allocation14 + $0xf0] sm:$0xff]
          %v1238 = vld [vmem:[#allocation14 + $0xf8] sm:$0xff]
          %v1239 = vld [vmem:[#allocation14 + $0x100] sm:$0xff]
          %v1240 = vld [vmem:[#allocation14 + $0x108] sm:$0xff]
          %v1241 = vld [vmem:[#allocation14 + $0x110] sm:$0xff]
          %v1242 = vld [vmem:[#allocation14 + $0x118] sm:$0xff]
          %v1243 = vld [vmem:[#allocation14 + $0x120] sm:$0xff]
          %v1244 = vld [vmem:[#allocation14 + $0x128] sm:$0xff]
          %v1245 = vld [vmem:[#allocation14 + $0x130] sm:$0xff]
          %v1246 = vld [vmem:[#allocation14 + $0x138] sm:$0xff]
          %v1247 = vld [vmem:[#allocation14 + $0x140] sm:$0xff]
          %v1248 = vld [vmem:[#allocation14 + $0x148] sm:$0xff]
          %v1249 = vld [vmem:[#allocation14 + $0x150] sm:$0xff]
          %v1250 = vld [vmem:[#allocation14 + $0x158] sm:$0xff]
          %v1251 = vld [vmem:[#allocation14 + $0x160] sm:$0xff]
          %v1252 = vld [vmem:[#allocation14 + $0x168] sm:$0xff]
          %v1253 = vld [vmem:[#allocation14 + $0x170] sm:$0xff]
          %v1254 = vld [vmem:[#allocation14 + $0x178] sm:$0xff]
          %v1255 = vld [vmem:[#allocation14 + $0x180] sm:$0xff]
          %v1256 = vld [vmem:[#allocation14 + $0x188] sm:$0xff]
          %v1257 = vld [vmem:[#allocation14 + $0x190] sm:$0xff]
          %v1258 = vld [vmem:[#allocation14 + $0x198] sm:$0xff]
          %v1259 = vld [vmem:[#allocation14 + $0x1a0] sm:$0xff]
          %v1260 = vld [vmem:[#allocation14 + $0x1a8] sm:$0xff]
          %v1261 = vld [vmem:[#allocation14 + $0x1b0] sm:$0xff]
          %v1262 = vld [vmem:[#allocation14 + $0x1b8] sm:$0xff]
          %v1263 = vld [vmem:[#allocation14 + $0x1c0] sm:$0xff]
          %v1264 = vld [vmem:[#allocation14 + $0x1c8] sm:$0xff]
          %v1265 = vld [vmem:[#allocation14 + $0x1d0] sm:$0xff]
          %v1266 = vld [vmem:[#allocation14 + $0x1d8] sm:$0xff]
          %v1267 = vld [vmem:[#allocation14 + $0x1e0] sm:$0xff]
          %v1268 = vld [vmem:[#allocation14 + $0x1e8] sm:$0xff]
          %v1269 = vld [vmem:[#allocation14 + $0x1f0] sm:$0xff]
          %v1270 = vld [vmem:[#allocation14 + $0x1f8] sm:$0xff]
          %v1271 = vld [vmem:[#allocation14 + $0x200] sm:$0xff]
          %v1272 = vld [vmem:[#allocation14 + $0x208] sm:$0xff]
          %v1273 = vld [vmem:[#allocation14 + $0x210] sm:$0xff]
          %v1274 = vld [vmem:[#allocation14 + $0x218] sm:$0xff]
          %v1275 = vld [vmem:[#allocation14 + $0x220] sm:$0xff]
          %v1276 = vld [vmem:[#allocation14 + $0x228] sm:$0xff]
          %v1277 = vld [vmem:[#allocation14 + $0x230] sm:$0xff]
          %v1278 = vld [vmem:[#allocation14 + $0x238] sm:$0xff]
          %v1279 = vld [vmem:[#allocation14 + $0x240] sm:$0xff]
          %v1280 = vld [vmem:[#allocation14 + $0x248] sm:$0xff]
          %v1281 = vld [vmem:[#allocation14 + $0x250] sm:$0xff]
          %v1282 = vld [vmem:[#allocation14 + $0x258] sm:$0xff]
          %v1283 = vld [vmem:[#allocation14 + $0x260] sm:$0xff]
          %v1284 = vld [vmem:[#allocation14 + $0x268] sm:$0xff]
          %v1285 = vld [vmem:[#allocation14 + $0x270] sm:$0xff]
          %v1286 = vld [vmem:[#allocation14 + $0x278] sm:$0xff]
          %v1287 = vld [vmem:[#allocation14 + $0x280] sm:$0xff]
          %v1288 = vld [vmem:[#allocation14 + $0x288] sm:$0xff]
          %v1289 = vld [vmem:[#allocation14 + $0x290] sm:$0xff]
          %v1290 = vld [vmem:[#allocation14 + $0x298] sm:$0xff]
          %v1291 = vld [vmem:[#allocation14 + $0x2a0] sm:$0xff]
          %v1292 = vld [vmem:[#allocation14 + $0x2a8] sm:$0xff]
          %v1293 = vld [vmem:[#allocation14 + $0x2b0] sm:$0xff]
          %v1294 = vld [vmem:[#allocation14 + $0x2b8] sm:$0xff]
          %v1295 = vld [vmem:[#allocation14 + $0x2c0] sm:$0xff]
          %v1296 = vld [vmem:[#allocation14 + $0x2c8] sm:$0xff]
          %v1297 = vld [vmem:[#allocation14 + $0x2d0] sm:$0xff]
          %v1298 = vld [vmem:[#allocation14 + $0x2d8] sm:$0xff]
          %v1299 = vld [vmem:[#allocation14 + $0x2e0] sm:$0xff]
          %v1300 = vld [vmem:[#allocation14 + $0x2e8] sm:$0xff]
          %v1301 = vld [vmem:[#allocation14 + $0x2f0] sm:$0xff]
          %v1302 = vld [vmem:[#allocation14 + $0x2f8] sm:$0xff]
          %v1303 = vld [vmem:[#allocation14 + $0x300] sm:$0xff]
          %v1304 = vld [vmem:[#allocation14 + $0x308] sm:$0xff]
          %v1305 = vld [vmem:[#allocation14 + $0x310] sm:$0xff]
          %v1306 = vld [vmem:[#allocation14 + $0x318] sm:$0xff]
          %v1307 = vld [vmem:[#allocation14 + $0x320] sm:$0xff]
          %v1308 = vld [vmem:[#allocation14 + $0x328] sm:$0xff]
          %v1309 = vld [vmem:[#allocation14 + $0x330] sm:$0xff]
          %v1310 = vld [vmem:[#allocation14 + $0x338] sm:$0xff]
          %v1311 = vld [vmem:[#allocation14 + $0x340] sm:$0xff]
          %v1312 = vld [vmem:[#allocation14 + $0x348] sm:$0xff]
          %v1313 = vld [vmem:[#allocation14 + $0x350] sm:$0xff]
          %v1314 = vld [vmem:[#allocation14 + $0x358] sm:$0xff]
          %v1315 = vld [vmem:[#allocation14 + $0x360] sm:$0xff]
          %v1316 = vld [vmem:[#allocation14 + $0x368] sm:$0xff]
          %v1317 = vld [vmem:[#allocation14 + $0x370] sm:$0xff]
          %v1318 = vld [vmem:[#allocation14 + $0x378] sm:$0xff]
          %v1319 = vld [vmem:[#allocation14 + $0x380] sm:$0xff]
          %v1320 = vld [vmem:[#allocation14 + $0x388] sm:$0xff]
          %v1321 = vld [vmem:[#allocation14 + $0x390] sm:$0xff]
          %v1322 = vld [vmem:[#allocation14 + $0x398] sm:$0xff]
          %v1323 = vld [vmem:[#allocation14 + $0x3a0] sm:$0xff]
          %v1324 = vld [vmem:[#allocation14 + $0x3a8] sm:$0xff]
          %v1325 = vld [vmem:[#allocation14 + $0x3b0] sm:$0xff]
          %v1326 = vld [vmem:[#allocation14 + $0x3b8] sm:$0xff]
          %v1327 = vld [vmem:[#allocation14 + $0x3c0] sm:$0xff]
          %v1328 = vld [vmem:[#allocation14 + $0x3c8] sm:$0xff]
          %v1329 = vld [vmem:[#allocation14 + $0x3d0] sm:$0xff]
          %v1330 = vld [vmem:[#allocation14 + $0x3d8] sm:$0xff]
          %v1331 = vld [vmem:[#allocation14 + $0x3e0] sm:$0xff]
          %v1332 = vld [vmem:[#allocation14 + $0x3e8] sm:$0xff]
          %v1333 = vld [vmem:[#allocation14 + $0x3f0] sm:$0xff]
          %v1334 = vld [vmem:[#allocation14 + $0x3f8] sm:$0xff]
          %v1335 = vld [vmem:[#allocation16] sm:$0xf]
          %v1337 = vlaneseq
          %v1338 = vshrl.u32 %v1337, 7
          %v1339 = vsub.s32 0, %v1338
          %v1340 = vrot.slane %v1335, %v1339
          %v1341 = vlaneseq
          %v1342 = vshrl.u32 %v1341, 7
          %v1343 = vsub.s32 1, %v1342
          %v1344 = vrot.slane %v1335, %v1343
          %v1345 = vlaneseq
          %v1346 = vshrl.u32 %v1345, 7
          %v1347 = vsub.s32 2, %v1346
          %v1348 = vrot.slane %v1335, %v1347
          %v1349 = vlaneseq
          %v1350 = vshrl.u32 %v1349, 7
          %v1351 = vsub.s32 3, %v1350
          %v1352 = vrot.slane %v1335, %v1351
          %1357 = vmatprep.subr.mxu0 %v1208
          %1358 = vmatpush1.msra.mxu0 %v1207
          %1359 = vmatprep.subr.mxu0 %v1212
          %1360 = vmatpush1.msra.mxu0 %v1211
          %1361 = vmatprep.subr.mxu0 %v1216
          %1362 = vmatpush1.msra.mxu0 %v1215
          %1363 = vmatprep.subr.mxu0 %v1220
          %1364 = vmatpush1.msra.mxu0 %v1219
          %1365 = vmatprep.subr.mxu0 %v1224
          %1366 = vmatpush1.msra.mxu0 %v1223
          %1367 = vmatprep.subr.mxu0 %v1228
          %1368 = vmatpush1.msra.mxu0 %v1227
          %1369 = vmatprep.subr.mxu0 %v1232
          %1370 = vmatpush1.msra.mxu0 %v1231
          %1371 = vmatprep.subr.mxu0 %v1236
          %1372 = vmatpush1.msra.mxu0 %v1235
          %1373 = vmatprep.subr.mxu0 %v1240
          %1374 = vmatpush1.msra.mxu0 %v1239
          %1375 = vmatprep.subr.mxu0 %v1244
          %1376 = vmatpush1.msra.mxu0 %v1243
          %1377 = vmatprep.subr.mxu0 %v1248
          %1378 = vmatpush1.msra.mxu0 %v1247
          %1379 = vmatprep.subr.mxu0 %v1252
          %1380 = vmatpush1.msra.mxu0 %v1251
          %1381 = vmatprep.subr.mxu0 %v1256
          %1382 = vmatpush1.msra.mxu0 %v1255
          %1383 = vmatprep.subr.mxu0 %v1260
          %1384 = vmatpush1.msra.mxu0 %v1259
          %1385 = vmatprep.subr.mxu0 %v1264
          %1386 = vmatpush1.msra.mxu0 %v1263
          %1387 = vmatprep.subr.mxu0 %v1268
          %1388 = vmatpush1.msra.mxu0 %v1267
          %1389 = vmatprep.subr.mxu0 %v1272
          %1390 = vmatpush1.msra.mxu0 %v1271
          %1391 = vmatprep.subr.mxu0 %v1276
          %1392 = vmatpush1.msra.mxu0 %v1275
          %1393 = vmatprep.subr.mxu0 %v1280
          %1394 = vmatpush1.msra.mxu0 %v1279
          %1395 = vmatprep.subr.mxu0 %v1284
          %1396 = vmatpush1.msra.mxu0 %v1283
          %1397 = vmatprep.subr.mxu0 %v1288
          %1398 = vmatpush1.msra.mxu0 %v1287
          %1399 = vmatprep.subr.mxu0 %v1292
          %1400 = vmatpush1.msra.mxu0 %v1291
          %1401 = vmatprep.subr.mxu0 %v1296
          %1402 = vmatpush1.msra.mxu0 %v1295
          %1403 = vmatprep.subr.mxu0 %v1300
          %1404 = vmatpush1.msra.mxu0 %v1299
          %1405 = vmatprep.subr.mxu0 %v1304
          %1406 = vmatpush1.msra.mxu0 %v1303
          %1407 = vmatprep.subr.mxu0 %v1308
          %1408 = vmatpush1.msra.mxu0 %v1307
          %1409 = vmatprep.subr.mxu0 %v1312
          %1410 = vmatpush1.msra.mxu0 %v1311
          %1411 = vmatprep.subr.mxu0 %v1316
          %1412 = vmatpush1.msra.mxu0 %v1315
          %1413 = vmatprep.subr.mxu0 %v1320
          %1414 = vmatpush1.msra.mxu0 %v1319
          %1415 = vmatprep.subr.mxu0 %v1324
          %1416 = vmatpush1.msra.mxu0 %v1323
          %1417 = vmatprep.subr.mxu0 %v1328
          %1418 = vmatpush1.msra.mxu0 %v1327
          %1419 = vmatprep.subr.mxu0 %v1332
          %1420 = vmatpush1.msra.mxu0 %v1331
          %1421 = vmatprep.mubr.f32.mxu0 %v1206
          %1422 = vmatmul.mubr.f32.gmra.mrb[0].mxu0 %v1205
          %v1423 = vpop.f32.mrb[0].mxu0
          %v1424 = vadd.f32 %v1340, %v1423
          %v1425 = vpop.f32.mrb[0].mxu0
          %v1426 = vadd.f32 %v1344, %v1425
          %1427 = vdwg.mxu0
          %1428 = vmatprep.subr.mxu0 %v1210
          %1429 = vmatpush1.msra.mxu0 %v1209
          %1430 = vmatprep.subr.mxu0 %v1214
          %1431 = vmatpush1.msra.mxu0 %v1213
          %1432 = vmatprep.subr.mxu0 %v1218
          %1433 = vmatpush1.msra.mxu0 %v1217
          %1434 = vmatprep.subr.mxu0 %v1222
          %1435 = vmatpush1.msra.mxu0 %v1221
          %1436 = vmatprep.subr.mxu0 %v1226
          %1437 = vmatpush1.msra.mxu0 %v1225
          %1438 = vmatprep.subr.mxu0 %v1230
          %1439 = vmatpush1.msra.mxu0 %v1229
          %1440 = vmatprep.subr.mxu0 %v1234
          %1441 = vmatpush1.msra.mxu0 %v1233
          %1442 = vmatprep.subr.mxu0 %v1238
          %1443 = vmatpush1.msra.mxu0 %v1237
          %1444 = vmatprep.subr.mxu0 %v1242
          %1445 = vmatpush1.msra.mxu0 %v1241
          %1446 = vmatprep.subr.mxu0 %v1246
          %1447 = vmatpush1.msra.mxu0 %v1245
          %1448 = vmatprep.subr.mxu0 %v1250
          %1449 = vmatpush1.msra.mxu0 %v1249
          %1450 = vmatprep.subr.mxu0 %v1254
          %1451 = vmatpush1.msra.mxu0 %v1253
          %1452 = vmatprep.subr.mxu0 %v1258
          %1453 = vmatpush1.msra.mxu0 %v1257
          %1454 = vmatprep.subr.mxu0 %v1262
          %1455 = vmatpush1.msra.mxu0 %v1261
          %1456 = vmatprep.subr.mxu0 %v1266
          %1457 = vmatpush1.msra.mxu0 %v1265
          %1458 = vmatprep.subr.mxu0 %v1270
          %1459 = vmatpush1.msra.mxu0 %v1269
          %1460 = vmatprep.subr.mxu0 %v1274
          %1461 = vmatpush1.msra.mxu0 %v1273
          %1462 = vmatprep.subr.mxu0 %v1278
          %1463 = vmatpush1.msra.mxu0 %v1277
          %1464 = vmatprep.subr.mxu0 %v1282
          %1465 = vmatpush1.msra.mxu0 %v1281
          %1466 = vmatprep.subr.mxu0 %v1286
          %1467 = vmatpush1.msra.mxu0 %v1285
          %1468 = vmatprep.subr.mxu0 %v1290
          %1469 = vmatpush1.msra.mxu0 %v1289
          %1470 = vmatprep.subr.mxu0 %v1294
          %1471 = vmatpush1.msra.mxu0 %v1293
          %1472 = vmatprep.subr.mxu0 %v1298
          %1473 = vmatpush1.msra.mxu0 %v1297
          %1474 = vmatprep.subr.mxu0 %v1302
          %1475 = vmatpush1.msra.mxu0 %v1301
          %1476 = vmatprep.subr.mxu0 %v1306
          %1477 = vmatpush1.msra.mxu0 %v1305
          %1478 = vmatprep.subr.mxu0 %v1310
          %1479 = vmatpush1.msra.mxu0 %v1309
          %1480 = vmatprep.subr.mxu0 %v1314
          %1481 = vmatpush1.msra.mxu0 %v1313
          %1482 = vmatprep.subr.mxu0 %v1318
          %1483 = vmatpush1.msra.mxu0 %v1317
          %1484 = vmatprep.subr.mxu0 %v1322
          %1485 = vmatpush1.msra.mxu0 %v1321
          %1486 = vmatprep.subr.mxu0 %v1326
          %1487 = vmatpush1.msra.mxu0 %v1325
          %1488 = vmatprep.subr.mxu0 %v1330
          %1489 = vmatpush1.msra.mxu0 %v1329
          %1490 = vmatprep.subr.mxu0 %v1334
          %1491 = vmatpush1.msra.mxu0 %v1333
          %1492 = vmatprep.mubr.f32.mxu0 %v1206
          %1493 = vmatmul.mubr.f32.gmra.mrb[0].mxu0 %v1205
          %v1494 = vpop.f32.mrb[0].mxu0
          %v1495 = vadd.f32 %v1348, %v1494
          %v1496 = vpop.f32.mrb[0].mxu0
          %v1497 = vadd.f32 %v1352, %v1496
          %1498 = vdwg.mxu0
          %v1499 = vld [vmem:[#allocation17] sm:$0xf]
          %v1500 = vld [vmem:[#allocation19] sm:$0xf]
          %v1501 = vsel %vm1091, %v1424, 0.0
          %v1502 = vrot.slane %v1501, 4
          %v1503 = vadd.f32 %v1501, %v1502
          %v1504 = vrot.slane %v1503, 2
          %v1505 = vadd.f32 %v1503, %v1504
          %v1506 = vrot.slane %v1505, 1
          %v1507 = vadd.f32 %v1505, %v1506
          %v1508 = vsel %vm1091, %v1426, 0.0
          %v1509 = vrot.slane %v1508, 4
          %v1510 = vadd.f32 %v1508, %v1509
          %v1511 = vrot.slane %v1510, 2
          %v1512 = vadd.f32 %v1510, %v1511
          %v1513 = vrot.slane %v1512, 1
          %v1514 = vadd.f32 %v1512, %v1513
          %v1515 = vsel %vm1091, %v1495, 0.0
          %v1516 = vrot.slane %v1515, 4
          %v1517 = vadd.f32 %v1515, %v1516
          %v1518 = vrot.slane %v1517, 2
          %v1519 = vadd.f32 %v1517, %v1518
          %v1520 = vrot.slane %v1519, 1
          %v1521 = vadd.f32 %v1519, %v1520
          %v1522 = vsel %vm1091, %v1497, 0.0
          %v1523 = vrot.slane %v1522, 4
          %v1524 = vadd.f32 %v1522, %v1523
          %v1525 = vrot.slane %v1524, 2
          %v1526 = vadd.f32 %v1524, %v1525
          %v1527 = vrot.slane %v1526, 1
          %v1528 = vadd.f32 %v1526, %v1527
          %v1529 = vmul.f32 %v1507, %v1106
          %v1530 = vmul.f32 %v1514, %v1106
          %v1531 = vmul.f32 %v1521, %v1106
          %v1532 = vmul.f32 %v1528, %v1106
          %v1533 = vmul.f32 %v1424, %v1424
          %v1534 = vmul.f32 %v1426, %v1426
          %v1535 = vmul.f32 %v1495, %v1495
          %v1536 = vmul.f32 %v1497, %v1497
          %v1537 = vsel %vm1091, %v1533, 0.0
          %v1538 = vrot.slane %v1537, 4
          %v1539 = vadd.f32 %v1537, %v1538
          %v1540 = vrot.slane %v1539, 2
          %v1541 = vadd.f32 %v1539, %v1540
          %v1542 = vrot.slane %v1541, 1
          %v1543 = vadd.f32 %v1541, %v1542
          %v1544 = vsel %vm1091, %v1534, 0.0
          %v1545 = vrot.slane %v1544, 4
          %v1546 = vadd.f32 %v1544, %v1545
          %v1547 = vrot.slane %v1546, 2
          %v1548 = vadd.f32 %v1546, %v1547
          %v1549 = vrot.slane %v1548, 1
          %v1550 = vadd.f32 %v1548, %v1549
          %v1551 = vsel %vm1091, %v1535, 0.0
          %v1552 = vrot.slane %v1551, 4
          %v1553 = vadd.f32 %v1551, %v1552
          %v1554 = vrot.slane %v1553, 2
          %v1555 = vadd.f32 %v1553, %v1554
          %v1556 = vrot.slane %v1555, 1
          %v1557 = vadd.f32 %v1555, %v1556
          %v1558 = vsel %vm1091, %v1536, 0.0
          %v1559 = vrot.slane %v1558, 4
          %v1560 = vadd.f32 %v1558, %v1559
          %v1561 = vrot.slane %v1560, 2
          %v1562 = vadd.f32 %v1560, %v1561
          %v1563 = vrot.slane %v1562, 1
          %v1564 = vadd.f32 %v1562, %v1563
          %v1565 = vmul.f32 %v1543, %v1106
          %v1566 = vmul.f32 %v1550, %v1106
          %v1567 = vmul.f32 %v1557, %v1106
          %v1568 = vmul.f32 %v1564, %v1106
          %v1569 = vmul.f32 %v1529, %v1529
          %v1570 = vmul.f32 %v1530, %v1530
          %v1571 = vmul.f32 %v1531, %v1531
          %v1572 = vmul.f32 %v1532, %v1532
          %v1573 = vsub.f32 %v1565, %v1569
          %v1574 = vsub.f32 %v1566, %v1570
          %v1575 = vsub.f32 %v1567, %v1571
          %v1576 = vsub.f32 %v1568, %v1572
          %v1577 = vadd.f32 %v1573, 0.8
          %v1578 = vadd.f32 %v1574, 0.8
          %v1579 = vadd.f32 %v1575, 0.8
          %v1580 = vadd.f32 %v1576, 0.8
          %v1581 = vrsqrt.pop %v1577
          %v1582 = vrsqrt.pop %v1578
          %v1583 = vrsqrt.pop %v1579
          %v1584 = vrsqrt.pop %v1580
          %v1589 = vcombine.low %v1581, %v1582
          %v1590 = vcombine.low %v1583, %v1584
          %v1592 = vunpack.c.l.s4 1966171168
          %v1593 = vunpack.c.0.s8 %v1592
          %v1594 = vlaneseq
          %v1595 = vshrl.u32 %v1594, 7
          %v1596 = vsub.s32 %v1593, %v1595
          %v1597 = vrot.slane %v1589, %v1596
          %v1599 = vunpack.c.l.s4 1966171168
          %v1600 = vunpack.c.0.s8 %v1599
          %v1601 = vlaneseq
          %v1602 = vshrl.u32 %v1601, 7
          %v1603 = vsub.s32 %v1600, %v1602
          %v1604 = vrot.slane %v1590, %v1603
          %v1605 = vcombine.low %v1597, %v1604
          %v1607 = vunpack.c.l.s4 1966171168
          %v1608 = vunpack.c.0.s8 %v1607
          %v1609 = vlaneseq
          %v1610 = vshrl.u32 %v1609, 7
          %v1611 = vsub.s32 %v1608, %v1610
          %v1612 = vrot.slane %v1605, %v1611
          %v1614 = vmul.f32 %v1499, %v1612
          %v1616 = vlaneseq
          %v1617 = vshrl.u32 %v1616, 7
          %v1618 = vsub.s32 0, %v1617
          %v1619 = vrot.slane %v1614, %v1618
          %v1620 = vlaneseq
          %v1621 = vshrl.u32 %v1620, 7
          %v1622 = vsub.s32 1, %v1621
          %v1623 = vrot.slane %v1614, %v1622
          %v1624 = vlaneseq
          %v1625 = vshrl.u32 %v1624, 7
          %v1626 = vsub.s32 2, %v1625
          %v1627 = vrot.slane %v1614, %v1626
          %v1628 = vlaneseq
          %v1629 = vshrl.u32 %v1628, 7
          %v1630 = vsub.s32 3, %v1629
          %v1631 = vrot.slane %v1614, %v1630
          %v1636 = vmul.f32 %v1424, %v1619
          %v1637 = vmul.f32 %v1426, %v1623
          %v1638 = vmul.f32 %v1495, %v1627
          %v1639 = vmul.f32 %v1497, %v1631
          %v1640 = vmul.f32 %v1529, %v1619
          %v1641 = vmul.f32 %v1530, %v1623
          %v1642 = vmul.f32 %v1531, %v1627
          %v1643 = vmul.f32 %v1532, %v1631
          %v1648 = vcombine.low %v1640, %v1641
          %v1649 = vcombine.low %v1642, %v1643
          %v1651 = vunpack.c.l.s4 1966171168
          %v1652 = vunpack.c.0.s8 %v1651
          %v1653 = vlaneseq
          %v1654 = vshrl.u32 %v1653, 7
          %v1655 = vsub.s32 %v1652, %v1654
          %v1656 = vrot.slane %v1648, %v1655
          %v1658 = vunpack.c.l.s4 1966171168
          %v1659 = vunpack.c.0.s8 %v1658
          %v1660 = vlaneseq
          %v1661 = vshrl.u32 %v1660, 7
          %v1662 = vsub.s32 %v1659, %v1661
          %v1663 = vrot.slane %v1649, %v1662
          %v1664 = vcombine.low %v1656, %v1663
          %v1666 = vunpack.c.l.s4 1966171168
          %v1667 = vunpack.c.0.s8 %v1666
          %v1668 = vlaneseq
          %v1669 = vshrl.u32 %v1668, 7
          %v1670 = vsub.s32 %v1667, %v1669
          %v1671 = vrot.slane %v1664, %v1670
          %v1673 = vsub.f32 %v1500, %v1671
          %v1675 = vlaneseq
          %v1676 = vshrl.u32 %v1675, 7
          %v1677 = vsub.s32 0, %v1676
          %v1678 = vrot.slane %v1673, %v1677
          %v1679 = vlaneseq
          %v1680 = vshrl.u32 %v1679, 7
          %v1681 = vsub.s32 1, %v1680
          %v1682 = vrot.slane %v1673, %v1681
          %v1683 = vlaneseq
          %v1684 = vshrl.u32 %v1683, 7
          %v1685 = vsub.s32 2, %v1684
          %v1686 = vrot.slane %v1673, %v1685
          %v1687 = vlaneseq
          %v1688 = vshrl.u32 %v1687, 7
          %v1689 = vsub.s32 3, %v1688
          %v1690 = vrot.slane %v1673, %v1689
          %v1695 = vadd.f32 %v1636, %v1678
          %v1696 = vadd.f32 %v1637, %v1682
          %v1697 = vadd.f32 %v1638, %v1686
          %v1698 = vadd.f32 %v1639, %v1690
          %vm1699 = vcmp.ge.f32.partialorder %v1695, 0.0
          %vm1700 = vcmp.ge.f32.partialorder %v1696, 0.0
          %vm1701 = vcmp.ge.f32.partialorder %v1697, 0.0
          %vm1702 = vcmp.ge.f32.partialorder %v1698, 0.0
          %v1703 = vmul.f32 %v1695, 0.2
          %v1704 = vmul.f32 %v1696, 0.2
          %v1705 = vmul.f32 %v1697, 0.2
          %v1706 = vmul.f32 %v1698, 0.2
          %v1707 = vsel %vm1699, %v1695, %v1703
          %v1708 = vsel %vm1700, %v1696, %v1704
          %v1709 = vsel %vm1701, %v1697, %v1705
          %v1710 = vsel %vm1702, %v1698, %v1706
          %v1711 = vld [vmem:[#allocation20] sm:$0xff]
          %v1712 = vld [vmem:[#allocation20 + $0x8] sm:$0xff]
          %v1713 = vld [vmem:[#allocation20 + $0x10] sm:$0xff]
          %v1714 = vld [vmem:[#allocation20 + $0x18] sm:$0xff]
          %v1715 = vld [vmem:[#allocation20 + $0x20] sm:$0xff]
          %v1716 = vld [vmem:[#allocation20 + $0x28] sm:$0xff]
          %v1717 = vld [vmem:[#allocation20 + $0x30] sm:$0xff]
          %v1718 = vld [vmem:[#allocation20 + $0x38] sm:$0xff]
          %v1719 = vld [vmem:[#allocation20 + $0x40] sm:$0xff]
          %v1720 = vld [vmem:[#allocation20 + $0x48] sm:$0xff]
          %v1721 = vld [vmem:[#allocation20 + $0x50] sm:$0xff]
          %v1722 = vld [vmem:[#allocation20 + $0x58] sm:$0xff]
          %v1723 = vld [vmem:[#allocation20 + $0x60] sm:$0xff]
          %v1724 = vld [vmem:[#allocation20 + $0x68] sm:$0xff]
          %v1725 = vld [vmem:[#allocation20 + $0x70] sm:$0xff]
          %v1726 = vld [vmem:[#allocation20 + $0x78] sm:$0xff]
          %v1727 = vld [vmem:[#allocation20 + $0x80] sm:$0xff]
          %v1728 = vld [vmem:[#allocation20 + $0x88] sm:$0xff]
          %v1729 = vld [vmem:[#allocation20 + $0x90] sm:$0xff]
          %v1730 = vld [vmem:[#allocation20 + $0x98] sm:$0xff]
          %v1731 = vld [vmem:[#allocation20 + $0xa0] sm:$0xff]
          %v1732 = vld [vmem:[#allocation20 + $0xa8] sm:$0xff]
          %v1733 = vld [vmem:[#allocation20 + $0xb0] sm:$0xff]
          %v1734 = vld [vmem:[#allocation20 + $0xb8] sm:$0xff]
          %v1735 = vld [vmem:[#allocation20 + $0xc0] sm:$0xff]
          %v1736 = vld [vmem:[#allocation20 + $0xc8] sm:$0xff]
          %v1737 = vld [vmem:[#allocation20 + $0xd0] sm:$0xff]
          %v1738 = vld [vmem:[#allocation20 + $0xd8] sm:$0xff]
          %v1739 = vld [vmem:[#allocation20 + $0xe0] sm:$0xff]
          %v1740 = vld [vmem:[#allocation20 + $0xe8] sm:$0xff]
          %v1741 = vld [vmem:[#allocation20 + $0xf0] sm:$0xff]
          %v1742 = vld [vmem:[#allocation20 + $0xf8] sm:$0xff]
          %v1743 = vld [vmem:[#allocation20 + $0x100] sm:$0xff]
          %v1744 = vld [vmem:[#allocation20 + $0x108] sm:$0xff]
          %v1745 = vld [vmem:[#allocation20 + $0x110] sm:$0xff]
          %v1746 = vld [vmem:[#allocation20 + $0x118] sm:$0xff]
          %v1747 = vld [vmem:[#allocation20 + $0x120] sm:$0xff]
          %v1748 = vld [vmem:[#allocation20 + $0x128] sm:$0xff]
          %v1749 = vld [vmem:[#allocation20 + $0x130] sm:$0xff]
          %v1750 = vld [vmem:[#allocation20 + $0x138] sm:$0xff]
          %v1751 = vld [vmem:[#allocation20 + $0x140] sm:$0xff]
          %v1752 = vld [vmem:[#allocation20 + $0x148] sm:$0xff]
          %v1753 = vld [vmem:[#allocation20 + $0x150] sm:$0xff]
          %v1754 = vld [vmem:[#allocation20 + $0x158] sm:$0xff]
          %v1755 = vld [vmem:[#allocation20 + $0x160] sm:$0xff]
          %v1756 = vld [vmem:[#allocation20 + $0x168] sm:$0xff]
          %v1757 = vld [vmem:[#allocation20 + $0x170] sm:$0xff]
          %v1758 = vld [vmem:[#allocation20 + $0x178] sm:$0xff]
          %v1759 = vld [vmem:[#allocation20 + $0x180] sm:$0xff]
          %v1760 = vld [vmem:[#allocation20 + $0x188] sm:$0xff]
          %v1761 = vld [vmem:[#allocation20 + $0x190] sm:$0xff]
          %v1762 = vld [vmem:[#allocation20 + $0x198] sm:$0xff]
          %v1763 = vld [vmem:[#allocation20 + $0x1a0] sm:$0xff]
          %v1764 = vld [vmem:[#allocation20 + $0x1a8] sm:$0xff]
          %v1765 = vld [vmem:[#allocation20 + $0x1b0] sm:$0xff]
          %v1766 = vld [vmem:[#allocation20 + $0x1b8] sm:$0xff]
          %v1767 = vld [vmem:[#allocation20 + $0x1c0] sm:$0xff]
          %v1768 = vld [vmem:[#allocation20 + $0x1c8] sm:$0xff]
          %v1769 = vld [vmem:[#allocation20 + $0x1d0] sm:$0xff]
          %v1770 = vld [vmem:[#allocation20 + $0x1d8] sm:$0xff]
          %v1771 = vld [vmem:[#allocation20 + $0x1e0] sm:$0xff]
          %v1772 = vld [vmem:[#allocation20 + $0x1e8] sm:$0xff]
          %v1773 = vld [vmem:[#allocation20 + $0x1f0] sm:$0xff]
          %v1774 = vld [vmem:[#allocation20 + $0x1f8] sm:$0xff]
          %v1775 = vld [vmem:[#allocation20 + $0x200] sm:$0xff]
          %v1776 = vld [vmem:[#allocation20 + $0x208] sm:$0xff]
          %v1777 = vld [vmem:[#allocation20 + $0x210] sm:$0xff]
          %v1778 = vld [vmem:[#allocation20 + $0x218] sm:$0xff]
          %v1779 = vld [vmem:[#allocation20 + $0x220] sm:$0xff]
          %v1780 = vld [vmem:[#allocation20 + $0x228] sm:$0xff]
          %v1781 = vld [vmem:[#allocation20 + $0x230] sm:$0xff]
          %v1782 = vld [vmem:[#allocation20 + $0x238] sm:$0xff]
          %v1783 = vld [vmem:[#allocation20 + $0x240] sm:$0xff]
          %v1784 = vld [vmem:[#allocation20 + $0x248] sm:$0xff]
          %v1785 = vld [vmem:[#allocation20 + $0x250] sm:$0xff]
          %v1786 = vld [vmem:[#allocation20 + $0x258] sm:$0xff]
          %v1787 = vld [vmem:[#allocation20 + $0x260] sm:$0xff]
          %v1788 = vld [vmem:[#allocation20 + $0x268] sm:$0xff]
          %v1789 = vld [vmem:[#allocation20 + $0x270] sm:$0xff]
          %v1790 = vld [vmem:[#allocation20 + $0x278] sm:$0xff]
          %v1791 = vld [vmem:[#allocation20 + $0x280] sm:$0xff]
          %v1792 = vld [vmem:[#allocation20 + $0x288] sm:$0xff]
          %v1793 = vld [vmem:[#allocation20 + $0x290] sm:$0xff]
          %v1794 = vld [vmem:[#allocation20 + $0x298] sm:$0xff]
          %v1795 = vld [vmem:[#allocation20 + $0x2a0] sm:$0xff]
          %v1796 = vld [vmem:[#allocation20 + $0x2a8] sm:$0xff]
          %v1797 = vld [vmem:[#allocation20 + $0x2b0] sm:$0xff]
          %v1798 = vld [vmem:[#allocation20 + $0x2b8] sm:$0xff]
          %v1799 = vld [vmem:[#allocation20 + $0x2c0] sm:$0xff]
          %v1800 = vld [vmem:[#allocation20 + $0x2c8] sm:$0xff]
          %v1801 = vld [vmem:[#allocation20 + $0x2d0] sm:$0xff]
          %v1802 = vld [vmem:[#allocation20 + $0x2d8] sm:$0xff]
          %v1803 = vld [vmem:[#allocation20 + $0x2e0] sm:$0xff]
          %v1804 = vld [vmem:[#allocation20 + $0x2e8] sm:$0xff]
          %v1805 = vld [vmem:[#allocation20 + $0x2f0] sm:$0xff]
          %v1806 = vld [vmem:[#allocation20 + $0x2f8] sm:$0xff]
          %v1807 = vld [vmem:[#allocation20 + $0x300] sm:$0xff]
          %v1808 = vld [vmem:[#allocation20 + $0x308] sm:$0xff]
          %v1809 = vld [vmem:[#allocation20 + $0x310] sm:$0xff]
          %v1810 = vld [vmem:[#allocation20 + $0x318] sm:$0xff]
          %v1811 = vld [vmem:[#allocation20 + $0x320] sm:$0xff]
          %v1812 = vld [vmem:[#allocation20 + $0x328] sm:$0xff]
          %v1813 = vld [vmem:[#allocation20 + $0x330] sm:$0xff]
          %v1814 = vld [vmem:[#allocation20 + $0x338] sm:$0xff]
          %v1815 = vld [vmem:[#allocation20 + $0x340] sm:$0xff]
          %v1816 = vld [vmem:[#allocation20 + $0x348] sm:$0xff]
          %v1817 = vld [vmem:[#allocation20 + $0x350] sm:$0xff]
          %v1818 = vld [vmem:[#allocation20 + $0x358] sm:$0xff]
          %v1819 = vld [vmem:[#allocation20 + $0x360] sm:$0xff]
          %v1820 = vld [vmem:[#allocation20 + $0x368] sm:$0xff]
          %v1821 = vld [vmem:[#allocation20 + $0x370] sm:$0xff]
          %v1822 = vld [vmem:[#allocation20 + $0x378] sm:$0xff]
          %v1823 = vld [vmem:[#allocation20 + $0x380] sm:$0xff]
          %v1824 = vld [vmem:[#allocation20 + $0x388] sm:$0xff]
          %v1825 = vld [vmem:[#allocation20 + $0x390] sm:$0xff]
          %v1826 = vld [vmem:[#allocation20 + $0x398] sm:$0xff]
          %v1827 = vld [vmem:[#allocation20 + $0x3a0] sm:$0xff]
          %v1828 = vld [vmem:[#allocation20 + $0x3a8] sm:$0xff]
          %v1829 = vld [vmem:[#allocation20 + $0x3b0] sm:$0xff]
          %v1830 = vld [vmem:[#allocation20 + $0x3b8] sm:$0xff]
          %v1831 = vld [vmem:[#allocation20 + $0x3c0] sm:$0xff]
          %v1832 = vld [vmem:[#allocation20 + $0x3c8] sm:$0xff]
          %v1833 = vld [vmem:[#allocation20 + $0x3d0] sm:$0xff]
          %v1834 = vld [vmem:[#allocation20 + $0x3d8] sm:$0xff]
          %v1835 = vld [vmem:[#allocation20 + $0x3e0] sm:$0xff]
          %v1836 = vld [vmem:[#allocation20 + $0x3e8] sm:$0xff]
          %v1837 = vld [vmem:[#allocation20 + $0x3f0] sm:$0xff]
          %v1838 = vld [vmem:[#allocation20 + $0x3f8] sm:$0xff]
          %v1839 = vld [vmem:[#allocation20 + $0x400] sm:$0xff]
          %v1840 = vld [vmem:[#allocation20 + $0x408] sm:$0xff]
          %v1841 = vld [vmem:[#allocation20 + $0x410] sm:$0xff]
          %v1842 = vld [vmem:[#allocation20 + $0x418] sm:$0xff]
          %v1843 = vld [vmem:[#allocation20 + $0x420] sm:$0xff]
          %v1844 = vld [vmem:[#allocation20 + $0x428] sm:$0xff]
          %v1845 = vld [vmem:[#allocation20 + $0x430] sm:$0xff]
          %v1846 = vld [vmem:[#allocation20 + $0x438] sm:$0xff]
          %v1847 = vld [vmem:[#allocation20 + $0x440] sm:$0xff]
          %v1848 = vld [vmem:[#allocation20 + $0x448] sm:$0xff]
          %v1849 = vld [vmem:[#allocation20 + $0x450] sm:$0xff]
          %v1850 = vld [vmem:[#allocation20 + $0x458] sm:$0xff]
          %v1851 = vld [vmem:[#allocation20 + $0x460] sm:$0xff]
          %v1852 = vld [vmem:[#allocation20 + $0x468] sm:$0xff]
          %v1853 = vld [vmem:[#allocation20 + $0x470] sm:$0xff]
          %v1854 = vld [vmem:[#allocation20 + $0x478] sm:$0xff]
          %v1855 = vld [vmem:[#allocation20 + $0x480] sm:$0xff]
          %v1856 = vld [vmem:[#allocation20 + $0x488] sm:$0xff]
          %v1857 = vld [vmem:[#allocation20 + $0x490] sm:$0xff]
          %v1858 = vld [vmem:[#allocation20 + $0x498] sm:$0xff]
          %v1859 = vld [vmem:[#allocation20 + $0x4a0] sm:$0xff]
          %v1860 = vld [vmem:[#allocation20 + $0x4a8] sm:$0xff]
          %v1861 = vld [vmem:[#allocation20 + $0x4b0] sm:$0xff]
          %v1862 = vld [vmem:[#allocation20 + $0x4b8] sm:$0xff]
          %v1863 = vld [vmem:[#allocation20 + $0x4c0] sm:$0xff]
          %v1864 = vld [vmem:[#allocation20 + $0x4c8] sm:$0xff]
          %v1865 = vld [vmem:[#allocation20 + $0x4d0] sm:$0xff]
          %v1866 = vld [vmem:[#allocation20 + $0x4d8] sm:$0xff]
          %v1867 = vld [vmem:[#allocation20 + $0x4e0] sm:$0xff]
          %v1868 = vld [vmem:[#allocation20 + $0x4e8] sm:$0xff]
          %v1869 = vld [vmem:[#allocation20 + $0x4f0] sm:$0xff]
          %v1870 = vld [vmem:[#allocation20 + $0x4f8] sm:$0xff]
          %v1871 = vld [vmem:[#allocation20 + $0x500] sm:$0xff]
          %v1872 = vld [vmem:[#allocation20 + $0x508] sm:$0xff]
          %v1873 = vld [vmem:[#allocation20 + $0x510] sm:$0xff]
          %v1874 = vld [vmem:[#allocation20 + $0x518] sm:$0xff]
          %v1875 = vld [vmem:[#allocation20 + $0x520] sm:$0xff]
          %v1876 = vld [vmem:[#allocation20 + $0x528] sm:$0xff]
          %v1877 = vld [vmem:[#allocation20 + $0x530] sm:$0xff]
          %v1878 = vld [vmem:[#allocation20 + $0x538] sm:$0xff]
          %v1879 = vld [vmem:[#allocation20 + $0x540] sm:$0xff]
          %v1880 = vld [vmem:[#allocation20 + $0x548] sm:$0xff]
          %v1881 = vld [vmem:[#allocation20 + $0x550] sm:$0xff]
          %v1882 = vld [vmem:[#allocation20 + $0x558] sm:$0xff]
          %v1883 = vld [vmem:[#allocation20 + $0x560] sm:$0xff]
          %v1884 = vld [vmem:[#allocation20 + $0x568] sm:$0xff]
          %v1885 = vld [vmem:[#allocation20 + $0x570] sm:$0xff]
          %v1886 = vld [vmem:[#allocation20 + $0x578] sm:$0xff]
          %v1887 = vld [vmem:[#allocation20 + $0x580] sm:$0xff]
          %v1888 = vld [vmem:[#allocation20 + $0x588] sm:$0xff]
          %v1889 = vld [vmem:[#allocation20 + $0x590] sm:$0xff]
          %v1890 = vld [vmem:[#allocation20 + $0x598] sm:$0xff]
          %v1891 = vld [vmem:[#allocation20 + $0x5a0] sm:$0xff]
          %v1892 = vld [vmem:[#allocation20 + $0x5a8] sm:$0xff]
          %v1893 = vld [vmem:[#allocation20 + $0x5b0] sm:$0xff]
          %v1894 = vld [vmem:[#allocation20 + $0x5b8] sm:$0xff]
          %v1895 = vld [vmem:[#allocation20 + $0x5c0] sm:$0xff]
          %v1896 = vld [vmem:[#allocation20 + $0x5c8] sm:$0xff]
          %v1897 = vld [vmem:[#allocation20 + $0x5d0] sm:$0xff]
          %v1898 = vld [vmem:[#allocation20 + $0x5d8] sm:$0xff]
          %v1899 = vld [vmem:[#allocation20 + $0x5e0] sm:$0xff]
          %v1900 = vld [vmem:[#allocation20 + $0x5e8] sm:$0xff]
          %v1901 = vld [vmem:[#allocation20 + $0x5f0] sm:$0xff]
          %v1902 = vld [vmem:[#allocation20 + $0x5f8] sm:$0xff]
          %v1903 = vld [vmem:[#allocation20 + $0x600] sm:$0xff]
          %v1904 = vld [vmem:[#allocation20 + $0x608] sm:$0xff]
          %v1905 = vld [vmem:[#allocation20 + $0x610] sm:$0xff]
          %v1906 = vld [vmem:[#allocation20 + $0x618] sm:$0xff]
          %v1907 = vld [vmem:[#allocation20 + $0x620] sm:$0xff]
          %v1908 = vld [vmem:[#allocation20 + $0x628] sm:$0xff]
          %v1909 = vld [vmem:[#allocation20 + $0x630] sm:$0xff]
          %v1910 = vld [vmem:[#allocation20 + $0x638] sm:$0xff]
          %v1911 = vld [vmem:[#allocation20 + $0x640] sm:$0xff]
          %v1912 = vld [vmem:[#allocation20 + $0x648] sm:$0xff]
          %v1913 = vld [vmem:[#allocation20 + $0x650] sm:$0xff]
          %v1914 = vld [vmem:[#allocation20 + $0x658] sm:$0xff]
          %v1915 = vld [vmem:[#allocation20 + $0x660] sm:$0xff]
          %v1916 = vld [vmem:[#allocation20 + $0x668] sm:$0xff]
          %v1917 = vld [vmem:[#allocation20 + $0x670] sm:$0xff]
          %v1918 = vld [vmem:[#allocation20 + $0x678] sm:$0xff]
          %v1919 = vld [vmem:[#allocation20 + $0x680] sm:$0xff]
          %v1920 = vld [vmem:[#allocation20 + $0x688] sm:$0xff]
          %v1921 = vld [vmem:[#allocation20 + $0x690] sm:$0xff]
          %v1922 = vld [vmem:[#allocation20 + $0x698] sm:$0xff]
          %v1923 = vld [vmem:[#allocation20 + $0x6a0] sm:$0xff]
          %v1924 = vld [vmem:[#allocation20 + $0x6a8] sm:$0xff]
          %v1925 = vld [vmem:[#allocation20 + $0x6b0] sm:$0xff]
          %v1926 = vld [vmem:[#allocation20 + $0x6b8] sm:$0xff]
          %v1927 = vld [vmem:[#allocation20 + $0x6c0] sm:$0xff]
          %v1928 = vld [vmem:[#allocation20 + $0x6c8] sm:$0xff]
          %v1929 = vld [vmem:[#allocation20 + $0x6d0] sm:$0xff]
          %v1930 = vld [vmem:[#allocation20 + $0x6d8] sm:$0xff]
          %v1931 = vld [vmem:[#allocation20 + $0x6e0] sm:$0xff]
          %v1932 = vld [vmem:[#allocation20 + $0x6e8] sm:$0xff]
          %v1933 = vld [vmem:[#allocation20 + $0x6f0] sm:$0xff]
          %v1934 = vld [vmem:[#allocation20 + $0x6f8] sm:$0xff]
          %v1935 = vld [vmem:[#allocation20 + $0x700] sm:$0xff]
          %v1936 = vld [vmem:[#allocation20 + $0x708] sm:$0xff]
          %v1937 = vld [vmem:[#allocation20 + $0x710] sm:$0xff]
          %v1938 = vld [vmem:[#allocation20 + $0x718] sm:$0xff]
          %v1939 = vld [vmem:[#allocation20 + $0x720] sm:$0xff]
          %v1940 = vld [vmem:[#allocation20 + $0x728] sm:$0xff]
          %v1941 = vld [vmem:[#allocation20 + $0x730] sm:$0xff]
          %v1942 = vld [vmem:[#allocation20 + $0x738] sm:$0xff]
          %v1943 = vld [vmem:[#allocation20 + $0x740] sm:$0xff]
          %v1944 = vld [vmem:[#allocation20 + $0x748] sm:$0xff]
          %v1945 = vld [vmem:[#allocation20 + $0x750] sm:$0xff]
          %v1946 = vld [vmem:[#allocation20 + $0x758] sm:$0xff]
          %v1947 = vld [vmem:[#allocation20 + $0x760] sm:$0xff]
          %v1948 = vld [vmem:[#allocation20 + $0x768] sm:$0xff]
          %v1949 = vld [vmem:[#allocation20 + $0x770] sm:$0xff]
          %v1950 = vld [vmem:[#allocation20 + $0x778] sm:$0xff]
          %v1951 = vld [vmem:[#allocation20 + $0x780] sm:$0xff]
          %v1952 = vld [vmem:[#allocation20 + $0x788] sm:$0xff]
          %v1953 = vld [vmem:[#allocation20 + $0x790] sm:$0xff]
          %v1954 = vld [vmem:[#allocation20 + $0x798] sm:$0xff]
          %v1955 = vld [vmem:[#allocation20 + $0x7a0] sm:$0xff]
          %v1956 = vld [vmem:[#allocation20 + $0x7a8] sm:$0xff]
          %v1957 = vld [vmem:[#allocation20 + $0x7b0] sm:$0xff]
          %v1958 = vld [vmem:[#allocation20 + $0x7b8] sm:$0xff]
          %v1959 = vld [vmem:[#allocation20 + $0x7c0] sm:$0xff]
          %v1960 = vld [vmem:[#allocation20 + $0x7c8] sm:$0xff]
          %v1961 = vld [vmem:[#allocation20 + $0x7d0] sm:$0xff]
          %v1962 = vld [vmem:[#allocation20 + $0x7d8] sm:$0xff]
          %v1963 = vld [vmem:[#allocation20 + $0x7e0] sm:$0xff]
          %v1964 = vld [vmem:[#allocation20 + $0x7e8] sm:$0xff]
          %v1965 = vld [vmem:[#allocation20 + $0x7f0] sm:$0xff]
          %v1966 = vld [vmem:[#allocation20 + $0x7f8] sm:$0xff]
          %v1967 = vld [vmem:[#allocation20 + $0x800] sm:$0xff]
          %v1968 = vld [vmem:[#allocation20 + $0x808] sm:$0xff]
          %v1969 = vld [vmem:[#allocation20 + $0x810] sm:$0xff]
          %v1970 = vld [vmem:[#allocation20 + $0x818] sm:$0xff]
          %v1971 = vld [vmem:[#allocation20 + $0x820] sm:$0xff]
          %v1972 = vld [vmem:[#allocation20 + $0x828] sm:$0xff]
          %v1973 = vld [vmem:[#allocation20 + $0x830] sm:$0xff]
          %v1974 = vld [vmem:[#allocation20 + $0x838] sm:$0xff]
          %v1975 = vld [vmem:[#allocation20 + $0x840] sm:$0xff]
          %v1976 = vld [vmem:[#allocation20 + $0x848] sm:$0xff]
          %v1977 = vld [vmem:[#allocation20 + $0x850] sm:$0xff]
          %v1978 = vld [vmem:[#allocation20 + $0x858] sm:$0xff]
          %v1979 = vld [vmem:[#allocation20 + $0x860] sm:$0xff]
          %v1980 = vld [vmem:[#allocation20 + $0x868] sm:$0xff]
          %v1981 = vld [vmem:[#allocation20 + $0x870] sm:$0xff]
          %v1982 = vld [vmem:[#allocation20 + $0x878] sm:$0xff]
          %v1983 = vld [vmem:[#allocation20 + $0x880] sm:$0xff]
          %v1984 = vld [vmem:[#allocation20 + $0x888] sm:$0xff]
          %v1985 = vld [vmem:[#allocation20 + $0x890] sm:$0xff]
          %v1986 = vld [vmem:[#allocation20 + $0x898] sm:$0xff]
          %v1987 = vld [vmem:[#allocation20 + $0x8a0] sm:$0xff]
          %v1988 = vld [vmem:[#allocation20 + $0x8a8] sm:$0xff]
          %v1989 = vld [vmem:[#allocation20 + $0x8b0] sm:$0xff]
          %v1990 = vld [vmem:[#allocation20 + $0x8b8] sm:$0xff]
          %v1991 = vld [vmem:[#allocation20 + $0x8c0] sm:$0xff]
          %v1992 = vld [vmem:[#allocation20 + $0x8c8] sm:$0xff]
          %v1993 = vld [vmem:[#allocation20 + $0x8d0] sm:$0xff]
          %v1994 = vld [vmem:[#allocation20 + $0x8d8] sm:$0xff]
          %v1995 = vld [vmem:[#allocation20 + $0x8e0] sm:$0xff]
          %v1996 = vld [vmem:[#allocation20 + $0x8e8] sm:$0xff]
          %v1997 = vld [vmem:[#allocation20 + $0x8f0] sm:$0xff]
          %v1998 = vld [vmem:[#allocation20 + $0x8f8] sm:$0xff]
          %v1999 = vld [vmem:[#allocation20 + $0x900] sm:$0xff]
          %v2000 = vld [vmem:[#allocation20 + $0x908] sm:$0xff]
          %v2001 = vld [vmem:[#allocation20 + $0x910] sm:$0xff]
          %v2002 = vld [vmem:[#allocation20 + $0x918] sm:$0xff]
          %v2003 = vld [vmem:[#allocation20 + $0x920] sm:$0xff]
          %v2004 = vld [vmem:[#allocation20 + $0x928] sm:$0xff]
          %v2005 = vld [vmem:[#allocation20 + $0x930] sm:$0xff]
          %v2006 = vld [vmem:[#allocation20 + $0x938] sm:$0xff]
          %v2007 = vld [vmem:[#allocation20 + $0x940] sm:$0xff]
          %v2008 = vld [vmem:[#allocation20 + $0x948] sm:$0xff]
          %v2009 = vld [vmem:[#allocation20 + $0x950] sm:$0xff]
          %v2010 = vld [vmem:[#allocation20 + $0x958] sm:$0xff]
          %v2011 = vld [vmem:[#allocation20 + $0x960] sm:$0xff]
          %v2012 = vld [vmem:[#allocation20 + $0x968] sm:$0xff]
          %v2013 = vld [vmem:[#allocation20 + $0x970] sm:$0xff]
          %v2014 = vld [vmem:[#allocation20 + $0x978] sm:$0xff]
          %v2015 = vld [vmem:[#allocation20 + $0x980] sm:$0xff]
          %v2016 = vld [vmem:[#allocation20 + $0x988] sm:$0xff]
          %v2017 = vld [vmem:[#allocation20 + $0x990] sm:$0xff]
          %v2018 = vld [vmem:[#allocation20 + $0x998] sm:$0xff]
          %v2019 = vld [vmem:[#allocation20 + $0x9a0] sm:$0xff]
          %v2020 = vld [vmem:[#allocation20 + $0x9a8] sm:$0xff]
          %v2021 = vld [vmem:[#allocation20 + $0x9b0] sm:$0xff]
          %v2022 = vld [vmem:[#allocation20 + $0x9b8] sm:$0xff]
          %v2023 = vld [vmem:[#allocation20 + $0x9c0] sm:$0xff]
          %v2024 = vld [vmem:[#allocation20 + $0x9c8] sm:$0xff]
          %v2025 = vld [vmem:[#allocation20 + $0x9d0] sm:$0xff]
          %v2026 = vld [vmem:[#allocation20 + $0x9d8] sm:$0xff]
          %v2027 = vld [vmem:[#allocation20 + $0x9e0] sm:$0xff]
          %v2028 = vld [vmem:[#allocation20 + $0x9e8] sm:$0xff]
          %v2029 = vld [vmem:[#allocation20 + $0x9f0] sm:$0xff]
          %v2030 = vld [vmem:[#allocation20 + $0x9f8] sm:$0xff]
          %v2031 = vld [vmem:[#allocation20 + $0xa00] sm:$0xff]
          %v2032 = vld [vmem:[#allocation20 + $0xa08] sm:$0xff]
          %v2033 = vld [vmem:[#allocation20 + $0xa10] sm:$0xff]
          %v2034 = vld [vmem:[#allocation20 + $0xa18] sm:$0xff]
          %v2035 = vld [vmem:[#allocation20 + $0xa20] sm:$0xff]
          %v2036 = vld [vmem:[#allocation20 + $0xa28] sm:$0xff]
          %v2037 = vld [vmem:[#allocation20 + $0xa30] sm:$0xff]
          %v2038 = vld [vmem:[#allocation20 + $0xa38] sm:$0xff]
          %v2039 = vld [vmem:[#allocation20 + $0xa40] sm:$0xff]
          %v2040 = vld [vmem:[#allocation20 + $0xa48] sm:$0xff]
          %v2041 = vld [vmem:[#allocation20 + $0xa50] sm:$0xff]
          %v2042 = vld [vmem:[#allocation20 + $0xa58] sm:$0xff]
          %v2043 = vld [vmem:[#allocation20 + $0xa60] sm:$0xff]
          %v2044 = vld [vmem:[#allocation20 + $0xa68] sm:$0xff]
          %v2045 = vld [vmem:[#allocation20 + $0xa70] sm:$0xff]
          %v2046 = vld [vmem:[#allocation20 + $0xa78] sm:$0xff]
          %v2047 = vld [vmem:[#allocation20 + $0xa80] sm:$0xff]
          %v2048 = vld [vmem:[#allocation20 + $0xa88] sm:$0xff]
          %v2049 = vld [vmem:[#allocation20 + $0xa90] sm:$0xff]
          %v2050 = vld [vmem:[#allocation20 + $0xa98] sm:$0xff]
          %v2051 = vld [vmem:[#allocation20 + $0xaa0] sm:$0xff]
          %v2052 = vld [vmem:[#allocation20 + $0xaa8] sm:$0xff]
          %v2053 = vld [vmem:[#allocation20 + $0xab0] sm:$0xff]
          %v2054 = vld [vmem:[#allocation20 + $0xab8] sm:$0xff]
          %v2055 = vld [vmem:[#allocation20 + $0xac0] sm:$0xff]
          %v2056 = vld [vmem:[#allocation20 + $0xac8] sm:$0xff]
          %v2057 = vld [vmem:[#allocation20 + $0xad0] sm:$0xff]
          %v2058 = vld [vmem:[#allocation20 + $0xad8] sm:$0xff]
          %v2059 = vld [vmem:[#allocation20 + $0xae0] sm:$0xff]
          %v2060 = vld [vmem:[#allocation20 + $0xae8] sm:$0xff]
          %v2061 = vld [vmem:[#allocation20 + $0xaf0] sm:$0xff]
          %v2062 = vld [vmem:[#allocation20 + $0xaf8] sm:$0xff]
          %v2063 = vld [vmem:[#allocation20 + $0xb00] sm:$0xff]
          %v2064 = vld [vmem:[#allocation20 + $0xb08] sm:$0xff]
          %v2065 = vld [vmem:[#allocation20 + $0xb10] sm:$0xff]
          %v2066 = vld [vmem:[#allocation20 + $0xb18] sm:$0xff]
          %v2067 = vld [vmem:[#allocation20 + $0xb20] sm:$0xff]
          %v2068 = vld [vmem:[#allocation20 + $0xb28] sm:$0xff]
          %v2069 = vld [vmem:[#allocation20 + $0xb30] sm:$0xff]
          %v2070 = vld [vmem:[#allocation20 + $0xb38] sm:$0xff]
          %v2071 = vld [vmem:[#allocation20 + $0xb40] sm:$0xff]
          %v2072 = vld [vmem:[#allocation20 + $0xb48] sm:$0xff]
          %v2073 = vld [vmem:[#allocation20 + $0xb50] sm:$0xff]
          %v2074 = vld [vmem:[#allocation20 + $0xb58] sm:$0xff]
          %v2075 = vld [vmem:[#allocation20 + $0xb60] sm:$0xff]
          %v2076 = vld [vmem:[#allocation20 + $0xb68] sm:$0xff]
          %v2077 = vld [vmem:[#allocation20 + $0xb70] sm:$0xff]
          %v2078 = vld [vmem:[#allocation20 + $0xb78] sm:$0xff]
          %v2079 = vld [vmem:[#allocation20 + $0xb80] sm:$0xff]
          %v2080 = vld [vmem:[#allocation20 + $0xb88] sm:$0xff]
          %v2081 = vld [vmem:[#allocation20 + $0xb90] sm:$0xff]
          %v2082 = vld [vmem:[#allocation20 + $0xb98] sm:$0xff]
          %v2083 = vld [vmem:[#allocation20 + $0xba0] sm:$0xff]
          %v2084 = vld [vmem:[#allocation20 + $0xba8] sm:$0xff]
          %v2085 = vld [vmem:[#allocation20 + $0xbb0] sm:$0xff]
          %v2086 = vld [vmem:[#allocation20 + $0xbb8] sm:$0xff]
          %v2087 = vld [vmem:[#allocation20 + $0xbc0] sm:$0xff]
          %v2088 = vld [vmem:[#allocation20 + $0xbc8] sm:$0xff]
          %v2089 = vld [vmem:[#allocation20 + $0xbd0] sm:$0xff]
          %v2090 = vld [vmem:[#allocation20 + $0xbd8] sm:$0xff]
          %v2091 = vld [vmem:[#allocation20 + $0xbe0] sm:$0xff]
          %v2092 = vld [vmem:[#allocation20 + $0xbe8] sm:$0xff]
          %v2093 = vld [vmem:[#allocation20 + $0xbf0] sm:$0xff]
          %v2094 = vld [vmem:[#allocation20 + $0xbf8] sm:$0xff]
          %v2095 = vld [vmem:[#allocation20 + $0xc00] sm:$0xff]
          %v2096 = vld [vmem:[#allocation20 + $0xc08] sm:$0xff]
          %v2097 = vld [vmem:[#allocation20 + $0xc10] sm:$0xff]
          %v2098 = vld [vmem:[#allocation20 + $0xc18] sm:$0xff]
          %v2099 = vld [vmem:[#allocation20 + $0xc20] sm:$0xff]
          %v2100 = vld [vmem:[#allocation20 + $0xc28] sm:$0xff]
          %v2101 = vld [vmem:[#allocation20 + $0xc30] sm:$0xff]
          %v2102 = vld [vmem:[#allocation20 + $0xc38] sm:$0xff]
          %v2103 = vld [vmem:[#allocation20 + $0xc40] sm:$0xff]
          %v2104 = vld [vmem:[#allocation20 + $0xc48] sm:$0xff]
          %v2105 = vld [vmem:[#allocation20 + $0xc50] sm:$0xff]
          %v2106 = vld [vmem:[#allocation20 + $0xc58] sm:$0xff]
          %v2107 = vld [vmem:[#allocation20 + $0xc60] sm:$0xff]
          %v2108 = vld [vmem:[#allocation20 + $0xc68] sm:$0xff]
          %v2109 = vld [vmem:[#allocation20 + $0xc70] sm:$0xff]
          %v2110 = vld [vmem:[#allocation20 + $0xc78] sm:$0xff]
          %v2111 = vld [vmem:[#allocation20 + $0xc80] sm:$0xff]
          %v2112 = vld [vmem:[#allocation20 + $0xc88] sm:$0xff]
          %v2113 = vld [vmem:[#allocation20 + $0xc90] sm:$0xff]
          %v2114 = vld [vmem:[#allocation20 + $0xc98] sm:$0xff]
          %v2115 = vld [vmem:[#allocation20 + $0xca0] sm:$0xff]
          %v2116 = vld [vmem:[#allocation20 + $0xca8] sm:$0xff]
          %v2117 = vld [vmem:[#allocation20 + $0xcb0] sm:$0xff]
          %v2118 = vld [vmem:[#allocation20 + $0xcb8] sm:$0xff]
          %v2119 = vld [vmem:[#allocation20 + $0xcc0] sm:$0xff]
          %v2120 = vld [vmem:[#allocation20 + $0xcc8] sm:$0xff]
          %v2121 = vld [vmem:[#allocation20 + $0xcd0] sm:$0xff]
          %v2122 = vld [vmem:[#allocation20 + $0xcd8] sm:$0xff]
          %v2123 = vld [vmem:[#allocation20 + $0xce0] sm:$0xff]
          %v2124 = vld [vmem:[#allocation20 + $0xce8] sm:$0xff]
          %v2125 = vld [vmem:[#allocation20 + $0xcf0] sm:$0xff]
          %v2126 = vld [vmem:[#allocation20 + $0xcf8] sm:$0xff]
          %v2127 = vld [vmem:[#allocation20 + $0xd00] sm:$0xff]
          %v2128 = vld [vmem:[#allocation20 + $0xd08] sm:$0xff]
          %v2129 = vld [vmem:[#allocation20 + $0xd10] sm:$0xff]
          %v2130 = vld [vmem:[#allocation20 + $0xd18] sm:$0xff]
          %v2131 = vld [vmem:[#allocation20 + $0xd20] sm:$0xff]
          %v2132 = vld [vmem:[#allocation20 + $0xd28] sm:$0xff]
          %v2133 = vld [vmem:[#allocation20 + $0xd30] sm:$0xff]
          %v2134 = vld [vmem:[#allocation20 + $0xd38] sm:$0xff]
          %v2135 = vld [vmem:[#allocation20 + $0xd40] sm:$0xff]
          %v2136 = vld [vmem:[#allocation20 + $0xd48] sm:$0xff]
          %v2137 = vld [vmem:[#allocation20 + $0xd50] sm:$0xff]
          %v2138 = vld [vmem:[#allocation20 + $0xd58] sm:$0xff]
          %v2139 = vld [vmem:[#allocation20 + $0xd60] sm:$0xff]
          %v2140 = vld [vmem:[#allocation20 + $0xd68] sm:$0xff]
          %v2141 = vld [vmem:[#allocation20 + $0xd70] sm:$0xff]
          %v2142 = vld [vmem:[#allocation20 + $0xd78] sm:$0xff]
          %v2143 = vld [vmem:[#allocation20 + $0xd80] sm:$0xff]
          %v2144 = vld [vmem:[#allocation20 + $0xd88] sm:$0xff]
          %v2145 = vld [vmem:[#allocation20 + $0xd90] sm:$0xff]
          %v2146 = vld [vmem:[#allocation20 + $0xd98] sm:$0xff]
          %v2147 = vld [vmem:[#allocation20 + $0xda0] sm:$0xff]
          %v2148 = vld [vmem:[#allocation20 + $0xda8] sm:$0xff]
          %v2149 = vld [vmem:[#allocation20 + $0xdb0] sm:$0xff]
          %v2150 = vld [vmem:[#allocation20 + $0xdb8] sm:$0xff]
          %v2151 = vld [vmem:[#allocation20 + $0xdc0] sm:$0xff]
          %v2152 = vld [vmem:[#allocation20 + $0xdc8] sm:$0xff]
          %v2153 = vld [vmem:[#allocation20 + $0xdd0] sm:$0xff]
          %v2154 = vld [vmem:[#allocation20 + $0xdd8] sm:$0xff]
          %v2155 = vld [vmem:[#allocation20 + $0xde0] sm:$0xff]
          %v2156 = vld [vmem:[#allocation20 + $0xde8] sm:$0xff]
          %v2157 = vld [vmem:[#allocation20 + $0xdf0] sm:$0xff]
          %v2158 = vld [vmem:[#allocation20 + $0xdf8] sm:$0xff]
          %v2159 = vld [vmem:[#allocation20 + $0xe00] sm:$0xff]
          %v2160 = vld [vmem:[#allocation20 + $0xe08] sm:$0xff]
          %v2161 = vld [vmem:[#allocation20 + $0xe10] sm:$0xff]
          %v2162 = vld [vmem:[#allocation20 + $0xe18] sm:$0xff]
          %v2163 = vld [vmem:[#allocation20 + $0xe20] sm:$0xff]
          %v2164 = vld [vmem:[#allocation20 + $0xe28] sm:$0xff]
          %v2165 = vld [vmem:[#allocation20 + $0xe30] sm:$0xff]
          %v2166 = vld [vmem:[#allocation20 + $0xe38] sm:$0xff]
          %v2167 = vld [vmem:[#allocation20 + $0xe40] sm:$0xff]
          %v2168 = vld [vmem:[#allocation20 + $0xe48] sm:$0xff]
          %v2169 = vld [vmem:[#allocation20 + $0xe50] sm:$0xff]
          %v2170 = vld [vmem:[#allocation20 + $0xe58] sm:$0xff]
          %v2171 = vld [vmem:[#allocation20 + $0xe60] sm:$0xff]
          %v2172 = vld [vmem:[#allocation20 + $0xe68] sm:$0xff]
          %v2173 = vld [vmem:[#allocation20 + $0xe70] sm:$0xff]
          %v2174 = vld [vmem:[#allocation20 + $0xe78] sm:$0xff]
          %v2175 = vld [vmem:[#allocation20 + $0xe80] sm:$0xff]
          %v2176 = vld [vmem:[#allocation20 + $0xe88] sm:$0xff]
          %v2177 = vld [vmem:[#allocation20 + $0xe90] sm:$0xff]
          %v2178 = vld [vmem:[#allocation20 + $0xe98] sm:$0xff]
          %v2179 = vld [vmem:[#allocation20 + $0xea0] sm:$0xff]
          %v2180 = vld [vmem:[#allocation20 + $0xea8] sm:$0xff]
          %v2181 = vld [vmem:[#allocation20 + $0xeb0] sm:$0xff]
          %v2182 = vld [vmem:[#allocation20 + $0xeb8] sm:$0xff]
          %v2183 = vld [vmem:[#allocation20 + $0xec0] sm:$0xff]
          %v2184 = vld [vmem:[#allocation20 + $0xec8] sm:$0xff]
          %v2185 = vld [vmem:[#allocation20 + $0xed0] sm:$0xff]
          %v2186 = vld [vmem:[#allocation20 + $0xed8] sm:$0xff]
          %v2187 = vld [vmem:[#allocation20 + $0xee0] sm:$0xff]
          %v2188 = vld [vmem:[#allocation20 + $0xee8] sm:$0xff]
          %v2189 = vld [vmem:[#allocation20 + $0xef0] sm:$0xff]
          %v2190 = vld [vmem:[#allocation20 + $0xef8] sm:$0xff]
          %v2191 = vld [vmem:[#allocation20 + $0xf00] sm:$0xff]
          %v2192 = vld [vmem:[#allocation20 + $0xf08] sm:$0xff]
          %v2193 = vld [vmem:[#allocation20 + $0xf10] sm:$0xff]
          %v2194 = vld [vmem:[#allocation20 + $0xf18] sm:$0xff]
          %v2195 = vld [vmem:[#allocation20 + $0xf20] sm:$0xff]
          %v2196 = vld [vmem:[#allocation20 + $0xf28] sm:$0xff]
          %v2197 = vld [vmem:[#allocation20 + $0xf30] sm:$0xff]
          %v2198 = vld [vmem:[#allocation20 + $0xf38] sm:$0xff]
          %v2199 = vld [vmem:[#allocation20 + $0xf40] sm:$0xff]
          %v2200 = vld [vmem:[#allocation20 + $0xf48] sm:$0xff]
          %v2201 = vld [vmem:[#allocation20 + $0xf50] sm:$0xff]
          %v2202 = vld [vmem:[#allocation20 + $0xf58] sm:$0xff]
          %v2203 = vld [vmem:[#allocation20 + $0xf60] sm:$0xff]
          %v2204 = vld [vmem:[#allocation20 + $0xf68] sm:$0xff]
          %v2205 = vld [vmem:[#allocation20 + $0xf70] sm:$0xff]
          %v2206 = vld [vmem:[#allocation20 + $0xf78] sm:$0xff]
          %v2207 = vld [vmem:[#allocation20 + $0xf80] sm:$0xff]
          %v2208 = vld [vmem:[#allocation20 + $0xf88] sm:$0xff]
          %v2209 = vld [vmem:[#allocation20 + $0xf90] sm:$0xff]
          %v2210 = vld [vmem:[#allocation20 + $0xf98] sm:$0xff]
          %v2211 = vld [vmem:[#allocation20 + $0xfa0] sm:$0xff]
          %v2212 = vld [vmem:[#allocation20 + $0xfa8] sm:$0xff]
          %v2213 = vld [vmem:[#allocation20 + $0xfb0] sm:$0xff]
          %v2214 = vld [vmem:[#allocation20 + $0xfb8] sm:$0xff]
          %v2215 = vld [vmem:[#allocation20 + $0xfc0] sm:$0xff]
          %v2216 = vld [vmem:[#allocation20 + $0xfc8] sm:$0xff]
          %v2217 = vld [vmem:[#allocation20 + $0xfd0] sm:$0xff]
          %v2218 = vld [vmem:[#allocation20 + $0xfd8] sm:$0xff]
          %v2219 = vld [vmem:[#allocation20 + $0xfe0] sm:$0xff]
          %v2220 = vld [vmem:[#allocation20 + $0xfe8] sm:$0xff]
          %v2221 = vld [vmem:[#allocation20 + $0xff0] sm:$0xff]
          %v2222 = vld [vmem:[#allocation20 + $0xff8] sm:$0xff]
          %v2223 = vld [vmem:[#allocation22] sm:$0xff]
          %v2225 = vlaneseq
          %v2226 = vshrl.u32 %v2225, 7
          %v2227 = vsub.s32 0, %v2226
          %v2228 = vrot.slane %v2223, %v2227
          %v2229 = vlaneseq
          %v2230 = vshrl.u32 %v2229, 7
          %v2231 = vsub.s32 1, %v2230
          %v2232 = vrot.slane %v2223, %v2231
          %v2233 = vlaneseq
          %v2234 = vshrl.u32 %v2233, 7
          %v2235 = vsub.s32 2, %v2234
          %v2236 = vrot.slane %v2223, %v2235
          %v2237 = vlaneseq
          %v2238 = vshrl.u32 %v2237, 7
          %v2239 = vsub.s32 3, %v2238
          %v2240 = vrot.slane %v2223, %v2239
          %v2241 = vlaneseq
          %v2242 = vshrl.u32 %v2241, 7
          %v2243 = vsub.s32 4, %v2242
          %v2244 = vrot.slane %v2223, %v2243
          %v2245 = vlaneseq
          %v2246 = vshrl.u32 %v2245, 7
          %v2247 = vsub.s32 5, %v2246
          %v2248 = vrot.slane %v2223, %v2247
          %v2249 = vlaneseq
          %v2250 = vshrl.u32 %v2249, 7
          %v2251 = vsub.s32 6, %v2250
          %v2252 = vrot.slane %v2223, %v2251
          %v2253 = vlaneseq
          %v2254 = vshrl.u32 %v2253, 7
          %v2255 = vsub.s32 7, %v2254
          %v2256 = vrot.slane %v2223, %v2255
          %2265 = vmatprep.subr.mxu0 %v1712
          %2266 = vmatpush1.msra.mxu0 %v1711
          %2267 = vmatprep.subr.mxu0 %v1720
          %2268 = vmatpush1.msra.mxu0 %v1719
          %2269 = vmatprep.subr.mxu0 %v1728
          %2270 = vmatpush1.msra.mxu0 %v1727
          %2271 = vmatprep.subr.mxu0 %v1736
          %2272 = vmatpush1.msra.mxu0 %v1735
          %2273 = vmatprep.subr.mxu0 %v1744
          %2274 = vmatpush1.msra.mxu0 %v1743
          %2275 = vmatprep.subr.mxu0 %v1752
          %2276 = vmatpush1.msra.mxu0 %v1751
          %2277 = vmatprep.subr.mxu0 %v1760
          %2278 = vmatpush1.msra.mxu0 %v1759
          %2279 = vmatprep.subr.mxu0 %v1768
          %2280 = vmatpush1.msra.mxu0 %v1767
          %2281 = vmatprep.subr.mxu0 %v1776
          %2282 = vmatpush1.msra.mxu0 %v1775
          %2283 = vmatprep.subr.mxu0 %v1784
          %2284 = vmatpush1.msra.mxu0 %v1783
          %2285 = vmatprep.subr.mxu0 %v1792
          %2286 = vmatpush1.msra.mxu0 %v1791
          %2287 = vmatprep.subr.mxu0 %v1800
          %2288 = vmatpush1.msra.mxu0 %v1799
          %2289 = vmatprep.subr.mxu0 %v1808
          %2290 = vmatpush1.msra.mxu0 %v1807
          %2291 = vmatprep.subr.mxu0 %v1816
          %2292 = vmatpush1.msra.mxu0 %v1815
          %2293 = vmatprep.subr.mxu0 %v1824
          %2294 = vmatpush1.msra.mxu0 %v1823
          %2295 = vmatprep.subr.mxu0 %v1832
          %2296 = vmatpush1.msra.mxu0 %v1831
          %2297 = vmatprep.subr.mxu0 %v1840
          %2298 = vmatpush1.msra.mxu0 %v1839
          %2299 = vmatprep.subr.mxu0 %v1848
          %2300 = vmatpush1.msra.mxu0 %v1847
          %2301 = vmatprep.subr.mxu0 %v1856
          %2302 = vmatpush1.msra.mxu0 %v1855
          %2303 = vmatprep.subr.mxu0 %v1864
          %2304 = vmatpush1.msra.mxu0 %v1863
          %2305 = vmatprep.subr.mxu0 %v1872
          %2306 = vmatpush1.msra.mxu0 %v1871
          %2307 = vmatprep.subr.mxu0 %v1880
          %2308 = vmatpush1.msra.mxu0 %v1879
          %2309 = vmatprep.subr.mxu0 %v1888
          %2310 = vmatpush1.msra.mxu0 %v1887
          %2311 = vmatprep.subr.mxu0 %v1896
          %2312 = vmatpush1.msra.mxu0 %v1895
          %2313 = vmatprep.subr.mxu0 %v1904
          %2314 = vmatpush1.msra.mxu0 %v1903
          %2315 = vmatprep.subr.mxu0 %v1912
          %2316 = vmatpush1.msra.mxu0 %v1911
          %2317 = vmatprep.subr.mxu0 %v1920
          %2318 = vmatpush1.msra.mxu0 %v1919
          %2319 = vmatprep.subr.mxu0 %v1928
          %2320 = vmatpush1.msra.mxu0 %v1927
          %2321 = vmatprep.subr.mxu0 %v1936
          %2322 = vmatpush1.msra.mxu0 %v1935
          %2323 = vmatprep.subr.mxu0 %v1944
          %2324 = vmatpush1.msra.mxu0 %v1943
          %2325 = vmatprep.subr.mxu0 %v1952
          %2326 = vmatpush1.msra.mxu0 %v1951
          %2327 = vmatprep.subr.mxu0 %v1960
          %2328 = vmatpush1.msra.mxu0 %v1959
          %2329 = vmatprep.mubr.f32.mxu0 %v1708
          %2330 = vmatmul.mubr.f32.gmra.mrb[0].mxu0 %v1707
          %v2331 = vpop.f32.mrb[0].mxu0
          %v2332 = vadd.f32 %v2228, %v2331
          %v2333 = vpop.f32.mrb[0].mxu0
          %v2334 = vadd.f32 %v2232, %v2333
          %2335 = vdwg.mxu0
          %2336 = vmatprep.subr.mxu0 %v1968
          %2337 = vmatpush1.msra.mxu0 %v1967
          %2338 = vmatprep.subr.mxu0 %v1976
          %2339 = vmatpush1.msra.mxu0 %v1975
          %2340 = vmatprep.subr.mxu0 %v1984
          %2341 = vmatpush1.msra.mxu0 %v1983
          %2342 = vmatprep.subr.mxu0 %v1992
          %2343 = vmatpush1.msra.mxu0 %v1991
          %2344 = vmatprep.subr.mxu0 %v2000
          %2345 = vmatpush1.msra.mxu0 %v1999
          %2346 = vmatprep.subr.mxu0 %v2008
          %2347 = vmatpush1.msra.mxu0 %v2007
          %2348 = vmatprep.subr.mxu0 %v2016
          %2349 = vmatpush1.msra.mxu0 %v2015
          %2350 = vmatprep.subr.mxu0 %v2024
          %2351 = vmatpush1.msra.mxu0 %v2023
          %2352 = vmatprep.subr.mxu0 %v2032
          %2353 = vmatpush1.msra.mxu0 %v2031
          %2354 = vmatprep.subr.mxu0 %v2040
          %2355 = vmatpush1.msra.mxu0 %v2039
          %2356 = vmatprep.subr.mxu0 %v2048
          %2357 = vmatpush1.msra.mxu0 %v2047
          %2358 = vmatprep.subr.mxu0 %v2056
          %2359 = vmatpush1.msra.mxu0 %v2055
          %2360 = vmatprep.subr.mxu0 %v2064
          %2361 = vmatpush1.msra.mxu0 %v2063
          %2362 = vmatprep.subr.mxu0 %v2072
          %2363 = vmatpush1.msra.mxu0 %v2071
          %2364 = vmatprep.subr.mxu0 %v2080
          %2365 = vmatpush1.msra.mxu0 %v2079
          %2366 = vmatprep.subr.mxu0 %v2088
          %2367 = vmatpush1.msra.mxu0 %v2087
          %2368 = vmatprep.subr.mxu0 %v2096
          %2369 = vmatpush1.msra.mxu0 %v2095
          %2370 = vmatprep.subr.mxu0 %v2104
          %2371 = vmatpush1.msra.mxu0 %v2103
          %2372 = vmatprep.subr.mxu0 %v2112
          %2373 = vmatpush1.msra.mxu0 %v2111
          %2374 = vmatprep.subr.mxu0 %v2120
          %2375 = vmatpush1.msra.mxu0 %v2119
          %2376 = vmatprep.subr.mxu0 %v2128
          %2377 = vmatpush1.msra.mxu0 %v2127
          %2378 = vmatprep.subr.mxu0 %v2136
          %2379 = vmatpush1.msra.mxu0 %v2135
          %2380 = vmatprep.subr.mxu0 %v2144
          %2381 = vmatpush1.msra.mxu0 %v2143
          %2382 = vmatprep.subr.mxu0 %v2152
          %2383 = vmatpush1.msra.mxu0 %v2151
          %2384 = vmatprep.subr.mxu0 %v2160
          %2385 = vmatpush1.msra.mxu0 %v2159
          %2386 = vmatprep.subr.mxu0 %v2168
          %2387 = vmatpush1.msra.mxu0 %v2167
          %2388 = vmatprep.subr.mxu0 %v2176
          %2389 = vmatpush1.msra.mxu0 %v2175
          %2390 = vmatprep.subr.mxu0 %v2184
          %2391 = vmatpush1.msra.mxu0 %v2183
          %2392 = vmatprep.subr.mxu0 %v2192
          %2393 = vmatpush1.msra.mxu0 %v2191
          %2394 = vmatprep.subr.mxu0 %v2200
          %2395 = vmatpush1.msra.mxu0 %v2199
          %2396 = vmatprep.subr.mxu0 %v2208
          %2397 = vmatpush1.msra.mxu0 %v2207
          %2398 = vmatprep.subr.mxu0 %v2216
          %2399 = vmatpush1.msra.mxu0 %v2215
          %2400 = vmatprep.mubr.f32.mxu0 %v1710
          %2401 = vmatmul.mubr.f32.gmra.mrb[0].mxu0 %v1709
          %v2402 = vpop.f32.mrb[0].mxu0
          %v2403 = vadd.f32 %v2332, %v2402
          %v2404 = vpop.f32.mrb[0].mxu0
          %v2405 = vadd.f32 %v2334, %v2404
          %2406 = vdwg.mxu0
          %2407 = vmatprep.subr.mxu0 %v1714
          %2408 = vmatpush1.msra.mxu0 %v1713
          %2409 = vmatprep.subr.mxu0 %v1722
          %2410 = vmatpush1.msra.mxu0 %v1721
          %2411 = vmatprep.subr.mxu0 %v1730
          %2412 = vmatpush1.msra.mxu0 %v1729
          %2413 = vmatprep.subr.mxu0 %v1738
          %2414 = vmatpush1.msra.mxu0 %v1737
          %2415 = vmatprep.subr.mxu0 %v1746
          %2416 = vmatpush1.msra.mxu0 %v1745
          %2417 = vmatprep.subr.mxu0 %v1754
          %2418 = vmatpush1.msra.mxu0 %v1753
          %2419 = vmatprep.subr.mxu0 %v1762
          %2420 = vmatpush1.msra.mxu0 %v1761
          %2421 = vmatprep.subr.mxu0 %v1770
          %2422 = vmatpush1.msra.mxu0 %v1769
          %2423 = vmatprep.subr.mxu0 %v1778
          %2424 = vmatpush1.msra.mxu0 %v1777
          %2425 = vmatprep.subr.mxu0 %v1786
          %2426 = vmatpush1.msra.mxu0 %v1785
          %2427 = vmatprep.subr.mxu0 %v1794
          %2428 = vmatpush1.msra.mxu0 %v1793
          %2429 = vmatprep.subr.mxu0 %v1802
          %2430 = vmatpush1.msra.mxu0 %v1801
          %2431 = vmatprep.subr.mxu0 %v1810
          %2432 = vmatpush1.msra.mxu0 %v1809
          %2433 = vmatprep.subr.mxu0 %v1818
          %2434 = vmatpush1.msra.mxu0 %v1817
          %2435 = vmatprep.subr.mxu0 %v1826
          %2436 = vmatpush1.msra.mxu0 %v1825
          %2437 = vmatprep.subr.mxu0 %v1834
          %2438 = vmatpush1.msra.mxu0 %v1833
          %2439 = vmatprep.subr.mxu0 %v1842
          %2440 = vmatpush1.msra.mxu0 %v1841
          %2441 = vmatprep.subr.mxu0 %v1850
          %2442 = vmatpush1.msra.mxu0 %v1849
          %2443 = vmatprep.subr.mxu0 %v1858
          %2444 = vmatpush1.msra.mxu0 %v1857
          %2445 = vmatprep.subr.mxu0 %v1866
          %2446 = vmatpush1.msra.mxu0 %v1865
          %2447 = vmatprep.subr.mxu0 %v1874
          %2448 = vmatpush1.msra.mxu0 %v1873
          %2449 = vmatprep.subr.mxu0 %v1882
          %2450 = vmatpush1.msra.mxu0 %v1881
          %2451 = vmatprep.subr.mxu0 %v1890
          %2452 = vmatpush1.msra.mxu0 %v1889
          %2453 = vmatprep.subr.mxu0 %v1898
          %2454 = vmatpush1.msra.mxu0 %v1897
          %2455 = vmatprep.subr.mxu0 %v1906
          %2456 = vmatpush1.msra.mxu0 %v1905
          %2457 = vmatprep.subr.mxu0 %v1914
          %2458 = vmatpush1.msra.mxu0 %v1913
          %2459 = vmatprep.subr.mxu0 %v1922
          %2460 = vmatpush1.msra.mxu0 %v1921
          %2461 = vmatprep.subr.mxu0 %v1930
          %2462 = vmatpush1.msra.mxu0 %v1929
          %2463 = vmatprep.subr.mxu0 %v1938
          %2464 = vmatpush1.msra.mxu0 %v1937
          %2465 = vmatprep.subr.mxu0 %v1946
          %2466 = vmatpush1.msra.mxu0 %v1945
          %2467 = vmatprep.subr.mxu0 %v1954
          %2468 = vmatpush1.msra.mxu0 %v1953
          %2469 = vmatprep.subr.mxu0 %v1962
          %2470 = vmatpush1.msra.mxu0 %v1961
          %2471 = vmatprep.mubr.f32.mxu0 %v1708
          %2472 = vmatmul.mubr.f32.gmra.mrb[0].mxu0 %v1707
          %v2473 = vpop.f32.mrb[0].mxu0
          %v2474 = vadd.f32 %v2236, %v2473
          %v2475 = vpop.f32.mrb[0].mxu0
          %v2476 = vadd.f32 %v2240, %v2475
          %2477 = vdwg.mxu0
          %2478 = vmatprep.subr.mxu0 %v1970
          %2479 = vmatpush1.msra.mxu0 %v1969
          %2480 = vmatprep.subr.mxu0 %v1978
          %2481 = vmatpush1.msra.mxu0 %v1977
          %2482 = vmatprep.subr.mxu0 %v1986
          %2483 = vmatpush1.msra.mxu0 %v1985
          %2484 = vmatprep.subr.mxu0 %v1994
          %2485 = vmatpush1.msra.mxu0 %v1993
          %2486 = vmatprep.subr.mxu0 %v2002
          %2487 = vmatpush1.msra.mxu0 %v2001
          %2488 = vmatprep.subr.mxu0 %v2010
          %2489 = vmatpush1.msra.mxu0 %v2009
          %2490 = vmatprep.subr.mxu0 %v2018
          %2491 = vmatpush1.msra.mxu0 %v2017
          %2492 = vmatprep.subr.mxu0 %v2026
          %2493 = vmatpush1.msra.mxu0 %v2025
          %2494 = vmatprep.subr.mxu0 %v2034
          %2495 = vmatpush1.msra.mxu0 %v2033
          %2496 = vmatprep.subr.mxu0 %v2042
          %2497 = vmatpush1.msra.mxu0 %v2041
          %2498 = vmatprep.subr.mxu0 %v2050
          %2499 = vmatpush1.msra.mxu0 %v2049
          %2500 = vmatprep.subr.mxu0 %v2058
          %2501 = vmatpush1.msra.mxu0 %v2057
          %2502 = vmatprep.subr.mxu0 %v2066
          %2503 = vmatpush1.msra.mxu0 %v2065
          %2504 = vmatprep.subr.mxu0 %v2074
          %2505 = vmatpush1.msra.mxu0 %v2073
          %2506 = vmatprep.subr.mxu0 %v2082
          %2507 = vmatpush1.msra.mxu0 %v2081
          %2508 = vmatprep.subr.mxu0 %v2090
          %2509 = vmatpush1.msra.mxu0 %v2089
          %2510 = vmatprep.subr.mxu0 %v2098
          %2511 = vmatpush1.msra.mxu0 %v2097
          %2512 = vmatprep.subr.mxu0 %v2106
          %2513 = vmatpush1.msra.mxu0 %v2105
          %2514 = vmatprep.subr.mxu0 %v2114
          %2515 = vmatpush1.msra.mxu0 %v2113
          %2516 = vmatprep.subr.mxu0 %v2122
          %2517 = vmatpush1.msra.mxu0 %v2121
          %2518 = vmatprep.subr.mxu0 %v2130
          %2519 = vmatpush1.msra.mxu0 %v2129
          %2520 = vmatprep.subr.mxu0 %v2138
          %2521 = vmatpush1.msra.mxu0 %v2137
          %2522 = vmatprep.subr.mxu0 %v2146
          %2523 = vmatpush1.msra.mxu0 %v2145
          %2524 = vmatprep.subr.mxu0 %v2154
          %2525 = vmatpush1.msra.mxu0 %v2153
          %2526 = vmatprep.subr.mxu0 %v2162
          %2527 = vmatpush1.msra.mxu0 %v2161
          %2528 = vmatprep.subr.mxu0 %v2170
          %2529 = vmatpush1.msra.mxu0 %v2169
          %2530 = vmatprep.subr.mxu0 %v2178
          %2531 = vmatpush1.msra.mxu0 %v2177
          %2532 = vmatprep.subr.mxu0 %v2186
          %2533 = vmatpush1.msra.mxu0 %v2185
          %2534 = vmatprep.subr.mxu0 %v2194
          %2535 = vmatpush1.msra.mxu0 %v2193
          %2536 = vmatprep.subr.mxu0 %v2202
          %2537 = vmatpush1.msra.mxu0 %v2201
          %2538 = vmatprep.subr.mxu0 %v2210
          %2539 = vmatpush1.msra.mxu0 %v2209
          %2540 = vmatprep.subr.mxu0 %v2218
          %2541 = vmatpush1.msra.mxu0 %v2217
          %2542 = vmatprep.mubr.f32.mxu0 %v1710
          %2543 = vmatmul.mubr.f32.gmra.mrb[0].mxu0 %v1709
          %v2544 = vpop.f32.mrb[0].mxu0
          %v2545 = vadd.f32 %v2474, %v2544
          %v2546 = vpop.f32.mrb[0].mxu0
          %v2547 = vadd.f32 %v2476, %v2546
          %2548 = vdwg.mxu0
          %2549 = vmatprep.subr.mxu0 %v1716
          %2550 = vmatpush1.msra.mxu0 %v1715
          %2551 = vmatprep.subr.mxu0 %v1724
          %2552 = vmatpush1.msra.mxu0 %v1723
          %2553 = vmatprep.subr.mxu0 %v1732
          %2554 = vmatpush1.msra.mxu0 %v1731
          %2555 = vmatprep.subr.mxu0 %v1740
          %2556 = vmatpush1.msra.mxu0 %v1739
          %2557 = vmatprep.subr.mxu0 %v1748
          %2558 = vmatpush1.msra.mxu0 %v1747
          %2559 = vmatprep.subr.mxu0 %v1756
          %2560 = vmatpush1.msra.mxu0 %v1755
          %2561 = vmatprep.subr.mxu0 %v1764
          %2562 = vmatpush1.msra.mxu0 %v1763
          %2563 = vmatprep.subr.mxu0 %v1772
          %2564 = vmatpush1.msra.mxu0 %v1771
          %2565 = vmatprep.subr.mxu0 %v1780
          %2566 = vmatpush1.msra.mxu0 %v1779
          %2567 = vmatprep.subr.mxu0 %v1788
          %2568 = vmatpush1.msra.mxu0 %v1787
          %2569 = vmatprep.subr.mxu0 %v1796
          %2570 = vmatpush1.msra.mxu0 %v1795
          %2571 = vmatprep.subr.mxu0 %v1804
          %2572 = vmatpush1.msra.mxu0 %v1803
          %2573 = vmatprep.subr.mxu0 %v1812
          %2574 = vmatpush1.msra.mxu0 %v1811
          %2575 = vmatprep.subr.mxu0 %v1820
          %2576 = vmatpush1.msra.mxu0 %v1819
          %2577 = vmatprep.subr.mxu0 %v1828
          %2578 = vmatpush1.msra.mxu0 %v1827
          %2579 = vmatprep.subr.mxu0 %v1836
          %2580 = vmatpush1.msra.mxu0 %v1835
          %2581 = vmatprep.subr.mxu0 %v1844
          %2582 = vmatpush1.msra.mxu0 %v1843
          %2583 = vmatprep.subr.mxu0 %v1852
          %2584 = vmatpush1.msra.mxu0 %v1851
          %2585 = vmatprep.subr.mxu0 %v1860
          %2586 = vmatpush1.msra.mxu0 %v1859
          %2587 = vmatprep.subr.mxu0 %v1868
          %2588 = vmatpush1.msra.mxu0 %v1867
          %2589 = vmatprep.subr.mxu0 %v1876
          %2590 = vmatpush1.msra.mxu0 %v1875
          %2591 = vmatprep.subr.mxu0 %v1884
          %2592 = vmatpush1.msra.mxu0 %v1883
          %2593 = vmatprep.subr.mxu0 %v1892
          %2594 = vmatpush1.msra.mxu0 %v1891
          %2595 = vmatprep.subr.mxu0 %v1900
          %2596 = vmatpush1.msra.mxu0 %v1899
          %2597 = vmatprep.subr.mxu0 %v1908
          %2598 = vmatpush1.msra.mxu0 %v1907
          %2599 = vmatprep.subr.mxu0 %v1916
          %2600 = vmatpush1.msra.mxu0 %v1915
          %2601 = vmatprep.subr.mxu0 %v1924
          %2602 = vmatpush1.msra.mxu0 %v1923
          %2603 = vmatprep.subr.mxu0 %v1932
          %2604 = vmatpush1.msra.mxu0 %v1931
          %2605 = vmatprep.subr.mxu0 %v1940
          %2606 = vmatpush1.msra.mxu0 %v1939
          %2607 = vmatprep.subr.mxu0 %v1948
          %2608 = vmatpush1.msra.mxu0 %v1947
          %2609 = vmatprep.subr.mxu0 %v1956
          %2610 = vmatpush1.msra.mxu0 %v1955
          %2611 = vmatprep.subr.mxu0 %v1964
          %2612 = vmatpush1.msra.mxu0 %v1963
          %2613 = vmatprep.mubr.f32.mxu0 %v1708
          %2614 = vmatmul.mubr.f32.gmra.mrb[0].mxu0 %v1707
          %v2615 = vpop.f32.mrb[0].mxu0
          %v2616 = vadd.f32 %v2244, %v2615
          %v2617 = vpop.f32.mrb[0].mxu0
          %v2618 = vadd.f32 %v2248, %v2617
          %2619 = vdwg.mxu0
          %2620 = vmatprep.subr.mxu0 %v1972
          %2621 = vmatpush1.msra.mxu0 %v1971
          %2622 = vmatprep.subr.mxu0 %v1980
          %2623 = vmatpush1.msra.mxu0 %v1979
          %2624 = vmatprep.subr.mxu0 %v1988
          %2625 = vmatpush1.msra.mxu0 %v1987
          %2626 = vmatprep.subr.mxu0 %v1996
          %2627 = vmatpush1.msra.mxu0 %v1995
          %2628 = vmatprep.subr.mxu0 %v2004
          %2629 = vmatpush1.msra.mxu0 %v2003
          %2630 = vmatprep.subr.mxu0 %v2012
          %2631 = vmatpush1.msra.mxu0 %v2011
          %2632 = vmatprep.subr.mxu0 %v2020
          %2633 = vmatpush1.msra.mxu0 %v2019
          %2634 = vmatprep.subr.mxu0 %v2028
          %2635 = vmatpush1.msra.mxu0 %v2027
          %2636 = vmatprep.subr.mxu0 %v2036
          %2637 = vmatpush1.msra.mxu0 %v2035
          %2638 = vmatprep.subr.mxu0 %v2044
          %2639 = vmatpush1.msra.mxu0 %v2043
          %2640 = vmatprep.subr.mxu0 %v2052
          %2641 = vmatpush1.msra.mxu0 %v2051
          %2642 = vmatprep.subr.mxu0 %v2060
          %2643 = vmatpush1.msra.mxu0 %v2059
          %2644 = vmatprep.subr.mxu0 %v2068
          %2645 = vmatpush1.msra.mxu0 %v2067
          %2646 = vmatprep.subr.mxu0 %v2076
          %2647 = vmatpush1.msra.mxu0 %v2075
          %2648 = vmatprep.subr.mxu0 %v2084
          %2649 = vmatpush1.msra.mxu0 %v2083
          %2650 = vmatprep.subr.mxu0 %v2092
          %2651 = vmatpush1.msra.mxu0 %v2091
          %2652 = vmatprep.subr.mxu0 %v2100
          %2653 = vmatpush1.msra.mxu0 %v2099
          %2654 = vmatprep.subr.mxu0 %v2108
          %2655 = vmatpush1.msra.mxu0 %v2107
          %2656 = vmatprep.subr.mxu0 %v2116
          %2657 = vmatpush1.msra.mxu0 %v2115
          %2658 = vmatprep.subr.mxu0 %v2124
          %2659 = vmatpush1.msra.mxu0 %v2123
          %2660 = vmatprep.subr.mxu0 %v2132
          %2661 = vmatpush1.msra.mxu0 %v2131
          %2662 = vmatprep.subr.mxu0 %v2140
          %2663 = vmatpush1.msra.mxu0 %v2139
          %2664 = vmatprep.subr.mxu0 %v2148
          %2665 = vmatpush1.msra.mxu0 %v2147
          %2666 = vmatprep.subr.mxu0 %v2156
          %2667 = vmatpush1.msra.mxu0 %v2155
          %2668 = vmatprep.subr.mxu0 %v2164
          %2669 = vmatpush1.msra.mxu0 %v2163
          %2670 = vmatprep.subr.mxu0 %v2172
          %2671 = vmatpush1.msra.mxu0 %v2171
          %2672 = vmatprep.subr.mxu0 %v2180
          %2673 = vmatpush1.msra.mxu0 %v2179
          %2674 = vmatprep.subr.mxu0 %v2188
          %2675 = vmatpush1.msra.mxu0 %v2187
          %2676 = vmatprep.subr.mxu0 %v2196
          %2677 = vmatpush1.msra.mxu0 %v2195
          %2678 = vmatprep.subr.mxu0 %v2204
          %2679 = vmatpush1.msra.mxu0 %v2203
          %2680 = vmatprep.subr.mxu0 %v2212
          %2681 = vmatpush1.msra.mxu0 %v2211
          %2682 = vmatprep.subr.mxu0 %v2220
          %2683 = vmatpush1.msra.mxu0 %v2219
          %2684 = vmatprep.mubr.f32.mxu0 %v1710
          %2685 = vmatmul.mubr.f32.gmra.mrb[0].mxu0 %v1709
          %v2686 = vpop.f32.mrb[0].mxu0
          %v2687 = vadd.f32 %v2616, %v2686
          %v2688 = vpop.f32.mrb[0].mxu0
          %v2689 = vadd.f32 %v2618, %v2688
          %2690 = vdwg.mxu0
          %2691 = vmatprep.subr.mxu0 %v1718
          %2692 = vmatpush1.msra.mxu0 %v1717
          %2693 = vmatprep.subr.mxu0 %v1726
          %2694 = vmatpush1.msra.mxu0 %v1725
          %2695 = vmatprep.subr.mxu0 %v1734
          %2696 = vmatpush1.msra.mxu0 %v1733
          %2697 = vmatprep.subr.mxu0 %v1742
          %2698 = vmatpush1.msra.mxu0 %v1741
          %2699 = vmatprep.subr.mxu0 %v1750
          %2700 = vmatpush1.msra.mxu0 %v1749
          %2701 = vmatprep.subr.mxu0 %v1758
          %2702 = vmatpush1.msra.mxu0 %v1757
          %2703 = vmatprep.subr.mxu0 %v1766
          %2704 = vmatpush1.msra.mxu0 %v1765
          %2705 = vmatprep.subr.mxu0 %v1774
          %2706 = vmatpush1.msra.mxu0 %v1773
          %2707 = vmatprep.subr.mxu0 %v1782
          %2708 = vmatpush1.msra.mxu0 %v1781
          %2709 = vmatprep.subr.mxu0 %v1790
          %2710 = vmatpush1.msra.mxu0 %v1789
          %2711 = vmatprep.subr.mxu0 %v1798
          %2712 = vmatpush1.msra.mxu0 %v1797
          %2713 = vmatprep.subr.mxu0 %v1806
          %2714 = vmatpush1.msra.mxu0 %v1805
          %2715 = vmatprep.subr.mxu0 %v1814
          %2716 = vmatpush1.msra.mxu0 %v1813
          %2717 = vmatprep.subr.mxu0 %v1822
          %2718 = vmatpush1.msra.mxu0 %v1821
          %2719 = vmatprep.subr.mxu0 %v1830
          %2720 = vmatpush1.msra.mxu0 %v1829
          %2721 = vmatprep.subr.mxu0 %v1838
          %2722 = vmatpush1.msra.mxu0 %v1837
          %2723 = vmatprep.subr.mxu0 %v1846
          %2724 = vmatpush1.msra.mxu0 %v1845
          %2725 = vmatprep.subr.mxu0 %v1854
          %2726 = vmatpush1.msra.mxu0 %v1853
          %2727 = vmatprep.subr.mxu0 %v1862
          %2728 = vmatpush1.msra.mxu0 %v1861
          %2729 = vmatprep.subr.mxu0 %v1870
          %2730 = vmatpush1.msra.mxu0 %v1869
          %2731 = vmatprep.subr.mxu0 %v1878
          %2732 = vmatpush1.msra.mxu0 %v1877
          %2733 = vmatprep.subr.mxu0 %v1886
          %2734 = vmatpush1.msra.mxu0 %v1885
          %2735 = vmatprep.subr.mxu0 %v1894
          %2736 = vmatpush1.msra.mxu0 %v1893
          %2737 = vmatprep.subr.mxu0 %v1902
          %2738 = vmatpush1.msra.mxu0 %v1901
          %2739 = vmatprep.subr.mxu0 %v1910
          %2740 = vmatpush1.msra.mxu0 %v1909
          %2741 = vmatprep.subr.mxu0 %v1918
          %2742 = vmatpush1.msra.mxu0 %v1917
          %2743 = vmatprep.subr.mxu0 %v1926
          %2744 = vmatpush1.msra.mxu0 %v1925
          %2745 = vmatprep.subr.mxu0 %v1934
          %2746 = vmatpush1.msra.mxu0 %v1933
          %2747 = vmatprep.subr.mxu0 %v1942
          %2748 = vmatpush1.msra.mxu0 %v1941
          %2749 = vmatprep.subr.mxu0 %v1950
          %2750 = vmatpush1.msra.mxu0 %v1949
          %2751 = vmatprep.subr.mxu0 %v1958
          %2752 = vmatpush1.msra.mxu0 %v1957
          %2753 = vmatprep.subr.mxu0 %v1966
          %2754 = vmatpush1.msra.mxu0 %v1965
          %2755 = vmatprep.mubr.f32.mxu0 %v1708
          %2756 = vmatmul.mubr.f32.gmra.mrb[0].mxu0 %v1707
          %v2757 = vpop.f32.mrb[0].mxu0
          %v2758 = vadd.f32 %v2252, %v2757
          %v2759 = vpop.f32.mrb[0].mxu0
          %v2760 = vadd.f32 %v2256, %v2759
          %2761 = vdwg.mxu0
          %2762 = vmatprep.subr.mxu0 %v1974
          %2763 = vmatpush1.msra.mxu0 %v1973
          %2764 = vmatprep.subr.mxu0 %v1982
          %2765 = vmatpush1.msra.mxu0 %v1981
          %2766 = vmatprep.subr.mxu0 %v1990
          %2767 = vmatpush1.msra.mxu0 %v1989
          %2768 = vmatprep.subr.mxu0 %v1998
          %2769 = vmatpush1.msra.mxu0 %v1997
          %2770 = vmatprep.subr.mxu0 %v2006
          %2771 = vmatpush1.msra.mxu0 %v2005
          %2772 = vmatprep.subr.mxu0 %v2014
          %2773 = vmatpush1.msra.mxu0 %v2013
          %2774 = vmatprep.subr.mxu0 %v2022
          %2775 = vmatpush1.msra.mxu0 %v2021
          %2776 = vmatprep.subr.mxu0 %v2030
          %2777 = vmatpush1.msra.mxu0 %v2029
          %2778 = vmatprep.subr.mxu0 %v2038
          %2779 = vmatpush1.msra.mxu0 %v2037
          %2780 = vmatprep.subr.mxu0 %v2046
          %2781 = vmatpush1.msra.mxu0 %v2045
          %2782 = vmatprep.subr.mxu0 %v2054
          %2783 = vmatpush1.msra.mxu0 %v2053
          %2784 = vmatprep.subr.mxu0 %v2062
          %2785 = vmatpush1.msra.mxu0 %v2061
          %2786 = vmatprep.subr.mxu0 %v2070
          %2787 = vmatpush1.msra.mxu0 %v2069
          %2788 = vmatprep.subr.mxu0 %v2078
          %2789 = vmatpush1.msra.mxu0 %v2077
          %2790 = vmatprep.subr.mxu0 %v2086
          %2791 = vmatpush1.msra.mxu0 %v2085
          %2792 = vmatprep.subr.mxu0 %v2094
          %2793 = vmatpush1.msra.mxu0 %v2093
          %2794 = vmatprep.subr.mxu0 %v2102
          %2795 = vmatpush1.msra.mxu0 %v2101
          %2796 = vmatprep.subr.mxu0 %v2110
          %2797 = vmatpush1.msra.mxu0 %v2109
          %2798 = vmatprep.subr.mxu0 %v2118
          %2799 = vmatpush1.msra.mxu0 %v2117
          %2800 = vmatprep.subr.mxu0 %v2126
          %2801 = vmatpush1.msra.mxu0 %v2125
          %2802 = vmatprep.subr.mxu0 %v2134
          %2803 = vmatpush1.msra.mxu0 %v2133
          %2804 = vmatprep.subr.mxu0 %v2142
          %2805 = vmatpush1.msra.mxu0 %v2141
          %2806 = vmatprep.subr.mxu0 %v2150
          %2807 = vmatpush1.msra.mxu0 %v2149
          %2808 = vmatprep.subr.mxu0 %v2158
          %2809 = vmatpush1.msra.mxu0 %v2157
          %2810 = vmatprep.subr.mxu0 %v2166
          %2811 = vmatpush1.msra.mxu0 %v2165
          %2812 = vmatprep.subr.mxu0 %v2174
          %2813 = vmatpush1.msra.mxu0 %v2173
          %2814 = vmatprep.subr.mxu0 %v2182
          %2815 = vmatpush1.msra.mxu0 %v2181
          %2816 = vmatprep.subr.mxu0 %v2190
          %2817 = vmatpush1.msra.mxu0 %v2189
          %2818 = vmatprep.subr.mxu0 %v2198
          %2819 = vmatpush1.msra.mxu0 %v2197
          %2820 = vmatprep.subr.mxu0 %v2206
          %2821 = vmatpush1.msra.mxu0 %v2205
          %2822 = vmatprep.subr.mxu0 %v2214
          %2823 = vmatpush1.msra.mxu0 %v2213
          %2824 = vmatprep.subr.mxu0 %v2222
          %2825 = vmatpush1.msra.mxu0 %v2221
          %2826 = vmatprep.mubr.f32.mxu0 %v1710
          %2827 = vmatmul.mubr.f32.gmra.mrb[0].mxu0 %v1709
          %v2828 = vpop.f32.mrb[0].mxu0
          %v2829 = vadd.f32 %v2758, %v2828
          %v2830 = vpop.f32.mrb[0].mxu0
          %v2831 = vadd.f32 %v2760, %v2830
          %2832 = vdwg.mxu0
          %v2833 = vld [vmem:[#allocation23] sm:$0xff]
          %v2834 = vld [vmem:[#allocation25] sm:$0xff]
          %v2835 = vsel %vm1091, %v2403, 0.0
          %v2836 = vrot.slane %v2835, 4
          %v2837 = vadd.f32 %v2835, %v2836
          %v2838 = vrot.slane %v2837, 2
          %v2839 = vadd.f32 %v2837, %v2838
          %v2840 = vrot.slane %v2839, 1
          %v2841 = vadd.f32 %v2839, %v2840
          %v2842 = vsel %vm1091, %v2405, 0.0
          %v2843 = vrot.slane %v2842, 4
          %v2844 = vadd.f32 %v2842, %v2843
          %v2845 = vrot.slane %v2844, 2
          %v2846 = vadd.f32 %v2844, %v2845
          %v2847 = vrot.slane %v2846, 1
          %v2848 = vadd.f32 %v2846, %v2847
          %v2849 = vsel %vm1091, %v2545, 0.0
          %v2850 = vrot.slane %v2849, 4
          %v2851 = vadd.f32 %v2849, %v2850
          %v2852 = vrot.slane %v2851, 2
          %v2853 = vadd.f32 %v2851, %v2852
          %v2854 = vrot.slane %v2853, 1
          %v2855 = vadd.f32 %v2853, %v2854
          %v2856 = vsel %vm1091, %v2547, 0.0
          %v2857 = vrot.slane %v2856, 4
          %v2858 = vadd.f32 %v2856, %v2857
          %v2859 = vrot.slane %v2858, 2
          %v2860 = vadd.f32 %v2858, %v2859
          %v2861 = vrot.slane %v2860, 1
          %v2862 = vadd.f32 %v2860, %v2861
          %v2863 = vsel %vm1091, %v2687, 0.0
          %v2864 = vrot.slane %v2863, 4
          %v2865 = vadd.f32 %v2863, %v2864
          %v2866 = vrot.slane %v2865, 2
          %v2867 = vadd.f32 %v2865, %v2866
          %v2868 = vrot.slane %v2867, 1
          %v2869 = vadd.f32 %v2867, %v2868
          %v2870 = vsel %vm1091, %v2689, 0.0
          %v2871 = vrot.slane %v2870, 4
          %v2872 = vadd.f32 %v2870, %v2871
          %v2873 = vrot.slane %v2872, 2
          %v2874 = vadd.f32 %v2872, %v2873
          %v2875 = vrot.slane %v2874, 1
          %v2876 = vadd.f32 %v2874, %v2875
          %v2877 = vsel %vm1091, %v2829, 0.0
          %v2878 = vrot.slane %v2877, 4
          %v2879 = vadd.f32 %v2877, %v2878
          %v2880 = vrot.slane %v2879, 2
          %v2881 = vadd.f32 %v2879, %v2880
          %v2882 = vrot.slane %v2881, 1
          %v2883 = vadd.f32 %v2881, %v2882
          %v2884 = vsel %vm1091, %v2831, 0.0
          %v2885 = vrot.slane %v2884, 4
          %v2886 = vadd.f32 %v2884, %v2885
          %v2887 = vrot.slane %v2886, 2
          %v2888 = vadd.f32 %v2886, %v2887
          %v2889 = vrot.slane %v2888, 1
          %v2890 = vadd.f32 %v2888, %v2889
          %v2891 = vmul.f32 %v2841, %v1106
          %v2892 = vmul.f32 %v2848, %v1106
          %v2893 = vmul.f32 %v2855, %v1106
          %v2894 = vmul.f32 %v2862, %v1106
          %v2895 = vmul.f32 %v2869, %v1106
          %v2896 = vmul.f32 %v2876, %v1106
          %v2897 = vmul.f32 %v2883, %v1106
          %v2898 = vmul.f32 %v2890, %v1106
          %v2899 = vmul.f32 %v2403, %v2403
          %v2900 = vmul.f32 %v2405, %v2405
          %v2901 = vmul.f32 %v2545, %v2545
          %v2902 = vmul.f32 %v2547, %v2547
          %v2903 = vmul.f32 %v2687, %v2687
          %v2904 = vmul.f32 %v2689, %v2689
          %v2905 = vmul.f32 %v2829, %v2829
          %v2906 = vmul.f32 %v2831, %v2831
          %v2907 = vsel %vm1091, %v2899, 0.0
          %v2908 = vrot.slane %v2907, 4
          %v2909 = vadd.f32 %v2907, %v2908
          %v2910 = vrot.slane %v2909, 2
          %v2911 = vadd.f32 %v2909, %v2910
          %v2912 = vrot.slane %v2911, 1
          %v2913 = vadd.f32 %v2911, %v2912
          %v2914 = vsel %vm1091, %v2900, 0.0
          %v2915 = vrot.slane %v2914, 4
          %v2916 = vadd.f32 %v2914, %v2915
          %v2917 = vrot.slane %v2916, 2
          %v2918 = vadd.f32 %v2916, %v2917
          %v2919 = vrot.slane %v2918, 1
          %v2920 = vadd.f32 %v2918, %v2919
          %v2921 = vsel %vm1091, %v2901, 0.0
          %v2922 = vrot.slane %v2921, 4
          %v2923 = vadd.f32 %v2921, %v2922
          %v2924 = vrot.slane %v2923, 2
          %v2925 = vadd.f32 %v2923, %v2924
          %v2926 = vrot.slane %v2925, 1
          %v2927 = vadd.f32 %v2925, %v2926
          %v2928 = vsel %vm1091, %v2902, 0.0
          %v2929 = vrot.slane %v2928, 4
          %v2930 = vadd.f32 %v2928, %v2929
          %v2931 = vrot.slane %v2930, 2
          %v2932 = vadd.f32 %v2930, %v2931
          %v2933 = vrot.slane %v2932, 1
          %v2934 = vadd.f32 %v2932, %v2933
          %v2935 = vsel %vm1091, %v2903, 0.0
          %v2936 = vrot.slane %v2935, 4
          %v2937 = vadd.f32 %v2935, %v2936
          %v2938 = vrot.slane %v2937, 2
          %v2939 = vadd.f32 %v2937, %v2938
          %v2940 = vrot.slane %v2939, 1
          %v2941 = vadd.f32 %v2939, %v2940
          %v2942 = vsel %vm1091, %v2904, 0.0
          %v2943 = vrot.slane %v2942, 4
          %v2944 = vadd.f32 %v2942, %v2943
          %v2945 = vrot.slane %v2944, 2
          %v2946 = vadd.f32 %v2944, %v2945
          %v2947 = vrot.slane %v2946, 1
          %v2948 = vadd.f32 %v2946, %v2947
          %v2949 = vsel %vm1091, %v2905, 0.0
          %v2950 = vrot.slane %v2949, 4
          %v2951 = vadd.f32 %v2949, %v2950
          %v2952 = vrot.slane %v2951, 2
          %v2953 = vadd.f32 %v2951, %v2952
          %v2954 = vrot.slane %v2953, 1
          %v2955 = vadd.f32 %v2953, %v2954
          %v2956 = vsel %vm1091, %v2906, 0.0
          %v2957 = vrot.slane %v2956, 4
          %v2958 = vadd.f32 %v2956, %v2957
          %v2959 = vrot.slane %v2958, 2
          %v2960 = vadd.f32 %v2958, %v2959
          %v2961 = vrot.slane %v2960, 1
          %v2962 = vadd.f32 %v2960, %v2961
          %v2963 = vmul.f32 %v2913, %v1106
          %v2964 = vmul.f32 %v2920, %v1106
          %v2965 = vmul.f32 %v2927, %v1106
          %v2966 = vmul.f32 %v2934, %v1106
          %v2967 = vmul.f32 %v2941, %v1106
          %v2968 = vmul.f32 %v2948, %v1106
          %v2969 = vmul.f32 %v2955, %v1106
          %v2970 = vmul.f32 %v2962, %v1106
          %v2971 = vmul.f32 %v2891, %v2891
          %v2972 = vmul.f32 %v2892, %v2892
          %v2973 = vmul.f32 %v2893, %v2893
          %v2974 = vmul.f32 %v2894, %v2894
          %v2975 = vmul.f32 %v2895, %v2895
          %v2976 = vmul.f32 %v2896, %v2896
          %v2977 = vmul.f32 %v2897, %v2897
          %v2978 = vmul.f32 %v2898, %v2898
          %v2979 = vsub.f32 %v2963, %v2971
          %v2980 = vsub.f32 %v2964, %v2972
          %v2981 = vsub.f32 %v2965, %v2973
          %v2982 = vsub.f32 %v2966, %v2974
          %v2983 = vsub.f32 %v2967, %v2975
          %v2984 = vsub.f32 %v2968, %v2976
          %v2985 = vsub.f32 %v2969, %v2977
          %v2986 = vsub.f32 %v2970, %v2978
          %v2987 = vadd.f32 %v2979, 0.8
          %v2988 = vadd.f32 %v2980, 0.8
          %v2989 = vadd.f32 %v2981, 0.8
          %v2990 = vadd.f32 %v2982, 0.8
          %v2991 = vadd.f32 %v2983, 0.8
          %v2992 = vadd.f32 %v2984, 0.8
          %v2993 = vadd.f32 %v2985, 0.8
          %v2994 = vadd.f32 %v2986, 0.8
          %v2995 = vrsqrt.pop %v2987
          %v2996 = vrsqrt.pop %v2988
          %v2997 = vrsqrt.pop %v2989
          %v2998 = vrsqrt.pop %v2990
          %v2999 = vrsqrt.pop %v2991
          %v3000 = vrsqrt.pop %v2992
          %v3001 = vrsqrt.pop %v2993
          %v3002 = vrsqrt.pop %v2994
          %v3011 = vcombine.low %v2995, %v2996
          %v3012 = vcombine.low %v2997, %v2998
          %v3013 = vcombine.low %v2999, %v3000
          %v3014 = vcombine.low %v3001, %v3002
          %v3016 = vunpack.c.l.s4 1966171168
          %v3017 = vunpack.c.0.s8 %v3016
          %v3018 = vlaneseq
          %v3019 = vshrl.u32 %v3018, 7
          %v3020 = vsub.s32 %v3017, %v3019
          %v3021 = vrot.slane %v3011, %v3020
          %v3023 = vunpack.c.l.s4 1966171168
          %v3024 = vunpack.c.0.s8 %v3023
          %v3025 = vlaneseq
          %v3026 = vshrl.u32 %v3025, 7
          %v3027 = vsub.s32 %v3024, %v3026
          %v3028 = vrot.slane %v3012, %v3027
          %v3030 = vunpack.c.l.s4 1966171168
          %v3031 = vunpack.c.0.s8 %v3030
          %v3032 = vlaneseq
          %v3033 = vshrl.u32 %v3032, 7
          %v3034 = vsub.s32 %v3031, %v3033
          %v3035 = vrot.slane %v3013, %v3034
          %v3037 = vunpack.c.l.s4 1966171168
          %v3038 = vunpack.c.0.s8 %v3037
          %v3039 = vlaneseq
          %v3040 = vshrl.u32 %v3039, 7
          %v3041 = vsub.s32 %v3038, %v3040
          %v3042 = vrot.slane %v3014, %v3041
          %v3043 = vcombine.low %v3021, %v3028
          %v3044 = vcombine.low %v3035, %v3042
          %v3046 = vunpack.c.l.s4 1966171168
          %v3047 = vunpack.c.0.s8 %v3046
          %v3048 = vlaneseq
          %v3049 = vshrl.u32 %v3048, 7
          %v3050 = vsub.s32 %v3047, %v3049
          %v3051 = vrot.slane %v3043, %v3050
          %v3053 = vunpack.c.l.s4 1966171168
          %v3054 = vunpack.c.0.s8 %v3053
          %v3055 = vlaneseq
          %v3056 = vshrl.u32 %v3055, 7
          %v3057 = vsub.s32 %v3054, %v3056
          %v3058 = vrot.slane %v3044, %v3057
          %v3059 = vcombine.low %v3051, %v3058
          %v3061 = vmul.f32 %v2833, %v3059
          %v3063 = vlaneseq
          %v3064 = vshrl.u32 %v3063, 7
          %v3065 = vsub.s32 0, %v3064
          %v3066 = vrot.slane %v3061, %v3065
          %v3067 = vlaneseq
          %v3068 = vshrl.u32 %v3067, 7
          %v3069 = vsub.s32 1, %v3068
          %v3070 = vrot.slane %v3061, %v3069
          %v3071 = vlaneseq
          %v3072 = vshrl.u32 %v3071, 7
          %v3073 = vsub.s32 2, %v3072
          %v3074 = vrot.slane %v3061, %v3073
          %v3075 = vlaneseq
          %v3076 = vshrl.u32 %v3075, 7
          %v3077 = vsub.s32 3, %v3076
          %v3078 = vrot.slane %v3061, %v3077
          %v3079 = vlaneseq
          %v3080 = vshrl.u32 %v3079, 7
          %v3081 = vsub.s32 4, %v3080
          %v3082 = vrot.slane %v3061, %v3081
          %v3083 = vlaneseq
          %v3084 = vshrl.u32 %v3083, 7
          %v3085 = vsub.s32 5, %v3084
          %v3086 = vrot.slane %v3061, %v3085
          %v3087 = vlaneseq
          %v3088 = vshrl.u32 %v3087, 7
          %v3089 = vsub.s32 6, %v3088
          %v3090 = vrot.slane %v3061, %v3089
          %v3091 = vlaneseq
          %v3092 = vshrl.u32 %v3091, 7
          %v3093 = vsub.s32 7, %v3092
          %v3094 = vrot.slane %v3061, %v3093
          %v3103 = vmul.f32 %v2403, %v3066
          %v3104 = vmul.f32 %v2405, %v3070
          %v3105 = vmul.f32 %v2545, %v3074
          %v3106 = vmul.f32 %v2547, %v3078
          %v3107 = vmul.f32 %v2687, %v3082
          %v3108 = vmul.f32 %v2689, %v3086
          %v3109 = vmul.f32 %v2829, %v3090
          %v3110 = vmul.f32 %v2831, %v3094
          %v3111 = vmul.f32 %v2891, %v3066
          %v3112 = vmul.f32 %v2892, %v3070
          %v3113 = vmul.f32 %v2893, %v3074
          %v3114 = vmul.f32 %v2894, %v3078
          %v3115 = vmul.f32 %v2895, %v3082
          %v3116 = vmul.f32 %v2896, %v3086
          %v3117 = vmul.f32 %v2897, %v3090
          %v3118 = vmul.f32 %v2898, %v3094
          %v3127 = vcombine.low %v3111, %v3112
          %v3128 = vcombine.low %v3113, %v3114
          %v3129 = vcombine.low %v3115, %v3116
          %v3130 = vcombine.low %v3117, %v3118
          %v3132 = vunpack.c.l.s4 1966171168
          %v3133 = vunpack.c.0.s8 %v3132
          %v3134 = vlaneseq
          %v3135 = vshrl.u32 %v3134, 7
          %v3136 = vsub.s32 %v3133, %v3135
          %v3137 = vrot.slane %v3127, %v3136
          %v3139 = vunpack.c.l.s4 1966171168
          %v3140 = vunpack.c.0.s8 %v3139
          %v3141 = vlaneseq
          %v3142 = vshrl.u32 %v3141, 7
          %v3143 = vsub.s32 %v3140, %v3142
          %v3144 = vrot.slane %v3128, %v3143
          %v3146 = vunpack.c.l.s4 1966171168
          %v3147 = vunpack.c.0.s8 %v3146
          %v3148 = vlaneseq
          %v3149 = vshrl.u32 %v3148, 7
          %v3150 = vsub.s32 %v3147, %v3149
          %v3151 = vrot.slane %v3129, %v3150
          %v3153 = vunpack.c.l.s4 1966171168
          %v3154 = vunpack.c.0.s8 %v3153
          %v3155 = vlaneseq
          %v3156 = vshrl.u32 %v3155, 7
          %v3157 = vsub.s32 %v3154, %v3156
          %v3158 = vrot.slane %v3130, %v3157
          %v3159 = vcombine.low %v3137, %v3144
          %v3160 = vcombine.low %v3151, %v3158
          %v3162 = vunpack.c.l.s4 1966171168
          %v3163 = vunpack.c.0.s8 %v3162
          %v3164 = vlaneseq
          %v3165 = vshrl.u32 %v3164, 7
          %v3166 = vsub.s32 %v3163, %v3165
          %v3167 = vrot.slane %v3159, %v3166
          %v3169 = vunpack.c.l.s4 1966171168
          %v3170 = vunpack.c.0.s8 %v3169
          %v3171 = vlaneseq
          %v3172 = vshrl.u32 %v3171, 7
          %v3173 = vsub.s32 %v3170, %v3172
          %v3174 = vrot.slane %v3160, %v3173
          %v3175 = vcombine.low %v3167, %v3174
          %v3177 = vsub.f32 %v2834, %v3175
          %v3179 = vlaneseq
          %v3180 = vshrl.u32 %v3179, 7
          %v3181 = vsub.s32 0, %v3180
          %v3182 = vrot.slane %v3177, %v3181
          %v3183 = vlaneseq
          %v3184 = vshrl.u32 %v3183, 7
          %v3185 = vsub.s32 1, %v3184
          %v3186 = vrot.slane %v3177, %v3185
          %v3187 = vlaneseq
          %v3188 = vshrl.u32 %v3187, 7
          %v3189 = vsub.s32 2, %v3188
          %v3190 = vrot.slane %v3177, %v3189
          %v3191 = vlaneseq
          %v3192 = vshrl.u32 %v3191, 7
          %v3193 = vsub.s32 3, %v3192
          %v3194 = vrot.slane %v3177, %v3193
          %v3195 = vlaneseq
          %v3196 = vshrl.u32 %v3195, 7
          %v3197 = vsub.s32 4, %v3196
          %v3198 = vrot.slane %v3177, %v3197
          %v3199 = vlaneseq
          %v3200 = vshrl.u32 %v3199, 7
          %v3201 = vsub.s32 5, %v3200
          %v3202 = vrot.slane %v3177, %v3201
          %v3203 = vlaneseq
          %v3204 = vshrl.u32 %v3203, 7
          %v3205 = vsub.s32 6, %v3204
          %v3206 = vrot.slane %v3177, %v3205
          %v3207 = vlaneseq
          %v3208 = vshrl.u32 %v3207, 7
          %v3209 = vsub.s32 7, %v3208
          %v3210 = vrot.slane %v3177, %v3209
          %v3219 = vadd.f32 %v3103, %v3182
          %v3220 = vadd.f32 %v3104, %v3186
          %v3221 = vadd.f32 %v3105, %v3190
          %v3222 = vadd.f32 %v3106, %v3194
          %v3223 = vadd.f32 %v3107, %v3198
          %v3224 = vadd.f32 %v3108, %v3202
          %v3225 = vadd.f32 %v3109, %v3206
          %v3226 = vadd.f32 %v3110, %v3210
          %vm3227 = vcmp.ge.f32.partialorder %v3219, 0.0
          %vm3228 = vcmp.ge.f32.partialorder %v3220, 0.0
          %vm3229 = vcmp.ge.f32.partialorder %v3221, 0.0
          %vm3230 = vcmp.ge.f32.partialorder %v3222, 0.0
          %vm3231 = vcmp.ge.f32.partialorder %v3223, 0.0
          %vm3232 = vcmp.ge.f32.partialorder %v3224, 0.0
          %vm3233 = vcmp.ge.f32.partialorder %v3225, 0.0
          %vm3234 = vcmp.ge.f32.partialorder %v3226, 0.0
          %v3235 = vmul.f32 %v3219, 0.2
          %v3236 = vmul.f32 %v3220, 0.2
          %v3237 = vmul.f32 %v3221, 0.2
          %v3238 = vmul.f32 %v3222, 0.2
          %v3239 = vmul.f32 %v3223, 0.2
          %v3240 = vmul.f32 %v3224, 0.2
          %v3241 = vmul.f32 %v3225, 0.2
          %v3242 = vmul.f32 %v3226, 0.2
          %v3243 = vsel %vm3227, %v3219, %v3235
          %v3244 = vsel %vm3228, %v3220, %v3236
          %v3245 = vsel %vm3229, %v3221, %v3237
          %v3246 = vsel %vm3230, %v3222, %v3238
          %v3247 = vsel %vm3231, %v3223, %v3239
          %v3248 = vsel %vm3232, %v3224, %v3240
          %v3249 = vsel %vm3233, %v3225, %v3241
          %v3250 = vsel %vm3234, %v3226, %v3242
          %v3251 = vpack.c.bf16 %v3243, %v3243
          %v3252 = vpack.c.bf16 %v3244, %v3244
          %v3253 = vpack.c.bf16 %v3245, %v3245
          %v3254 = vpack.c.bf16 %v3246, %v3246
          %v3255 = vpack.c.bf16 %v3247, %v3247
          %v3256 = vpack.c.bf16 %v3248, %v3248
          %v3257 = vpack.c.bf16 %v3249, %v3249
          %v3258 = vpack.c.bf16 %v3250, %v3250
          %v3267 = vcombine.low %v3251, %v3252
          %v3268 = vcombine.low %v3253, %v3254
          %v3269 = vcombine.low %v3255, %v3256
          %v3270 = vcombine.low %v3257, %v3258
          %v3272 = vunpack.c.l.s4 1966171168
          %v3273 = vunpack.c.0.s8 %v3272
          %v3274 = vlaneseq
          %v3275 = vshrl.u32 %v3274, 7
          %v3276 = vsub.s32 %v3273, %v3275
          %v3277 = vrot.slane %v3267, %v3276
          %v3279 = vunpack.c.l.s4 1966171168
          %v3280 = vunpack.c.0.s8 %v3279
          %v3281 = vlaneseq
          %v3282 = vshrl.u32 %v3281, 7
          %v3283 = vsub.s32 %v3280, %v3282
          %v3284 = vrot.slane %v3268, %v3283
          %v3286 = vunpack.c.l.s4 1966171168
          %v3287 = vunpack.c.0.s8 %v3286
          %v3288 = vlaneseq
          %v3289 = vshrl.u32 %v3288, 7
          %v3290 = vsub.s32 %v3287, %v3289
          %v3291 = vrot.slane %v3269, %v3290
          %v3293 = vunpack.c.l.s4 1966171168
          %v3294 = vunpack.c.0.s8 %v3293
          %v3295 = vlaneseq
          %v3296 = vshrl.u32 %v3295, 7
          %v3297 = vsub.s32 %v3294, %v3296
          %v3298 = vrot.slane %v3270, %v3297
          %v3299 = vcombine.low %v3277, %v3284
          %v3300 = vcombine.low %v3291, %v3298
          %v3302 = vunpack.c.l.s4 1966171168
          %v3303 = vunpack.c.0.s8 %v3302
          %v3304 = vlaneseq
          %v3305 = vshrl.u32 %v3304, 7
          %v3306 = vsub.s32 %v3303, %v3305
          %v3307 = vrot.slane %v3299, %v3306
          %v3309 = vunpack.c.l.s4 1966171168
          %v3310 = vunpack.c.0.s8 %v3309
          %v3311 = vlaneseq
          %v3312 = vshrl.u32 %v3311, 7
          %v3313 = vsub.s32 %v3310, %v3312
          %v3314 = vrot.slane %v3300, %v3313
          %v3315 = vcombine.low %v3307, %v3314
          %3317 = vst [vmem:[#allocation2] sm:$0xff] %v3315
        $region168: #{generator_forward.1} parent=91 // pred_fallthru
          _
        %v3318 = vld [vmem:[#allocation2] sm:$0xff]
        loop: start=0, step=1, limit=8
        $region169: #{generator_forward.1} parent=91 // loop_pre_header
          _
        $region170: #{generator_forward.1} parent=91 // loop_header
          %s3320 = sphi 0, %s3324
          %p3321 = scmp.ge.s32.totalorder %s3320, 8
        $region171: #{generator_forward.1} parent=91 // loop_header_branch
          %3323 = sbr.rel (%p3321) target = $region175
        $region172: #{generator_forward.1} parent=91 // loop_body
          %s3325 = smul.u32 %s3320, 1024
          %s3326 = sshra.s32 %s3325, 7
          %s3327 = sand.u32 %s3325, 127
          %s3328 = smul.addr %s3326, 8
          %s3329 = scalar_lea.vmem %s779, %s3328 [#allocation26]
          %v3330 = vld [vmem:[%s3329] sm:$0xff]
          %v3331 = vld [vmem:[%s3329 + $0x8] sm:$0xff]
          %v3332 = vld [vmem:[%s3329 + $0x10] sm:$0xff]
          %v3333 = vld [vmem:[%s3329 + $0x18] sm:$0xff]
          %v3334 = vld [vmem:[%s3329 + $0x20] sm:$0xff]
          %v3335 = vld [vmem:[%s3329 + $0x28] sm:$0xff]
          %v3336 = vld [vmem:[%s3329 + $0x30] sm:$0xff]
          %v3337 = vld [vmem:[%s3329 + $0x38] sm:$0xff]
          %v3338 = vld [vmem:[%s3329 + $0x200] sm:$0xff]
          %v3339 = vld [vmem:[%s3329 + $0x208] sm:$0xff]
          %v3340 = vld [vmem:[%s3329 + $0x210] sm:$0xff]
          %v3341 = vld [vmem:[%s3329 + $0x218] sm:$0xff]
          %v3342 = vld [vmem:[%s3329 + $0x220] sm:$0xff]
          %v3343 = vld [vmem:[%s3329 + $0x228] sm:$0xff]
          %v3344 = vld [vmem:[%s3329 + $0x230] sm:$0xff]
          %v3345 = vld [vmem:[%s3329 + $0x238] sm:$0xff]
          %v3346 = vld [vmem:[%s3329 + $0x400] sm:$0xff]
          %v3347 = vld [vmem:[%s3329 + $0x408] sm:$0xff]
          %v3348 = vld [vmem:[%s3329 + $0x410] sm:$0xff]
          %v3349 = vld [vmem:[%s3329 + $0x418] sm:$0xff]
          %v3350 = vld [vmem:[%s3329 + $0x420] sm:$0xff]
          %v3351 = vld [vmem:[%s3329 + $0x428] sm:$0xff]
          %v3352 = vld [vmem:[%s3329 + $0x430] sm:$0xff]
          %v3353 = vld [vmem:[%s3329 + $0x438] sm:$0xff]
          %v3354 = vld [vmem:[%s3329 + $0x600] sm:$0xff]
          %v3355 = vld [vmem:[%s3329 + $0x608] sm:$0xff]
          %v3356 = vld [vmem:[%s3329 + $0x610] sm:$0xff]
          %v3357 = vld [vmem:[%s3329 + $0x618] sm:$0xff]
          %v3358 = vld [vmem:[%s3329 + $0x620] sm:$0xff]
          %v3359 = vld [vmem:[%s3329 + $0x628] sm:$0xff]
          %v3360 = vld [vmem:[%s3329 + $0x630] sm:$0xff]
          %v3361 = vld [vmem:[%s3329 + $0x638] sm:$0xff]
          %v3362 = vld [vmem:[%s3329 + $0x800] sm:$0xff]
          %v3363 = vld [vmem:[%s3329 + $0x808] sm:$0xff]
          %v3364 = vld [vmem:[%s3329 + $0x810] sm:$0xff]
          %v3365 = vld [vmem:[%s3329 + $0x818] sm:$0xff]
          %v3366 = vld [vmem:[%s3329 + $0x820] sm:$0xff]
          %v3367 = vld [vmem:[%s3329 + $0x828] sm:$0xff]
          %v3368 = vld [vmem:[%s3329 + $0x830] sm:$0xff]
          %v3369 = vld [vmem:[%s3329 + $0x838] sm:$0xff]
          %v3370 = vld [vmem:[%s3329 + $0xa00] sm:$0xff]
          %v3371 = vld [vmem:[%s3329 + $0xa08] sm:$0xff]
          %v3372 = vld [vmem:[%s3329 + $0xa10] sm:$0xff]
          %v3373 = vld [vmem:[%s3329 + $0xa18] sm:$0xff]
          %v3374 = vld [vmem:[%s3329 + $0xa20] sm:$0xff]
          %v3375 = vld [vmem:[%s3329 + $0xa28] sm:$0xff]
          %v3376 = vld [vmem:[%s3329 + $0xa30] sm:$0xff]
          %v3377 = vld [vmem:[%s3329 + $0xa38] sm:$0xff]
          %v3378 = vld [vmem:[%s3329 + $0xc00] sm:$0xff]
          %v3379 = vld [vmem:[%s3329 + $0xc08] sm:$0xff]
          %v3380 = vld [vmem:[%s3329 + $0xc10] sm:$0xff]
          %v3381 = vld [vmem:[%s3329 + $0xc18] sm:$0xff]
          %v3382 = vld [vmem:[%s3329 + $0xc20] sm:$0xff]
          %v3383 = vld [vmem:[%s3329 + $0xc28] sm:$0xff]
          %v3384 = vld [vmem:[%s3329 + $0xc30] sm:$0xff]
          %v3385 = vld [vmem:[%s3329 + $0xc38] sm:$0xff]
          %v3386 = vld [vmem:[%s3329 + $0xe00] sm:$0xff]
          %v3387 = vld [vmem:[%s3329 + $0xe08] sm:$0xff]
          %v3388 = vld [vmem:[%s3329 + $0xe10] sm:$0xff]
          %v3389 = vld [vmem:[%s3329 + $0xe18] sm:$0xff]
          %v3390 = vld [vmem:[%s3329 + $0xe20] sm:$0xff]
          %v3391 = vld [vmem:[%s3329 + $0xe28] sm:$0xff]
          %v3392 = vld [vmem:[%s3329 + $0xe30] sm:$0xff]
          %v3393 = vld [vmem:[%s3329 + $0xe38] sm:$0xff]
          %v3394 = vld [vmem:[%s3329 + $0x1000] sm:$0xff]
          %v3395 = vld [vmem:[%s3329 + $0x1008] sm:$0xff]
          %v3396 = vld [vmem:[%s3329 + $0x1010] sm:$0xff]
          %v3397 = vld [vmem:[%s3329 + $0x1018] sm:$0xff]
          %v3398 = vld [vmem:[%s3329 + $0x1020] sm:$0xff]
          %v3399 = vld [vmem:[%s3329 + $0x1028] sm:$0xff]
          %v3400 = vld [vmem:[%s3329 + $0x1030] sm:$0xff]
          %v3401 = vld [vmem:[%s3329 + $0x1038] sm:$0xff]
          %v3402 = vld [vmem:[%s3329 + $0x1200] sm:$0xff]
          %v3403 = vld [vmem:[%s3329 + $0x1208] sm:$0xff]
          %v3404 = vld [vmem:[%s3329 + $0x1210] sm:$0xff]
          %v3405 = vld [vmem:[%s3329 + $0x1218] sm:$0xff]
          %v3406 = vld [vmem:[%s3329 + $0x1220] sm:$0xff]
          %v3407 = vld [vmem:[%s3329 + $0x1228] sm:$0xff]
          %v3408 = vld [vmem:[%s3329 + $0x1230] sm:$0xff]
          %v3409 = vld [vmem:[%s3329 + $0x1238] sm:$0xff]
          %v3410 = vld [vmem:[%s3329 + $0x1400] sm:$0xff]
          %v3411 = vld [vmem:[%s3329 + $0x1408] sm:$0xff]
          %v3412 = vld [vmem:[%s3329 + $0x1410] sm:$0xff]
          %v3413 = vld [vmem:[%s3329 + $0x1418] sm:$0xff]
          %v3414 = vld [vmem:[%s3329 + $0x1420] sm:$0xff]
          %v3415 = vld [vmem:[%s3329 + $0x1428] sm:$0xff]
          %v3416 = vld [vmem:[%s3329 + $0x1430] sm:$0xff]
          %v3417 = vld [vmem:[%s3329 + $0x1438] sm:$0xff]
          %v3418 = vld [vmem:[%s3329 + $0x1600] sm:$0xff]
          %v3419 = vld [vmem:[%s3329 + $0x1608] sm:$0xff]
          %v3420 = vld [vmem:[%s3329 + $0x1610] sm:$0xff]
          %v3421 = vld [vmem:[%s3329 + $0x1618] sm:$0xff]
          %v3422 = vld [vmem:[%s3329 + $0x1620] sm:$0xff]
          %v3423 = vld [vmem:[%s3329 + $0x1628] sm:$0xff]
          %v3424 = vld [vmem:[%s3329 + $0x1630] sm:$0xff]
          %v3425 = vld [vmem:[%s3329 + $0x1638] sm:$0xff]
          %v3426 = vld [vmem:[%s3329 + $0x1800] sm:$0xff]
          %v3427 = vld [vmem:[%s3329 + $0x1808] sm:$0xff]
          %v3428 = vld [vmem:[%s3329 + $0x1810] sm:$0xff]
          %v3429 = vld [vmem:[%s3329 + $0x1818] sm:$0xff]
          %v3430 = vld [vmem:[%s3329 + $0x1820] sm:$0xff]
          %v3431 = vld [vmem:[%s3329 + $0x1828] sm:$0xff]
          %v3432 = vld [vmem:[%s3329 + $0x1830] sm:$0xff]
          %v3433 = vld [vmem:[%s3329 + $0x1838] sm:$0xff]
          %v3434 = vld [vmem:[%s3329 + $0x1a00] sm:$0xff]
          %v3435 = vld [vmem:[%s3329 + $0x1a08] sm:$0xff]
          %v3436 = vld [vmem:[%s3329 + $0x1a10] sm:$0xff]
          %v3437 = vld [vmem:[%s3329 + $0x1a18] sm:$0xff]
          %v3438 = vld [vmem:[%s3329 + $0x1a20] sm:$0xff]
          %v3439 = vld [vmem:[%s3329 + $0x1a28] sm:$0xff]
          %v3440 = vld [vmem:[%s3329 + $0x1a30] sm:$0xff]
          %v3441 = vld [vmem:[%s3329 + $0x1a38] sm:$0xff]
          %v3442 = vld [vmem:[%s3329 + $0x1c00] sm:$0xff]
          %v3443 = vld [vmem:[%s3329 + $0x1c08] sm:$0xff]
          %v3444 = vld [vmem:[%s3329 + $0x1c10] sm:$0xff]
          %v3445 = vld [vmem:[%s3329 + $0x1c18] sm:$0xff]
          %v3446 = vld [vmem:[%s3329 + $0x1c20] sm:$0xff]
          %v3447 = vld [vmem:[%s3329 + $0x1c28] sm:$0xff]
          %v3448 = vld [vmem:[%s3329 + $0x1c30] sm:$0xff]
          %v3449 = vld [vmem:[%s3329 + $0x1c38] sm:$0xff]
          %v3450 = vld [vmem:[%s3329 + $0x1e00] sm:$0xff]
          %v3451 = vld [vmem:[%s3329 + $0x1e08] sm:$0xff]
          %v3452 = vld [vmem:[%s3329 + $0x1e10] sm:$0xff]
          %v3453 = vld [vmem:[%s3329 + $0x1e18] sm:$0xff]
          %v3454 = vld [vmem:[%s3329 + $0x1e20] sm:$0xff]
          %v3455 = vld [vmem:[%s3329 + $0x1e28] sm:$0xff]
          %v3456 = vld [vmem:[%s3329 + $0x1e30] sm:$0xff]
          %v3457 = vld [vmem:[%s3329 + $0x1e38] sm:$0xff]
          %v3458 = vld [vmem:[%s3329 + $0x2000] sm:$0xff]
          %v3459 = vld [vmem:[%s3329 + $0x2008] sm:$0xff]
          %v3460 = vld [vmem:[%s3329 + $0x2010] sm:$0xff]
          %v3461 = vld [vmem:[%s3329 + $0x2018] sm:$0xff]
          %v3462 = vld [vmem:[%s3329 + $0x2020] sm:$0xff]
          %v3463 = vld [vmem:[%s3329 + $0x2028] sm:$0xff]
          %v3464 = vld [vmem:[%s3329 + $0x2030] sm:$0xff]
          %v3465 = vld [vmem:[%s3329 + $0x2038] sm:$0xff]
          %v3466 = vld [vmem:[%s3329 + $0x2200] sm:$0xff]
          %v3467 = vld [vmem:[%s3329 + $0x2208] sm:$0xff]
          %v3468 = vld [vmem:[%s3329 + $0x2210] sm:$0xff]
          %v3469 = vld [vmem:[%s3329 + $0x2218] sm:$0xff]
          %v3470 = vld [vmem:[%s3329 + $0x2220] sm:$0xff]
          %v3471 = vld [vmem:[%s3329 + $0x2228] sm:$0xff]
          %v3472 = vld [vmem:[%s3329 + $0x2230] sm:$0xff]
          %v3473 = vld [vmem:[%s3329 + $0x2238] sm:$0xff]
          %v3474 = vld [vmem:[%s3329 + $0x2400] sm:$0xff]
          %v3475 = vld [vmem:[%s3329 + $0x2408] sm:$0xff]
          %v3476 = vld [vmem:[%s3329 + $0x2410] sm:$0xff]
          %v3477 = vld [vmem:[%s3329 + $0x2418] sm:$0xff]
          %v3478 = vld [vmem:[%s3329 + $0x2420] sm:$0xff]
          %v3479 = vld [vmem:[%s3329 + $0x2428] sm:$0xff]
          %v3480 = vld [vmem:[%s3329 + $0x2430] sm:$0xff]
          %v3481 = vld [vmem:[%s3329 + $0x2438] sm:$0xff]
          %v3482 = vld [vmem:[%s3329 + $0x2600] sm:$0xff]
          %v3483 = vld [vmem:[%s3329 + $0x2608] sm:$0xff]
          %v3484 = vld [vmem:[%s3329 + $0x2610] sm:$0xff]
          %v3485 = vld [vmem:[%s3329 + $0x2618] sm:$0xff]
          %v3486 = vld [vmem:[%s3329 + $0x2620] sm:$0xff]
          %v3487 = vld [vmem:[%s3329 + $0x2628] sm:$0xff]
          %v3488 = vld [vmem:[%s3329 + $0x2630] sm:$0xff]
          %v3489 = vld [vmem:[%s3329 + $0x2638] sm:$0xff]
          %v3490 = vld [vmem:[%s3329 + $0x2800] sm:$0xff]
          %v3491 = vld [vmem:[%s3329 + $0x2808] sm:$0xff]
          %v3492 = vld [vmem:[%s3329 + $0x2810] sm:$0xff]
          %v3493 = vld [vmem:[%s3329 + $0x2818] sm:$0xff]
          %v3494 = vld [vmem:[%s3329 + $0x2820] sm:$0xff]
          %v3495 = vld [vmem:[%s3329 + $0x2828] sm:$0xff]
          %v3496 = vld [vmem:[%s3329 + $0x2830] sm:$0xff]
          %v3497 = vld [vmem:[%s3329 + $0x2838] sm:$0xff]
          %v3498 = vld [vmem:[%s3329 + $0x2a00] sm:$0xff]
          %v3499 = vld [vmem:[%s3329 + $0x2a08] sm:$0xff]
          %v3500 = vld [vmem:[%s3329 + $0x2a10] sm:$0xff]
          %v3501 = vld [vmem:[%s3329 + $0x2a18] sm:$0xff]
          %v3502 = vld [vmem:[%s3329 + $0x2a20] sm:$0xff]
          %v3503 = vld [vmem:[%s3329 + $0x2a28] sm:$0xff]
          %v3504 = vld [vmem:[%s3329 + $0x2a30] sm:$0xff]
          %v3505 = vld [vmem:[%s3329 + $0x2a38] sm:$0xff]
          %v3506 = vld [vmem:[%s3329 + $0x2c00] sm:$0xff]
          %v3507 = vld [vmem:[%s3329 + $0x2c08] sm:$0xff]
          %v3508 = vld [vmem:[%s3329 + $0x2c10] sm:$0xff]
          %v3509 = vld [vmem:[%s3329 + $0x2c18] sm:$0xff]
          %v3510 = vld [vmem:[%s3329 + $0x2c20] sm:$0xff]
          %v3511 = vld [vmem:[%s3329 + $0x2c28] sm:$0xff]
          %v3512 = vld [vmem:[%s3329 + $0x2c30] sm:$0xff]
          %v3513 = vld [vmem:[%s3329 + $0x2c38] sm:$0xff]
          %v3514 = vld [vmem:[%s3329 + $0x2e00] sm:$0xff]
          %v3515 = vld [vmem:[%s3329 + $0x2e08] sm:$0xff]
          %v3516 = vld [vmem:[%s3329 + $0x2e10] sm:$0xff]
          %v3517 = vld [vmem:[%s3329 + $0x2e18] sm:$0xff]
          %v3518 = vld [vmem:[%s3329 + $0x2e20] sm:$0xff]
          %v3519 = vld [vmem:[%s3329 + $0x2e28] sm:$0xff]
          %v3520 = vld [vmem:[%s3329 + $0x2e30] sm:$0xff]
          %v3521 = vld [vmem:[%s3329 + $0x2e38] sm:$0xff]
          %v3522 = vld [vmem:[%s3329 + $0x3000] sm:$0xff]
          %v3523 = vld [vmem:[%s3329 + $0x3008] sm:$0xff]
          %v3524 = vld [vmem:[%s3329 + $0x3010] sm:$0xff]
          %v3525 = vld [vmem:[%s3329 + $0x3018] sm:$0xff]
          %v3526 = vld [vmem:[%s3329 + $0x3020] sm:$0xff]
          %v3527 = vld [vmem:[%s3329 + $0x3028] sm:$0xff]
          %v3528 = vld [vmem:[%s3329 + $0x3030] sm:$0xff]
          %v3529 = vld [vmem:[%s3329 + $0x3038] sm:$0xff]
          %v3530 = vld [vmem:[%s3329 + $0x3200] sm:$0xff]
          %v3531 = vld [vmem:[%s3329 + $0x3208] sm:$0xff]
          %v3532 = vld [vmem:[%s3329 + $0x3210] sm:$0xff]
          %v3533 = vld [vmem:[%s3329 + $0x3218] sm:$0xff]
          %v3534 = vld [vmem:[%s3329 + $0x3220] sm:$0xff]
          %v3535 = vld [vmem:[%s3329 + $0x3228] sm:$0xff]
          %v3536 = vld [vmem:[%s3329 + $0x3230] sm:$0xff]
          %v3537 = vld [vmem:[%s3329 + $0x3238] sm:$0xff]
          %v3538 = vld [vmem:[%s3329 + $0x3400] sm:$0xff]
          %v3539 = vld [vmem:[%s3329 + $0x3408] sm:$0xff]
          %v3540 = vld [vmem:[%s3329 + $0x3410] sm:$0xff]
          %v3541 = vld [vmem:[%s3329 + $0x3418] sm:$0xff]
          %v3542 = vld [vmem:[%s3329 + $0x3420] sm:$0xff]
          %v3543 = vld [vmem:[%s3329 + $0x3428] sm:$0xff]
          %v3544 = vld [vmem:[%s3329 + $0x3430] sm:$0xff]
          %v3545 = vld [vmem:[%s3329 + $0x3438] sm:$0xff]
          %v3546 = vld [vmem:[%s3329 + $0x3600] sm:$0xff]
          %v3547 = vld [vmem:[%s3329 + $0x3608] sm:$0xff]
          %v3548 = vld [vmem:[%s3329 + $0x3610] sm:$0xff]
          %v3549 = vld [vmem:[%s3329 + $0x3618] sm:$0xff]
          %v3550 = vld [vmem:[%s3329 + $0x3620] sm:$0xff]
          %v3551 = vld [vmem:[%s3329 + $0x3628] sm:$0xff]
          %v3552 = vld [vmem:[%s3329 + $0x3630] sm:$0xff]
          %v3553 = vld [vmem:[%s3329 + $0x3638] sm:$0xff]
          %v3554 = vld [vmem:[%s3329 + $0x3800] sm:$0xff]
          %v3555 = vld [vmem:[%s3329 + $0x3808] sm:$0xff]
          %v3556 = vld [vmem:[%s3329 + $0x3810] sm:$0xff]
          %v3557 = vld [vmem:[%s3329 + $0x3818] sm:$0xff]
          %v3558 = vld [vmem:[%s3329 + $0x3820] sm:$0xff]
          %v3559 = vld [vmem:[%s3329 + $0x3828] sm:$0xff]
          %v3560 = vld [vmem:[%s3329 + $0x3830] sm:$0xff]
          %v3561 = vld [vmem:[%s3329 + $0x3838] sm:$0xff]
          %v3562 = vld [vmem:[%s3329 + $0x3a00] sm:$0xff]
          %v3563 = vld [vmem:[%s3329 + $0x3a08] sm:$0xff]
          %v3564 = vld [vmem:[%s3329 + $0x3a10] sm:$0xff]
          %v3565 = vld [vmem:[%s3329 + $0x3a18] sm:$0xff]
          %v3566 = vld [vmem:[%s3329 + $0x3a20] sm:$0xff]
          %v3567 = vld [vmem:[%s3329 + $0x3a28] sm:$0xff]
          %v3568 = vld [vmem:[%s3329 + $0x3a30] sm:$0xff]
          %v3569 = vld [vmem:[%s3329 + $0x3a38] sm:$0xff]
          %v3570 = vld [vmem:[%s3329 + $0x3c00] sm:$0xff]
          %v3571 = vld [vmem:[%s3329 + $0x3c08] sm:$0xff]
          %v3572 = vld [vmem:[%s3329 + $0x3c10] sm:$0xff]
          %v3573 = vld [vmem:[%s3329 + $0x3c18] sm:$0xff]
          %v3574 = vld [vmem:[%s3329 + $0x3c20] sm:$0xff]
          %v3575 = vld [vmem:[%s3329 + $0x3c28] sm:$0xff]
          %v3576 = vld [vmem:[%s3329 + $0x3c30] sm:$0xff]
          %v3577 = vld [vmem:[%s3329 + $0x3c38] sm:$0xff]
          %v3578 = vld [vmem:[%s3329 + $0x3e00] sm:$0xff]
          %v3579 = vld [vmem:[%s3329 + $0x3e08] sm:$0xff]
          %v3580 = vld [vmem:[%s3329 + $0x3e10] sm:$0xff]
          %v3581 = vld [vmem:[%s3329 + $0x3e18] sm:$0xff]
          %v3582 = vld [vmem:[%s3329 + $0x3e20] sm:$0xff]
          %v3583 = vld [vmem:[%s3329 + $0x3e28] sm:$0xff]
          %v3584 = vld [vmem:[%s3329 + $0x3e30] sm:$0xff]
          %v3585 = vld [vmem:[%s3329 + $0x3e38] sm:$0xff]
          %v3586 = vunpack.c.l.s8.bf16 %v3330
          %v3587 = vunpack.c.l.s8.bf16 %v3331
          %v3588 = vunpack.c.l.s8.bf16 %v3332
          %v3589 = vunpack.c.l.s8.bf16 %v3333
          %v3590 = vunpack.c.l.s8.bf16 %v3334
          %v3591 = vunpack.c.l.s8.bf16 %v3335
          %v3592 = vunpack.c.l.s8.bf16 %v3336
          %v3593 = vunpack.c.l.s8.bf16 %v3337
          %v3594 = vunpack.c.h.s8.bf16 %v3330
          %v3595 = vunpack.c.h.s8.bf16 %v3331
          %v3596 = vunpack.c.h.s8.bf16 %v3332
          %v3597 = vunpack.c.h.s8.bf16 %v3333
          %v3598 = vunpack.c.h.s8.bf16 %v3334
          %v3599 = vunpack.c.h.s8.bf16 %v3335
          %v3600 = vunpack.c.h.s8.bf16 %v3336
          %v3601 = vunpack.c.h.s8.bf16 %v3337
          %v3602 = vunpack.c.l.s8.bf16 %v3338
          %v3603 = vunpack.c.l.s8.bf16 %v3339
          %v3604 = vunpack.c.l.s8.bf16 %v3340
          %v3605 = vunpack.c.l.s8.bf16 %v3341
          %v3606 = vunpack.c.l.s8.bf16 %v3342
          %v3607 = vunpack.c.l.s8.bf16 %v3343
          %v3608 = vunpack.c.l.s8.bf16 %v3344
          %v3609 = vunpack.c.l.s8.bf16 %v3345
          %v3610 = vunpack.c.h.s8.bf16 %v3338
          %v3611 = vunpack.c.h.s8.bf16 %v3339
          %v3612 = vunpack.c.h.s8.bf16 %v3340
          %v3613 = vunpack.c.h.s8.bf16 %v3341
          %v3614 = vunpack.c.h.s8.bf16 %v3342
          %v3615 = vunpack.c.h.s8.bf16 %v3343
          %v3616 = vunpack.c.h.s8.bf16 %v3344
          %v3617 = vunpack.c.h.s8.bf16 %v3345
          %v3618 = vunpack.c.l.s8.bf16 %v3346
          %v3619 = vunpack.c.l.s8.bf16 %v3347
          %v3620 = vunpack.c.l.s8.bf16 %v3348
          %v3621 = vunpack.c.l.s8.bf16 %v3349
          %v3622 = vunpack.c.l.s8.bf16 %v3350
          %v3623 = vunpack.c.l.s8.bf16 %v3351
          %v3624 = vunpack.c.l.s8.bf16 %v3352
          %v3625 = vunpack.c.l.s8.bf16 %v3353
          %v3626 = vunpack.c.h.s8.bf16 %v3346
          %v3627 = vunpack.c.h.s8.bf16 %v3347
          %v3628 = vunpack.c.h.s8.bf16 %v3348
          %v3629 = vunpack.c.h.s8.bf16 %v3349
          %v3630 = vunpack.c.h.s8.bf16 %v3350
          %v3631 = vunpack.c.h.s8.bf16 %v3351
          %v3632 = vunpack.c.h.s8.bf16 %v3352
          %v3633 = vunpack.c.h.s8.bf16 %v3353
          %v3634 = vunpack.c.l.s8.bf16 %v3354
          %v3635 = vunpack.c.l.s8.bf16 %v3355
          %v3636 = vunpack.c.l.s8.bf16 %v3356
          %v3637 = vunpack.c.l.s8.bf16 %v3357
          %v3638 = vunpack.c.l.s8.bf16 %v3358
          %v3639 = vunpack.c.l.s8.bf16 %v3359
          %v3640 = vunpack.c.l.s8.bf16 %v3360
          %v3641 = vunpack.c.l.s8.bf16 %v3361
          %v3642 = vunpack.c.h.s8.bf16 %v3354
          %v3643 = vunpack.c.h.s8.bf16 %v3355
          %v3644 = vunpack.c.h.s8.bf16 %v3356
          %v3645 = vunpack.c.h.s8.bf16 %v3357
          %v3646 = vunpack.c.h.s8.bf16 %v3358
          %v3647 = vunpack.c.h.s8.bf16 %v3359
          %v3648 = vunpack.c.h.s8.bf16 %v3360
          %v3649 = vunpack.c.h.s8.bf16 %v3361
          %v3650 = vunpack.c.l.s8.bf16 %v3362
          %v3651 = vunpack.c.l.s8.bf16 %v3363
          %v3652 = vunpack.c.l.s8.bf16 %v3364
          %v3653 = vunpack.c.l.s8.bf16 %v3365
          %v3654 = vunpack.c.l.s8.bf16 %v3366
          %v3655 = vunpack.c.l.s8.bf16 %v3367
          %v3656 = vunpack.c.l.s8.bf16 %v3368
          %v3657 = vunpack.c.l.s8.bf16 %v3369
          %v3658 = vunpack.c.h.s8.bf16 %v3362
          %v3659 = vunpack.c.h.s8.bf16 %v3363
          %v3660 = vunpack.c.h.s8.bf16 %v3364
          %v3661 = vunpack.c.h.s8.bf16 %v3365
          %v3662 = vunpack.c.h.s8.bf16 %v3366
          %v3663 = vunpack.c.h.s8.bf16 %v3367
          %v3664 = vunpack.c.h.s8.bf16 %v3368
          %v3665 = vunpack.c.h.s8.bf16 %v3369
          %v3666 = vunpack.c.l.s8.bf16 %v3370
          %v3667 = vunpack.c.l.s8.bf16 %v3371
          %v3668 = vunpack.c.l.s8.bf16 %v3372
          %v3669 = vunpack.c.l.s8.bf16 %v3373
          %v3670 = vunpack.c.l.s8.bf16 %v3374
          %v3671 = vunpack.c.l.s8.bf16 %v3375
          %v3672 = vunpack.c.l.s8.bf16 %v3376
          %v3673 = vunpack.c.l.s8.bf16 %v3377
          %v3674 = vunpack.c.h.s8.bf16 %v3370
          %v3675 = vunpack.c.h.s8.bf16 %v3371
          %v3676 = vunpack.c.h.s8.bf16 %v3372
          %v3677 = vunpack.c.h.s8.bf16 %v3373
          %v3678 = vunpack.c.h.s8.bf16 %v3374
          %v3679 = vunpack.c.h.s8.bf16 %v3375
          %v3680 = vunpack.c.h.s8.bf16 %v3376
          %v3681 = vunpack.c.h.s8.bf16 %v3377
          %v3682 = vunpack.c.l.s8.bf16 %v3378
          %v3683 = vunpack.c.l.s8.bf16 %v3379
          %v3684 = vunpack.c.l.s8.bf16 %v3380
          %v3685 = vunpack.c.l.s8.bf16 %v3381
          %v3686 = vunpack.c.l.s8.bf16 %v3382
          %v3687 = vunpack.c.l.s8.bf16 %v3383
          %v3688 = vunpack.c.l.s8.bf16 %v3384
          %v3689 = vunpack.c.l.s8.bf16 %v3385
          %v3690 = vunpack.c.h.s8.bf16 %v3378
          %v3691 = vunpack.c.h.s8.bf16 %v3379
          %v3692 = vunpack.c.h.s8.bf16 %v3380
          %v3693 = vunpack.c.h.s8.bf16 %v3381
          %v3694 = vunpack.c.h.s8.bf16 %v3382
          %v3695 = vunpack.c.h.s8.bf16 %v3383
          %v3696 = vunpack.c.h.s8.bf16 %v3384
          %v3697 = vunpack.c.h.s8.bf16 %v3385
          %v3698 = vunpack.c.l.s8.bf16 %v3386
          %v3699 = vunpack.c.l.s8.bf16 %v3387
          %v3700 = vunpack.c.l.s8.bf16 %v3388
          %v3701 = vunpack.c.l.s8.bf16 %v3389
          %v3702 = vunpack.c.l.s8.bf16 %v3390
          %v3703 = vunpack.c.l.s8.bf16 %v3391
          %v3704 = vunpack.c.l.s8.bf16 %v3392
          %v3705 = vunpack.c.l.s8.bf16 %v3393
          %v3706 = vunpack.c.h.s8.bf16 %v3386
          %v3707 = vunpack.c.h.s8.bf16 %v3387
          %v3708 = vunpack.c.h.s8.bf16 %v3388
          %v3709 = vunpack.c.h.s8.bf16 %v3389
          %v3710 = vunpack.c.h.s8.bf16 %v3390
          %v3711 = vunpack.c.h.s8.bf16 %v3391
          %v3712 = vunpack.c.h.s8.bf16 %v3392
          %v3713 = vunpack.c.h.s8.bf16 %v3393
          %v3714 = vunpack.c.l.s8.bf16 %v3394
          %v3715 = vunpack.c.l.s8.bf16 %v3395
          %v3716 = vunpack.c.l.s8.bf16 %v3396
          %v3717 = vunpack.c.l.s8.bf16 %v3397
          %v3718 = vunpack.c.l.s8.bf16 %v3398
          %v3719 = vunpack.c.l.s8.bf16 %v3399
          %v3720 = vunpack.c.l.s8.bf16 %v3400
          %v3721 = vunpack.c.l.s8.bf16 %v3401
          %v3722 = vunpack.c.h.s8.bf16 %v3394
          %v3723 = vunpack.c.h.s8.bf16 %v3395
          %v3724 = vunpack.c.h.s8.bf16 %v3396
          %v3725 = vunpack.c.h.s8.bf16 %v3397
          %v3726 = vunpack.c.h.s8.bf16 %v3398
          %v3727 = vunpack.c.h.s8.bf16 %v3399
          %v3728 = vunpack.c.h.s8.bf16 %v3400
          %v3729 = vunpack.c.h.s8.bf16 %v3401
          %v3730 = vunpack.c.l.s8.bf16 %v3402
          %v3731 = vunpack.c.l.s8.bf16 %v3403
          %v3732 = vunpack.c.l.s8.bf16 %v3404
          %v3733 = vunpack.c.l.s8.bf16 %v3405
          %v3734 = vunpack.c.l.s8.bf16 %v3406
          %v3735 = vunpack.c.l.s8.bf16 %v3407
          %v3736 = vunpack.c.l.s8.bf16 %v3408
          %v3737 = vunpack.c.l.s8.bf16 %v3409
          %v3738 = vunpack.c.h.s8.bf16 %v3402
          %v3739 = vunpack.c.h.s8.bf16 %v3403
          %v3740 = vunpack.c.h.s8.bf16 %v3404
          %v3741 = vunpack.c.h.s8.bf16 %v3405
          %v3742 = vunpack.c.h.s8.bf16 %v3406
          %v3743 = vunpack.c.h.s8.bf16 %v3407
          %v3744 = vunpack.c.h.s8.bf16 %v3408
          %v3745 = vunpack.c.h.s8.bf16 %v3409
          %v3746 = vunpack.c.l.s8.bf16 %v3410
          %v3747 = vunpack.c.l.s8.bf16 %v3411
          %v3748 = vunpack.c.l.s8.bf16 %v3412
          %v3749 = vunpack.c.l.s8.bf16 %v3413
          %v3750 = vunpack.c.l.s8.bf16 %v3414
          %v3751 = vunpack.c.l.s8.bf16 %v3415
          %v3752 = vunpack.c.l.s8.bf16 %v3416
          %v3753 = vunpack.c.l.s8.bf16 %v3417
          %v3754 = vunpack.c.h.s8.bf16 %v3410
          %v3755 = vunpack.c.h.s8.bf16 %v3411
          %v3756 = vunpack.c.h.s8.bf16 %v3412
          %v3757 = vunpack.c.h.s8.bf16 %v3413
          %v3758 = vunpack.c.h.s8.bf16 %v3414
          %v3759 = vunpack.c.h.s8.bf16 %v3415
          %v3760 = vunpack.c.h.s8.bf16 %v3416
          %v3761 = vunpack.c.h.s8.bf16 %v3417
          %v3762 = vunpack.c.l.s8.bf16 %v3418
          %v3763 = vunpack.c.l.s8.bf16 %v3419
          %v3764 = vunpack.c.l.s8.bf16 %v3420
          %v3765 = vunpack.c.l.s8.bf16 %v3421
          %v3766 = vunpack.c.l.s8.bf16 %v3422
          %v3767 = vunpack.c.l.s8.bf16 %v3423
          %v3768 = vunpack.c.l.s8.bf16 %v3424
          %v3769 = vunpack.c.l.s8.bf16 %v3425
          %v3770 = vunpack.c.h.s8.bf16 %v3418
          %v3771 = vunpack.c.h.s8.bf16 %v3419
          %v3772 = vunpack.c.h.s8.bf16 %v3420
          %v3773 = vunpack.c.h.s8.bf16 %v3421
          %v3774 = vunpack.c.h.s8.bf16 %v3422
          %v3775 = vunpack.c.h.s8.bf16 %v3423
          %v3776 = vunpack.c.h.s8.bf16 %v3424
          %v3777 = vunpack.c.h.s8.bf16 %v3425
          %v3778 = vunpack.c.l.s8.bf16 %v3426
          %v3779 = vunpack.c.l.s8.bf16 %v3427
          %v3780 = vunpack.c.l.s8.bf16 %v3428
          %v3781 = vunpack.c.l.s8.bf16 %v3429
          %v3782 = vunpack.c.l.s8.bf16 %v3430
          %v3783 = vunpack.c.l.s8.bf16 %v3431
          %v3784 = vunpack.c.l.s8.bf16 %v3432
          %v3785 = vunpack.c.l.s8.bf16 %v3433
          %v3786 = vunpack.c.h.s8.bf16 %v3426
          %v3787 = vunpack.c.h.s8.bf16 %v3427
          %v3788 = vunpack.c.h.s8.bf16 %v3428
          %v3789 = vunpack.c.h.s8.bf16 %v3429
          %v3790 = vunpack.c.h.s8.bf16 %v3430
          %v3791 = vunpack.c.h.s8.bf16 %v3431
          %v3792 = vunpack.c.h.s8.bf16 %v3432
          %v3793 = vunpack.c.h.s8.bf16 %v3433
          %v3794 = vunpack.c.l.s8.bf16 %v3434
          %v3795 = vunpack.c.l.s8.bf16 %v3435
          %v3796 = vunpack.c.l.s8.bf16 %v3436
          %v3797 = vunpack.c.l.s8.bf16 %v3437
          %v3798 = vunpack.c.l.s8.bf16 %v3438
          %v3799 = vunpack.c.l.s8.bf16 %v3439
          %v3800 = vunpack.c.l.s8.bf16 %v3440
          %v3801 = vunpack.c.l.s8.bf16 %v3441
          %v3802 = vunpack.c.h.s8.bf16 %v3434
          %v3803 = vunpack.c.h.s8.bf16 %v3435
          %v3804 = vunpack.c.h.s8.bf16 %v3436
          %v3805 = vunpack.c.h.s8.bf16 %v3437
          %v3806 = vunpack.c.h.s8.bf16 %v3438
          %v3807 = vunpack.c.h.s8.bf16 %v3439
          %v3808 = vunpack.c.h.s8.bf16 %v3440
          %v3809 = vunpack.c.h.s8.bf16 %v3441
          %v3810 = vunpack.c.l.s8.bf16 %v3442
          %v3811 = vunpack.c.l.s8.bf16 %v3443
          %v3812 = vunpack.c.l.s8.bf16 %v3444
          %v3813 = vunpack.c.l.s8.bf16 %v3445
          %v3814 = vunpack.c.l.s8.bf16 %v3446
          %v3815 = vunpack.c.l.s8.bf16 %v3447
          %v3816 = vunpack.c.l.s8.bf16 %v3448
          %v3817 = vunpack.c.l.s8.bf16 %v3449
          %v3818 = vunpack.c.h.s8.bf16 %v3442
          %v3819 = vunpack.c.h.s8.bf16 %v3443
          %v3820 = vunpack.c.h.s8.bf16 %v3444
          %v3821 = vunpack.c.h.s8.bf16 %v3445
          %v3822 = vunpack.c.h.s8.bf16 %v3446
          %v3823 = vunpack.c.h.s8.bf16 %v3447
          %v3824 = vunpack.c.h.s8.bf16 %v3448
          %v3825 = vunpack.c.h.s8.bf16 %v3449
          %v3826 = vunpack.c.l.s8.bf16 %v3450
          %v3827 = vunpack.c.l.s8.bf16 %v3451
          %v3828 = vunpack.c.l.s8.bf16 %v3452
          %v3829 = vunpack.c.l.s8.bf16 %v3453
          %v3830 = vunpack.c.l.s8.bf16 %v3454
          %v3831 = vunpack.c.l.s8.bf16 %v3455
          %v3832 = vunpack.c.l.s8.bf16 %v3456
          %v3833 = vunpack.c.l.s8.bf16 %v3457
          %v3834 = vunpack.c.h.s8.bf16 %v3450
          %v3835 = vunpack.c.h.s8.bf16 %v3451
          %v3836 = vunpack.c.h.s8.bf16 %v3452
          %v3837 = vunpack.c.h.s8.bf16 %v3453
          %v3838 = vunpack.c.h.s8.bf16 %v3454
          %v3839 = vunpack.c.h.s8.bf16 %v3455
          %v3840 = vunpack.c.h.s8.bf16 %v3456
          %v3841 = vunpack.c.h.s8.bf16 %v3457
          %v3842 = vunpack.c.l.s8.bf16 %v3458
          %v3843 = vunpack.c.l.s8.bf16 %v3459
          %v3844 = vunpack.c.l.s8.bf16 %v3460
          %v3845 = vunpack.c.l.s8.bf16 %v3461
          %v3846 = vunpack.c.l.s8.bf16 %v3462
          %v3847 = vunpack.c.l.s8.bf16 %v3463
          %v3848 = vunpack.c.l.s8.bf16 %v3464
          %v3849 = vunpack.c.l.s8.bf16 %v3465
          %v3850 = vunpack.c.h.s8.bf16 %v3458
          %v3851 = vunpack.c.h.s8.bf16 %v3459
          %v3852 = vunpack.c.h.s8.bf16 %v3460
          %v3853 = vunpack.c.h.s8.bf16 %v3461
          %v3854 = vunpack.c.h.s8.bf16 %v3462
          %v3855 = vunpack.c.h.s8.bf16 %v3463
          %v3856 = vunpack.c.h.s8.bf16 %v3464
          %v3857 = vunpack.c.h.s8.bf16 %v3465
          %v3858 = vunpack.c.l.s8.bf16 %v3466
          %v3859 = vunpack.c.l.s8.bf16 %v3467
          %v3860 = vunpack.c.l.s8.bf16 %v3468
          %v3861 = vunpack.c.l.s8.bf16 %v3469
          %v3862 = vunpack.c.l.s8.bf16 %v3470
          %v3863 = vunpack.c.l.s8.bf16 %v3471
          %v3864 = vunpack.c.l.s8.bf16 %v3472
          %v3865 = vunpack.c.l.s8.bf16 %v3473
          %v3866 = vunpack.c.h.s8.bf16 %v3466
          %v3867 = vunpack.c.h.s8.bf16 %v3467
          %v3868 = vunpack.c.h.s8.bf16 %v3468
          %v3869 = vunpack.c.h.s8.bf16 %v3469
          %v3870 = vunpack.c.h.s8.bf16 %v3470
          %v3871 = vunpack.c.h.s8.bf16 %v3471
          %v3872 = vunpack.c.h.s8.bf16 %v3472
          %v3873 = vunpack.c.h.s8.bf16 %v3473
          %v3874 = vunpack.c.l.s8.bf16 %v3474
          %v3875 = vunpack.c.l.s8.bf16 %v3475
          %v3876 = vunpack.c.l.s8.bf16 %v3476
          %v3877 = vunpack.c.l.s8.bf16 %v3477
          %v3878 = vunpack.c.l.s8.bf16 %v3478
          %v3879 = vunpack.c.l.s8.bf16 %v3479
          %v3880 = vunpack.c.l.s8.bf16 %v3480
          %v3881 = vunpack.c.l.s8.bf16 %v3481
          %v3882 = vunpack.c.h.s8.bf16 %v3474
          %v3883 = vunpack.c.h.s8.bf16 %v3475
          %v3884 = vunpack.c.h.s8.bf16 %v3476
          %v3885 = vunpack.c.h.s8.bf16 %v3477
          %v3886 = vunpack.c.h.s8.bf16 %v3478
          %v3887 = vunpack.c.h.s8.bf16 %v3479
          %v3888 = vunpack.c.h.s8.bf16 %v3480
          %v3889 = vunpack.c.h.s8.bf16 %v3481
          %v3890 = vunpack.c.l.s8.bf16 %v3482
          %v3891 = vunpack.c.l.s8.bf16 %v3483
          %v3892 = vunpack.c.l.s8.bf16 %v3484
          %v3893 = vunpack.c.l.s8.bf16 %v3485
          %v3894 = vunpack.c.l.s8.bf16 %v3486
          %v3895 = vunpack.c.l.s8.bf16 %v3487
          %v3896 = vunpack.c.l.s8.bf16 %v3488
          %v3897 = vunpack.c.l.s8.bf16 %v3489
          %v3898 = vunpack.c.h.s8.bf16 %v3482
          %v3899 = vunpack.c.h.s8.bf16 %v3483
          %v3900 = vunpack.c.h.s8.bf16 %v3484
          %v3901 = vunpack.c.h.s8.bf16 %v3485
          %v3902 = vunpack.c.h.s8.bf16 %v3486
          %v3903 = vunpack.c.h.s8.bf16 %v3487
          %v3904 = vunpack.c.h.s8.bf16 %v3488
          %v3905 = vunpack.c.h.s8.bf16 %v3489
          %v3906 = vunpack.c.l.s8.bf16 %v3490
          %v3907 = vunpack.c.l.s8.bf16 %v3491
          %v3908 = vunpack.c.l.s8.bf16 %v3492
          %v3909 = vunpack.c.l.s8.bf16 %v3493
          %v3910 = vunpack.c.l.s8.bf16 %v3494
          %v3911 = vunpack.c.l.s8.bf16 %v3495
          %v3912 = vunpack.c.l.s8.bf16 %v3496
          %v3913 = vunpack.c.l.s8.bf16 %v3497
          %v3914 = vunpack.c.h.s8.bf16 %v3490
          %v3915 = vunpack.c.h.s8.bf16 %v3491
          %v3916 = vunpack.c.h.s8.bf16 %v3492
          %v3917 = vunpack.c.h.s8.bf16 %v3493
          %v3918 = vunpack.c.h.s8.bf16 %v3494
          %v3919 = vunpack.c.h.s8.bf16 %v3495
          %v3920 = vunpack.c.h.s8.bf16 %v3496
          %v3921 = vunpack.c.h.s8.bf16 %v3497
          %v3922 = vunpack.c.l.s8.bf16 %v3498
          %v3923 = vunpack.c.l.s8.bf16 %v3499
          %v3924 = vunpack.c.l.s8.bf16 %v3500
          %v3925 = vunpack.c.l.s8.bf16 %v3501
          %v3926 = vunpack.c.l.s8.bf16 %v3502
          %v3927 = vunpack.c.l.s8.bf16 %v3503
          %v3928 = vunpack.c.l.s8.bf16 %v3504
          %v3929 = vunpack.c.l.s8.bf16 %v3505
          %v3930 = vunpack.c.h.s8.bf16 %v3498
          %v3931 = vunpack.c.h.s8.bf16 %v3499
          %v3932 = vunpack.c.h.s8.bf16 %v3500
          %v3933 = vunpack.c.h.s8.bf16 %v3501
          %v3934 = vunpack.c.h.s8.bf16 %v3502
          %v3935 = vunpack.c.h.s8.bf16 %v3503
          %v3936 = vunpack.c.h.s8.bf16 %v3504
          %v3937 = vunpack.c.h.s8.bf16 %v3505
          %v3938 = vunpack.c.l.s8.bf16 %v3506
          %v3939 = vunpack.c.l.s8.bf16 %v3507
          %v3940 = vunpack.c.l.s8.bf16 %v3508
          %v3941 = vunpack.c.l.s8.bf16 %v3509
          %v3942 = vunpack.c.l.s8.bf16 %v3510
          %v3943 = vunpack.c.l.s8.bf16 %v3511
          %v3944 = vunpack.c.l.s8.bf16 %v3512
          %v3945 = vunpack.c.l.s8.bf16 %v3513
          %v3946 = vunpack.c.h.s8.bf16 %v3506
          %v3947 = vunpack.c.h.s8.bf16 %v3507
          %v3948 = vunpack.c.h.s8.bf16 %v3508
          %v3949 = vunpack.c.h.s8.bf16 %v3509
          %v3950 = vunpack.c.h.s8.bf16 %v3510
          %v3951 = vunpack.c.h.s8.bf16 %v3511
          %v3952 = vunpack.c.h.s8.bf16 %v3512
          %v3953 = vunpack.c.h.s8.bf16 %v3513
          %v3954 = vunpack.c.l.s8.bf16 %v3514
          %v3955 = vunpack.c.l.s8.bf16 %v3515
          %v3956 = vunpack.c.l.s8.bf16 %v3516
          %v3957 = vunpack.c.l.s8.bf16 %v3517
          %v3958 = vunpack.c.l.s8.bf16 %v3518
          %v3959 = vunpack.c.l.s8.bf16 %v3519
          %v3960 = vunpack.c.l.s8.bf16 %v3520
          %v3961 = vunpack.c.l.s8.bf16 %v3521
          %v3962 = vunpack.c.h.s8.bf16 %v3514
          %v3963 = vunpack.c.h.s8.bf16 %v3515
          %v3964 = vunpack.c.h.s8.bf16 %v3516
          %v3965 = vunpack.c.h.s8.bf16 %v3517
          %v3966 = vunpack.c.h.s8.bf16 %v3518
          %v3967 = vunpack.c.h.s8.bf16 %v3519
          %v3968 = vunpack.c.h.s8.bf16 %v3520
          %v3969 = vunpack.c.h.s8.bf16 %v3521
          %v3970 = vunpack.c.l.s8.bf16 %v3522
          %v3971 = vunpack.c.l.s8.bf16 %v3523
          %v3972 = vunpack.c.l.s8.bf16 %v3524
          %v3973 = vunpack.c.l.s8.bf16 %v3525
          %v3974 = vunpack.c.l.s8.bf16 %v3526
          %v3975 = vunpack.c.l.s8.bf16 %v3527
          %v3976 = vunpack.c.l.s8.bf16 %v3528
          %v3977 = vunpack.c.l.s8.bf16 %v3529
          %v3978 = vunpack.c.h.s8.bf16 %v3522
          %v3979 = vunpack.c.h.s8.bf16 %v3523
          %v3980 = vunpack.c.h.s8.bf16 %v3524
          %v3981 = vunpack.c.h.s8.bf16 %v3525
          %v3982 = vunpack.c.h.s8.bf16 %v3526
          %v3983 = vunpack.c.h.s8.bf16 %v3527
          %v3984 = vunpack.c.h.s8.bf16 %v3528
          %v3985 = vunpack.c.h.s8.bf16 %v3529
          %v3986 = vunpack.c.l.s8.bf16 %v3530
          %v3987 = vunpack.c.l.s8.bf16 %v3531
          %v3988 = vunpack.c.l.s8.bf16 %v3532
          %v3989 = vunpack.c.l.s8.bf16 %v3533
          %v3990 = vunpack.c.l.s8.bf16 %v3534
          %v3991 = vunpack.c.l.s8.bf16 %v3535
          %v3992 = vunpack.c.l.s8.bf16 %v3536
          %v3993 = vunpack.c.l.s8.bf16 %v3537
          %v3994 = vunpack.c.h.s8.bf16 %v3530
          %v3995 = vunpack.c.h.s8.bf16 %v3531
          %v3996 = vunpack.c.h.s8.bf16 %v3532
          %v3997 = vunpack.c.h.s8.bf16 %v3533
          %v3998 = vunpack.c.h.s8.bf16 %v3534
          %v3999 = vunpack.c.h.s8.bf16 %v3535
          %v4000 = vunpack.c.h.s8.bf16 %v3536
          %v4001 = vunpack.c.h.s8.bf16 %v3537
          %v4002 = vunpack.c.l.s8.bf16 %v3538
          %v4003 = vunpack.c.l.s8.bf16 %v3539
          %v4004 = vunpack.c.l.s8.bf16 %v3540
          %v4005 = vunpack.c.l.s8.bf16 %v3541
          %v4006 = vunpack.c.l.s8.bf16 %v3542
          %v4007 = vunpack.c.l.s8.bf16 %v3543
          %v4008 = vunpack.c.l.s8.bf16 %v3544
          %v4009 = vunpack.c.l.s8.bf16 %v3545
          %v4010 = vunpack.c.h.s8.bf16 %v3538
          %v4011 = vunpack.c.h.s8.bf16 %v3539
          %v4012 = vunpack.c.h.s8.bf16 %v3540
          %v4013 = vunpack.c.h.s8.bf16 %v3541
          %v4014 = vunpack.c.h.s8.bf16 %v3542
          %v4015 = vunpack.c.h.s8.bf16 %v3543
          %v4016 = vunpack.c.h.s8.bf16 %v3544
          %v4017 = vunpack.c.h.s8.bf16 %v3545
          %v4018 = vunpack.c.l.s8.bf16 %v3546
          %v4019 = vunpack.c.l.s8.bf16 %v3547
          %v4020 = vunpack.c.l.s8.bf16 %v3548
          %v4021 = vunpack.c.l.s8.bf16 %v3549
          %v4022 = vunpack.c.l.s8.bf16 %v3550
          %v4023 = vunpack.c.l.s8.bf16 %v3551
          %v4024 = vunpack.c.l.s8.bf16 %v3552
          %v4025 = vunpack.c.l.s8.bf16 %v3553
          %v4026 = vunpack.c.h.s8.bf16 %v3546
          %v4027 = vunpack.c.h.s8.bf16 %v3547
          %v4028 = vunpack.c.h.s8.bf16 %v3548
          %v4029 = vunpack.c.h.s8.bf16 %v3549
          %v4030 = vunpack.c.h.s8.bf16 %v3550
          %v4031 = vunpack.c.h.s8.bf16 %v3551
          %v4032 = vunpack.c.h.s8.bf16 %v3552
          %v4033 = vunpack.c.h.s8.bf16 %v3553
          %v4034 = vunpack.c.l.s8.bf16 %v3554
          %v4035 = vunpack.c.l.s8.bf16 %v3555
          %v4036 = vunpack.c.l.s8.bf16 %v3556
          %v4037 = vunpack.c.l.s8.bf16 %v3557
          %v4038 = vunpack.c.l.s8.bf16 %v3558
          %v4039 = vunpack.c.l.s8.bf16 %v3559
          %v4040 = vunpack.c.l.s8.bf16 %v3560
          %v4041 = vunpack.c.l.s8.bf16 %v3561
          %v4042 = vunpack.c.h.s8.bf16 %v3554
          %v4043 = vunpack.c.h.s8.bf16 %v3555
          %v4044 = vunpack.c.h.s8.bf16 %v3556
          %v4045 = vunpack.c.h.s8.bf16 %v3557
          %v4046 = vunpack.c.h.s8.bf16 %v3558
          %v4047 = vunpack.c.h.s8.bf16 %v3559
          %v4048 = vunpack.c.h.s8.bf16 %v3560
          %v4049 = vunpack.c.h.s8.bf16 %v3561
          %v4050 = vunpack.c.l.s8.bf16 %v3562
          %v4051 = vunpack.c.l.s8.bf16 %v3563
          %v4052 = vunpack.c.l.s8.bf16 %v3564
          %v4053 = vunpack.c.l.s8.bf16 %v3565
          %v4054 = vunpack.c.l.s8.bf16 %v3566
          %v4055 = vunpack.c.l.s8.bf16 %v3567
          %v4056 = vunpack.c.l.s8.bf16 %v3568
          %v4057 = vunpack.c.l.s8.bf16 %v3569
          %v4058 = vunpack.c.h.s8.bf16 %v3562
          %v4059 = vunpack.c.h.s8.bf16 %v3563
          %v4060 = vunpack.c.h.s8.bf16 %v3564
          %v4061 = vunpack.c.h.s8.bf16 %v3565
          %v4062 = vunpack.c.h.s8.bf16 %v3566
          %v4063 = vunpack.c.h.s8.bf16 %v3567
          %v4064 = vunpack.c.h.s8.bf16 %v3568
          %v4065 = vunpack.c.h.s8.bf16 %v3569
          %v4066 = vunpack.c.l.s8.bf16 %v3570
          %v4067 = vunpack.c.l.s8.bf16 %v3571
          %v4068 = vunpack.c.l.s8.bf16 %v3572
          %v4069 = vunpack.c.l.s8.bf16 %v3573
          %v4070 = vunpack.c.l.s8.bf16 %v3574
          %v4071 = vunpack.c.l.s8.bf16 %v3575
          %v4072 = vunpack.c.l.s8.bf16 %v3576
          %v4073 = vunpack.c.l.s8.bf16 %v3577
          %v4074 = vunpack.c.h.s8.bf16 %v3570
          %v4075 = vunpack.c.h.s8.bf16 %v3571
          %v4076 = vunpack.c.h.s8.bf16 %v3572
          %v4077 = vunpack.c.h.s8.bf16 %v3573
          %v4078 = vunpack.c.h.s8.bf16 %v3574
          %v4079 = vunpack.c.h.s8.bf16 %v3575
          %v4080 = vunpack.c.h.s8.bf16 %v3576
          %v4081 = vunpack.c.h.s8.bf16 %v3577
          %v4082 = vunpack.c.l.s8.bf16 %v3578
          %v4083 = vunpack.c.l.s8.bf16 %v3579
          %v4084 = vunpack.c.l.s8.bf16 %v3580
          %v4085 = vunpack.c.l.s8.bf16 %v3581
          %v4086 = vunpack.c.l.s8.bf16 %v3582
          %v4087 = vunpack.c.l.s8.bf16 %v3583
          %v4088 = vunpack.c.l.s8.bf16 %v3584
          %v4089 = vunpack.c.l.s8.bf16 %v3585
          %v4090 = vunpack.c.h.s8.bf16 %v3578
          %v4091 = vunpack.c.h.s8.bf16 %v3579
          %v4092 = vunpack.c.h.s8.bf16 %v3580
          %v4093 = vunpack.c.h.s8.bf16 %v3581
          %v4094 = vunpack.c.h.s8.bf16 %v3582
          %v4095 = vunpack.c.h.s8.bf16 %v3583
          %v4096 = vunpack.c.h.s8.bf16 %v3584
          %v4097 = vunpack.c.h.s8.bf16 %v3585
          %v4099 = vcombine.high %v3318, %v3318
          %v4101 = vunpack.c.l.s4 1966171168
          %v4102 = vunpack.c.0.s8 %v4101
          %v4103 = vlaneseq
          %v4104 = vshrl.u32 %v4103, 7
          %v4105 = vsub.s32 %v4102, %v4104
          %v4106 = vrot.slane %v3318, %v4105
          %v4108 = vunpack.c.l.s4 1966171168
          %v4109 = vunpack.c.0.s8 %v4108
          %v4110 = vlaneseq
          %v4111 = vshrl.u32 %v4110, 7
          %v4112 = vsub.s32 %v4109, %v4111
          %v4113 = vrot.slane %v4099, %v4112
          %v4114 = vcombine.high %v4106, %v4106
          %v4115 = vcombine.high %v4113, %v4113
          %v4117 = vunpack.c.l.s4 1966171168
          %v4118 = vunpack.c.0.s8 %v4117
          %v4119 = vlaneseq
          %v4120 = vshrl.u32 %v4119, 7
          %v4121 = vsub.s32 %v4118, %v4120
          %v4122 = vrot.slane %v4106, %v4121
          %v4124 = vunpack.c.l.s4 1966171168
          %v4125 = vunpack.c.0.s8 %v4124
          %v4126 = vlaneseq
          %v4127 = vshrl.u32 %v4126, 7
          %v4128 = vsub.s32 %v4125, %v4127
          %v4129 = vrot.slane %v4113, %v4128
          %v4131 = vunpack.c.l.s4 1966171168
          %v4132 = vunpack.c.0.s8 %v4131
          %v4133 = vlaneseq
          %v4134 = vshrl.u32 %v4133, 7
          %v4135 = vsub.s32 %v4132, %v4134
          %v4136 = vrot.slane %v4114, %v4135
          %v4138 = vunpack.c.l.s4 1966171168
          %v4139 = vunpack.c.0.s8 %v4138
          %v4140 = vlaneseq
          %v4141 = vshrl.u32 %v4140, 7
          %v4142 = vsub.s32 %v4139, %v4141
          %v4143 = vrot.slane %v4115, %v4142
          %v4144 = vcombine.high %v4122, %v4122
          %v4145 = vcombine.high %v4129, %v4129
          %v4146 = vcombine.high %v4136, %v4136
          %v4147 = vcombine.high %v4143, %v4143
          %4156 = vmatprep.subr.bf16.mxu0 %v3587
          %4157 = vmatpush1.bf16.msra.mxu0 %v3586
          %4158 = vmatprep.subr.bf16.mxu0 %v3595
          %4159 = vmatpush1.bf16.msra.mxu0 %v3594
          %4160 = vmatprep.subr.bf16.mxu0 %v3603
          %4161 = vmatpush1.bf16.msra.mxu0 %v3602
          %4162 = vmatprep.subr.bf16.mxu0 %v3611
          %4163 = vmatpush1.bf16.msra.mxu0 %v3610
          %4164 = vmatprep.subr.bf16.mxu0 %v3619
          %4165 = vmatpush1.bf16.msra.mxu0 %v3618
          %4166 = vmatprep.subr.bf16.mxu0 %v3627
          %4167 = vmatpush1.bf16.msra.mxu0 %v3626
          %4168 = vmatprep.subr.bf16.mxu0 %v3635
          %4169 = vmatpush1.bf16.msra.mxu0 %v3634
          %4170 = vmatprep.subr.bf16.mxu0 %v3643
          %4171 = vmatpush1.bf16.msra.mxu0 %v3642
          %4172 = vmatprep.subr.bf16.mxu0 %v3651
          %4173 = vmatpush1.bf16.msra.mxu0 %v3650
          %4174 = vmatprep.subr.bf16.mxu0 %v3659
          %4175 = vmatpush1.bf16.msra.mxu0 %v3658
          %4176 = vmatprep.subr.bf16.mxu0 %v3667
          %4177 = vmatpush1.bf16.msra.mxu0 %v3666
          %4178 = vmatprep.subr.bf16.mxu0 %v3675
          %4179 = vmatpush1.bf16.msra.mxu0 %v3674
          %4180 = vmatprep.subr.bf16.mxu0 %v3683
          %4181 = vmatpush1.bf16.msra.mxu0 %v3682
          %4182 = vmatprep.subr.bf16.mxu0 %v3691
          %4183 = vmatpush1.bf16.msra.mxu0 %v3690
          %4184 = vmatprep.subr.bf16.mxu0 %v3699
          %4185 = vmatpush1.bf16.msra.mxu0 %v3698
          %4186 = vmatprep.subr.bf16.mxu0 %v3707
          %4187 = vmatpush1.bf16.msra.mxu0 %v3706
          %4188 = vmatprep.mubr.bf16.mxu0 %v4136
          %4189 = vmatmul.mubr.bf16.gmra.mrb[0].mxu0 %v4122
          %v4190 = vpop.f32.mrb[0].mxu0
          %v4191 = vadd.f32 0.0, %v4190
          %v4192 = vpop.f32.mrb[0].mxu0
          %v4193 = vadd.f32 0.0, %v4192
          %v4194 = vpop.f32.mrb[0].mxu0
          %v4195 = vpop.f32.mrb[0].mxu0
          %4196 = vdwg.mxu0
          %4197 = vmatprep.subr.bf16.mxu0 %v3715
          %4198 = vmatpush1.bf16.msra.mxu0 %v3714
          %4199 = vmatprep.subr.bf16.mxu0 %v3723
          %4200 = vmatpush1.bf16.msra.mxu0 %v3722
          %4201 = vmatprep.subr.bf16.mxu0 %v3731
          %4202 = vmatpush1.bf16.msra.mxu0 %v3730
          %4203 = vmatprep.subr.bf16.mxu0 %v3739
          %4204 = vmatpush1.bf16.msra.mxu0 %v3738
          %4205 = vmatprep.subr.bf16.mxu0 %v3747
          %4206 = vmatpush1.bf16.msra.mxu0 %v3746
          %4207 = vmatprep.subr.bf16.mxu0 %v3755
          %4208 = vmatpush1.bf16.msra.mxu0 %v3754
          %4209 = vmatprep.subr.bf16.mxu0 %v3763
          %4210 = vmatpush1.bf16.msra.mxu0 %v3762
          %4211 = vmatprep.subr.bf16.mxu0 %v3771
          %4212 = vmatpush1.bf16.msra.mxu0 %v3770
          %4213 = vmatprep.subr.bf16.mxu0 %v3779
          %4214 = vmatpush1.bf16.msra.mxu0 %v3778
          %4215 = vmatprep.subr.bf16.mxu0 %v3787
          %4216 = vmatpush1.bf16.msra.mxu0 %v3786
          %4217 = vmatprep.subr.bf16.mxu0 %v3795
          %4218 = vmatpush1.bf16.msra.mxu0 %v3794
          %4219 = vmatprep.subr.bf16.mxu0 %v3803
          %4220 = vmatpush1.bf16.msra.mxu0 %v3802
          %4221 = vmatprep.subr.bf16.mxu0 %v3811
          %4222 = vmatpush1.bf16.msra.mxu0 %v3810
          %4223 = vmatprep.subr.bf16.mxu0 %v3819
          %4224 = vmatpush1.bf16.msra.mxu0 %v3818
          %4225 = vmatprep.subr.bf16.mxu0 %v3827
          %4226 = vmatpush1.bf16.msra.mxu0 %v3826
          %4227 = vmatprep.subr.bf16.mxu0 %v3835
          %4228 = vmatpush1.bf16.msra.mxu0 %v3834
          %4229 = vmatprep.mubr.bf16.mxu0 %v4146
          %4230 = vmatmul.mubr.bf16.gmra.mrb[0].mxu0 %v4144
          %v4231 = vpop.f32.mrb[0].mxu0
          %v4232 = vadd.f32 %v4191, %v4231
          %v4233 = vpop.f32.mrb[0].mxu0
          %v4234 = vadd.f32 %v4193, %v4233
          %v4235 = vpop.f32.mrb[0].mxu0
          %v4236 = vpop.f32.mrb[0].mxu0
          %4237 = vdwg.mxu0
          %4238 = vmatprep.subr.bf16.mxu0 %v3843
          %4239 = vmatpush1.bf16.msra.mxu0 %v3842
          %4240 = vmatprep.subr.bf16.mxu0 %v3851
          %4241 = vmatpush1.bf16.msra.mxu0 %v3850
          %4242 = vmatprep.subr.bf16.mxu0 %v3859
          %4243 = vmatpush1.bf16.msra.mxu0 %v3858
          %4244 = vmatprep.subr.bf16.mxu0 %v3867
          %4245 = vmatpush1.bf16.msra.mxu0 %v3866
          %4246 = vmatprep.subr.bf16.mxu0 %v3875
          %4247 = vmatpush1.bf16.msra.mxu0 %v3874
          %4248 = vmatprep.subr.bf16.mxu0 %v3883
          %4249 = vmatpush1.bf16.msra.mxu0 %v3882
          %4250 = vmatprep.subr.bf16.mxu0 %v3891
          %4251 = vmatpush1.bf16.msra.mxu0 %v3890
          %4252 = vmatprep.subr.bf16.mxu0 %v3899
          %4253 = vmatpush1.bf16.msra.mxu0 %v3898
          %4254 = vmatprep.subr.bf16.mxu0 %v3907
          %4255 = vmatpush1.bf16.msra.mxu0 %v3906
          %4256 = vmatprep.subr.bf16.mxu0 %v3915
          %4257 = vmatpush1.bf16.msra.mxu0 %v3914
          %4258 = vmatprep.subr.bf16.mxu0 %v3923
          %4259 = vmatpush1.bf16.msra.mxu0 %v3922
          %4260 = vmatprep.subr.bf16.mxu0 %v3931
          %4261 = vmatpush1.bf16.msra.mxu0 %v3930
          %4262 = vmatprep.subr.bf16.mxu0 %v3939
          %4263 = vmatpush1.bf16.msra.mxu0 %v3938
          %4264 = vmatprep.subr.bf16.mxu0 %v3947
          %4265 = vmatpush1.bf16.msra.mxu0 %v3946
          %4266 = vmatprep.subr.bf16.mxu0 %v3955
          %4267 = vmatpush1.bf16.msra.mxu0 %v3954
          %4268 = vmatprep.subr.bf16.mxu0 %v3963
          %4269 = vmatpush1.bf16.msra.mxu0 %v3962
          %4270 = vmatprep.mubr.bf16.mxu0 %v4143
          %4271 = vmatmul.mubr.bf16.gmra.mrb[0].mxu0 %v4129
          %v4272 = vpop.f32.mrb[0].mxu0
          %v4273 = vadd.f32 %v4232, %v4272
          %v4274 = vpop.f32.mrb[0].mxu0
          %v4275 = vadd.f32 %v4234, %v4274
          %v4276 = vpop.f32.mrb[0].mxu0
          %v4277 = vpop.f32.mrb[0].mxu0
          %4278 = vdwg.mxu0
          %4279 = vmatprep.subr.bf16.mxu0 %v3971
          %4280 = vmatpush1.bf16.msra.mxu0 %v3970
          %4281 = vmatprep.subr.bf16.mxu0 %v3979
          %4282 = vmatpush1.bf16.msra.mxu0 %v3978
          %4283 = vmatprep.subr.bf16.mxu0 %v3987
          %4284 = vmatpush1.bf16.msra.mxu0 %v3986
          %4285 = vmatprep.subr.bf16.mxu0 %v3995
          %4286 = vmatpush1.bf16.msra.mxu0 %v3994
          %4287 = vmatprep.subr.bf16.mxu0 %v4003
          %4288 = vmatpush1.bf16.msra.mxu0 %v4002
          %4289 = vmatprep.subr.bf16.mxu0 %v4011
          %4290 = vmatpush1.bf16.msra.mxu0 %v4010
          %4291 = vmatprep.subr.bf16.mxu0 %v4019
          %4292 = vmatpush1.bf16.msra.mxu0 %v4018
          %4293 = vmatprep.subr.bf16.mxu0 %v4027
          %4294 = vmatpush1.bf16.msra.mxu0 %v4026
          %4295 = vmatprep.subr.bf16.mxu0 %v4035
          %4296 = vmatpush1.bf16.msra.mxu0 %v4034
          %4297 = vmatprep.subr.bf16.mxu0 %v4043
          %4298 = vmatpush1.bf16.msra.mxu0 %v4042
          %4299 = vmatprep.subr.bf16.mxu0 %v4051
          %4300 = vmatpush1.bf16.msra.mxu0 %v4050
          %4301 = vmatprep.subr.bf16.mxu0 %v4059
          %4302 = vmatpush1.bf16.msra.mxu0 %v4058
          %4303 = vmatprep.subr.bf16.mxu0 %v4067
          %4304 = vmatpush1.bf16.msra.mxu0 %v4066
          %4305 = vmatprep.subr.bf16.mxu0 %v4075
          %4306 = vmatpush1.bf16.msra.mxu0 %v4074
          %4307 = vmatprep.subr.bf16.mxu0 %v4083
          %4308 = vmatpush1.bf16.msra.mxu0 %v4082
          %4309 = vmatprep.subr.bf16.mxu0 %v4091
          %4310 = vmatpush1.bf16.msra.mxu0 %v4090
          %4311 = vmatprep.mubr.bf16.mxu0 %v4147
          %4312 = vmatmul.mubr.bf16.gmra.mrb[0].mxu0 %v4145
          %v4313 = vpop.f32.mrb[0].mxu0
          %v4314 = vadd.f32 %v4273, %v4313
          %v4315 = vpop.f32.mrb[0].mxu0
          %v4316 = vadd.f32 %v4275, %v4315
          %v4317 = vpop.f32.mrb[0].mxu0
          %v4318 = vpop.f32.mrb[0].mxu0
          %4319 = vdwg.mxu0
          %4320 = vmatprep.subr.bf16.mxu0 %v3589
          %4321 = vmatpush1.bf16.msra.mxu0 %v3588
          %4322 = vmatprep.subr.bf16.mxu0 %v3597
          %4323 = vmatpush1.bf16.msra.mxu0 %v3596
          %4324 = vmatprep.subr.bf16.mxu0 %v3605
          %4325 = vmatpush1.bf16.msra.mxu0 %v3604
          %4326 = vmatprep.subr.bf16.mxu0 %v3613
          %4327 = vmatpush1.bf16.msra.mxu0 %v3612
          %4328 = vmatprep.subr.bf16.mxu0 %v3621
          %4329 = vmatpush1.bf16.msra.mxu0 %v3620
          %4330 = vmatprep.subr.bf16.mxu0 %v3629
          %4331 = vmatpush1.bf16.msra.mxu0 %v3628
          %4332 = vmatprep.subr.bf16.mxu0 %v3637
          %4333 = vmatpush1.bf16.msra.mxu0 %v3636
          %4334 = vmatprep.subr.bf16.mxu0 %v3645
          %4335 = vmatpush1.bf16.msra.mxu0 %v3644
          %4336 = vmatprep.subr.bf16.mxu0 %v3653
          %4337 = vmatpush1.bf16.msra.mxu0 %v3652
          %4338 = vmatprep.subr.bf16.mxu0 %v3661
          %4339 = vmatpush1.bf16.msra.mxu0 %v3660
          %4340 = vmatprep.subr.bf16.mxu0 %v3669
          %4341 = vmatpush1.bf16.msra.mxu0 %v3668
          %4342 = vmatprep.subr.bf16.mxu0 %v3677
          %4343 = vmatpush1.bf16.msra.mxu0 %v3676
          %4344 = vmatprep.subr.bf16.mxu0 %v3685
          %4345 = vmatpush1.bf16.msra.mxu0 %v3684
          %4346 = vmatprep.subr.bf16.mxu0 %v3693
          %4347 = vmatpush1.bf16.msra.mxu0 %v3692
          %4348 = vmatprep.subr.bf16.mxu0 %v3701
          %4349 = vmatpush1.bf16.msra.mxu0 %v3700
          %4350 = vmatprep.subr.bf16.mxu0 %v3709
          %4351 = vmatpush1.bf16.msra.mxu0 %v3708
          %4352 = vmatprep.mubr.bf16.mxu0 %v4136
          %4353 = vmatmul.mubr.bf16.gmra.mrb[0].mxu0 %v4122
          %v4354 = vpop.f32.mrb[0].mxu0
          %v4355 = vadd.f32 0.0, %v4354
          %v4356 = vpop.f32.mrb[0].mxu0
          %v4357 = vadd.f32 0.0, %v4356
          %v4358 = vpop.f32.mrb[0].mxu0
          %v4359 = vpop.f32.mrb[0].mxu0
          %4360 = vdwg.mxu0
          %4361 = vmatprep.subr.bf16.mxu0 %v3717
          %4362 = vmatpush1.bf16.msra.mxu0 %v3716
          %4363 = vmatprep.subr.bf16.mxu0 %v3725
          %4364 = vmatpush1.bf16.msra.mxu0 %v3724
          %4365 = vmatprep.subr.bf16.mxu0 %v3733
          %4366 = vmatpush1.bf16.msra.mxu0 %v3732
          %4367 = vmatprep.subr.bf16.mxu0 %v3741
          %4368 = vmatpush1.bf16.msra.mxu0 %v3740
          %4369 = vmatprep.subr.bf16.mxu0 %v3749
          %4370 = vmatpush1.bf16.msra.mxu0 %v3748
          %4371 = vmatprep.subr.bf16.mxu0 %v3757
          %4372 = vmatpush1.bf16.msra.mxu0 %v3756
          %4373 = vmatprep.subr.bf16.mxu0 %v3765
          %4374 = vmatpush1.bf16.msra.mxu0 %v3764
          %4375 = vmatprep.subr.bf16.mxu0 %v3773
          %4376 = vmatpush1.bf16.msra.mxu0 %v3772
          %4377 = vmatprep.subr.bf16.mxu0 %v3781
          %4378 = vmatpush1.bf16.msra.mxu0 %v3780
          %4379 = vmatprep.subr.bf16.mxu0 %v3789
          %4380 = vmatpush1.bf16.msra.mxu0 %v3788
          %4381 = vmatprep.subr.bf16.mxu0 %v3797
          %4382 = vmatpush1.bf16.msra.mxu0 %v3796
          %4383 = vmatprep.subr.bf16.mxu0 %v3805
          %4384 = vmatpush1.bf16.msra.mxu0 %v3804
          %4385 = vmatprep.subr.bf16.mxu0 %v3813
          %4386 = vmatpush1.bf16.msra.mxu0 %v3812
          %4387 = vmatprep.subr.bf16.mxu0 %v3821
          %4388 = vmatpush1.bf16.msra.mxu0 %v3820
          %4389 = vmatprep.subr.bf16.mxu0 %v3829
          %4390 = vmatpush1.bf16.msra.mxu0 %v3828
          %4391 = vmatprep.subr.bf16.mxu0 %v3837
          %4392 = vmatpush1.bf16.msra.mxu0 %v3836
          %4393 = vmatprep.mubr.bf16.mxu0 %v4146
          %4394 = vmatmul.mubr.bf16.gmra.mrb[0].mxu0 %v4144
          %v4395 = vpop.f32.mrb[0].mxu0
          %v4396 = vadd.f32 %v4355, %v4395
          %v4397 = vpop.f32.mrb[0].mxu0
          %v4398 = vadd.f32 %v4357, %v4397
          %v4399 = vpop.f32.mrb[0].mxu0
          %v4400 = vpop.f32.mrb[0].mxu0
          %4401 = vdwg.mxu0
          %4402 = vmatprep.subr.bf16.mxu0 %v3845
          %4403 = vmatpush1.bf16.msra.mxu0 %v3844
          %4404 = vmatprep.subr.bf16.mxu0 %v3853
          %4405 = vmatpush1.bf16.msra.mxu0 %v3852
          %4406 = vmatprep.subr.bf16.mxu0 %v3861
          %4407 = vmatpush1.bf16.msra.mxu0 %v3860
          %4408 = vmatprep.subr.bf16.mxu0 %v3869
          %4409 = vmatpush1.bf16.msra.mxu0 %v3868
          %4410 = vmatprep.subr.bf16.mxu0 %v3877
          %4411 = vmatpush1.bf16.msra.mxu0 %v3876
          %4412 = vmatprep.subr.bf16.mxu0 %v3885
          %4413 = vmatpush1.bf16.msra.mxu0 %v3884
          %4414 = vmatprep.subr.bf16.mxu0 %v3893
          %4415 = vmatpush1.bf16.msra.mxu0 %v3892
          %4416 = vmatprep.subr.bf16.mxu0 %v3901
          %4417 = vmatpush1.bf16.msra.mxu0 %v3900
          %4418 = vmatprep.subr.bf16.mxu0 %v3909
          %4419 = vmatpush1.bf16.msra.mxu0 %v3908
          %4420 = vmatprep.subr.bf16.mxu0 %v3917
          %4421 = vmatpush1.bf16.msra.mxu0 %v3916
          %4422 = vmatprep.subr.bf16.mxu0 %v3925
          %4423 = vmatpush1.bf16.msra.mxu0 %v3924
          %4424 = vmatprep.subr.bf16.mxu0 %v3933
          %4425 = vmatpush1.bf16.msra.mxu0 %v3932
          %4426 = vmatprep.subr.bf16.mxu0 %v3941
          %4427 = vmatpush1.bf16.msra.mxu0 %v3940
          %4428 = vmatprep.subr.bf16.mxu0 %v3949
          %4429 = vmatpush1.bf16.msra.mxu0 %v3948
          %4430 = vmatprep.subr.bf16.mxu0 %v3957
          %4431 = vmatpush1.bf16.msra.mxu0 %v3956
          %4432 = vmatprep.subr.bf16.mxu0 %v3965
          %4433 = vmatpush1.bf16.msra.mxu0 %v3964
          %4434 = vmatprep.mubr.bf16.mxu0 %v4143
          %4435 = vmatmul.mubr.bf16.gmra.mrb[0].mxu0 %v4129
          %v4436 = vpop.f32.mrb[0].mxu0
          %v4437 = vadd.f32 %v4396, %v4436
          %v4438 = vpop.f32.mrb[0].mxu0
          %v4439 = vadd.f32 %v4398, %v4438
          %v4440 = vpop.f32.mrb[0].mxu0
          %v4441 = vpop.f32.mrb[0].mxu0
          %4442 = vdwg.mxu0
          %4443 = vmatprep.subr.bf16.mxu0 %v3973
          %4444 = vmatpush1.bf16.msra.mxu0 %v3972
          %4445 = vmatprep.subr.bf16.mxu0 %v3981
          %4446 = vmatpush1.bf16.msra.mxu0 %v3980
          %4447 = vmatprep.subr.bf16.mxu0 %v3989
          %4448 = vmatpush1.bf16.msra.mxu0 %v3988
          %4449 = vmatprep.subr.bf16.mxu0 %v3997
          %4450 = vmatpush1.bf16.msra.mxu0 %v3996
          %4451 = vmatprep.subr.bf16.mxu0 %v4005
          %4452 = vmatpush1.bf16.msra.mxu0 %v4004
          %4453 = vmatprep.subr.bf16.mxu0 %v4013
          %4454 = vmatpush1.bf16.msra.mxu0 %v4012
          %4455 = vmatprep.subr.bf16.mxu0 %v4021
          %4456 = vmatpush1.bf16.msra.mxu0 %v4020
          %4457 = vmatprep.subr.bf16.mxu0 %v4029
          %4458 = vmatpush1.bf16.msra.mxu0 %v4028
          %4459 = vmatprep.subr.bf16.mxu0 %v4037
          %4460 = vmatpush1.bf16.msra.mxu0 %v4036
          %4461 = vmatprep.subr.bf16.mxu0 %v4045
          %4462 = vmatpush1.bf16.msra.mxu0 %v4044
          %4463 = vmatprep.subr.bf16.mxu0 %v4053
          %4464 = vmatpush1.bf16.msra.mxu0 %v4052
          %4465 = vmatprep.subr.bf16.mxu0 %v4061
          %4466 = vmatpush1.bf16.msra.mxu0 %v4060
          %4467 = vmatprep.subr.bf16.mxu0 %v4069
          %4468 = vmatpush1.bf16.msra.mxu0 %v4068
          %4469 = vmatprep.subr.bf16.mxu0 %v4077
          %4470 = vmatpush1.bf16.msra.mxu0 %v4076
          %4471 = vmatprep.subr.bf16.mxu0 %v4085
          %4472 = vmatpush1.bf16.msra.mxu0 %v4084
          %4473 = vmatprep.subr.bf16.mxu0 %v4093
          %4474 = vmatpush1.bf16.msra.mxu0 %v4092
          %4475 = vmatprep.mubr.bf16.mxu0 %v4147
          %4476 = vmatmul.mubr.bf16.gmra.mrb[0].mxu0 %v4145
          %v4477 = vpop.f32.mrb[0].mxu0
          %v4478 = vadd.f32 %v4437, %v4477
          %v4479 = vpop.f32.mrb[0].mxu0
          %v4480 = vadd.f32 %v4439, %v4479
          %v4481 = vpop.f32.mrb[0].mxu0
          %v4482 = vpop.f32.mrb[0].mxu0
          %4483 = vdwg.mxu0
          %4484 = vmatprep.subr.bf16.mxu0 %v3591
          %4485 = vmatpush1.bf16.msra.mxu0 %v3590
          %4486 = vmatprep.subr.bf16.mxu0 %v3599
          %4487 = vmatpush1.bf16.msra.mxu0 %v3598
          %4488 = vmatprep.subr.bf16.mxu0 %v3607
          %4489 = vmatpush1.bf16.msra.mxu0 %v3606
          %4490 = vmatprep.subr.bf16.mxu0 %v3615
          %4491 = vmatpush1.bf16.msra.mxu0 %v3614
          %4492 = vmatprep.subr.bf16.mxu0 %v3623
          %4493 = vmatpush1.bf16.msra.mxu0 %v3622
          %4494 = vmatprep.subr.bf16.mxu0 %v3631
          %4495 = vmatpush1.bf16.msra.mxu0 %v3630
          %4496 = vmatprep.subr.bf16.mxu0 %v3639
          %4497 = vmatpush1.bf16.msra.mxu0 %v3638
          %4498 = vmatprep.subr.bf16.mxu0 %v3647
          %4499 = vmatpush1.bf16.msra.mxu0 %v3646
          %4500 = vmatprep.subr.bf16.mxu0 %v3655
          %4501 = vmatpush1.bf16.msra.mxu0 %v3654
          %4502 = vmatprep.subr.bf16.mxu0 %v3663
          %4503 = vmatpush1.bf16.msra.mxu0 %v3662
          %4504 = vmatprep.subr.bf16.mxu0 %v3671
          %4505 = vmatpush1.bf16.msra.mxu0 %v3670
          %4506 = vmatprep.subr.bf16.mxu0 %v3679
          %4507 = vmatpush1.bf16.msra.mxu0 %v3678
          %4508 = vmatprep.subr.bf16.mxu0 %v3687
          %4509 = vmatpush1.bf16.msra.mxu0 %v3686
          %4510 = vmatprep.subr.bf16.mxu0 %v3695
          %4511 = vmatpush1.bf16.msra.mxu0 %v3694
          %4512 = vmatprep.subr.bf16.mxu0 %v3703
          %4513 = vmatpush1.bf16.msra.mxu0 %v3702
          %4514 = vmatprep.subr.bf16.mxu0 %v3711
          %4515 = vmatpush1.bf16.msra.mxu0 %v3710
          %4516 = vmatprep.mubr.bf16.mxu0 %v4136
          %4517 = vmatmul.mubr.bf16.gmra.mrb[0].mxu0 %v4122
          %v4518 = vpop.f32.mrb[0].mxu0
          %v4519 = vadd.f32 0.0, %v4518
          %v4520 = vpop.f32.mrb[0].mxu0
          %v4521 = vadd.f32 0.0, %v4520
          %v4522 = vpop.f32.mrb[0].mxu0
          %v4523 = vpop.f32.mrb[0].mxu0
          %4524 = vdwg.mxu0
          %4525 = vmatprep.subr.bf16.mxu0 %v3719
          %4526 = vmatpush1.bf16.msra.mxu0 %v3718
          %4527 = vmatprep.subr.bf16.mxu0 %v3727
          %4528 = vmatpush1.bf16.msra.mxu0 %v3726
          %4529 = vmatprep.subr.bf16.mxu0 %v3735
          %4530 = vmatpush1.bf16.msra.mxu0 %v3734
          %4531 = vmatprep.subr.bf16.mxu0 %v3743
          %4532 = vmatpush1.bf16.msra.mxu0 %v3742
          %4533 = vmatprep.subr.bf16.mxu0 %v3751
          %4534 = vmatpush1.bf16.msra.mxu0 %v3750
          %4535 = vmatprep.subr.bf16.mxu0 %v3759
          %4536 = vmatpush1.bf16.msra.mxu0 %v3758
          %4537 = vmatprep.subr.bf16.mxu0 %v3767
          %4538 = vmatpush1.bf16.msra.mxu0 %v3766
          %4539 = vmatprep.subr.bf16.mxu0 %v3775
          %4540 = vmatpush1.bf16.msra.mxu0 %v3774
          %4541 = vmatprep.subr.bf16.mxu0 %v3783
          %4542 = vmatpush1.bf16.msra.mxu0 %v3782
          %4543 = vmatprep.subr.bf16.mxu0 %v3791
          %4544 = vmatpush1.bf16.msra.mxu0 %v3790
          %4545 = vmatprep.subr.bf16.mxu0 %v3799
          %4546 = vmatpush1.bf16.msra.mxu0 %v3798
          %4547 = vmatprep.subr.bf16.mxu0 %v3807
          %4548 = vmatpush1.bf16.msra.mxu0 %v3806
          %4549 = vmatprep.subr.bf16.mxu0 %v3815
          %4550 = vmatpush1.bf16.msra.mxu0 %v3814
          %4551 = vmatprep.subr.bf16.mxu0 %v3823
          %4552 = vmatpush1.bf16.msra.mxu0 %v3822
          %4553 = vmatprep.subr.bf16.mxu0 %v3831
          %4554 = vmatpush1.bf16.msra.mxu0 %v3830
          %4555 = vmatprep.subr.bf16.mxu0 %v3839
          %4556 = vmatpush1.bf16.msra.mxu0 %v3838
          %4557 = vmatprep.mubr.bf16.mxu0 %v4146
          %4558 = vmatmul.mubr.bf16.gmra.mrb[0].mxu0 %v4144
          %v4559 = vpop.f32.mrb[0].mxu0
          %v4560 = vadd.f32 %v4519, %v4559
          %v4561 = vpop.f32.mrb[0].mxu0
          %v4562 = vadd.f32 %v4521, %v4561
          %v4563 = vpop.f32.mrb[0].mxu0
          %v4564 = vpop.f32.mrb[0].mxu0
          %4565 = vdwg.mxu0
          %4566 = vmatprep.subr.bf16.mxu0 %v3847
          %4567 = vmatpush1.bf16.msra.mxu0 %v3846
          %4568 = vmatprep.subr.bf16.mxu0 %v3855
          %4569 = vmatpush1.bf16.msra.mxu0 %v3854
          %4570 = vmatprep.subr.bf16.mxu0 %v3863
          %4571 = vmatpush1.bf16.msra.mxu0 %v3862
          %4572 = vmatprep.subr.bf16.mxu0 %v3871
          %4573 = vmatpush1.bf16.msra.mxu0 %v3870
          %4574 = vmatprep.subr.bf16.mxu0 %v3879
          %4575 = vmatpush1.bf16.msra.mxu0 %v3878
          %4576 = vmatprep.subr.bf16.mxu0 %v3887
          %4577 = vmatpush1.bf16.msra.mxu0 %v3886
          %4578 = vmatprep.subr.bf16.mxu0 %v3895
          %4579 = vmatpush1.bf16.msra.mxu0 %v3894
          %4580 = vmatprep.subr.bf16.mxu0 %v3903
          %4581 = vmatpush1.bf16.msra.mxu0 %v3902
          %4582 = vmatprep.subr.bf16.mxu0 %v3911
          %4583 = vmatpush1.bf16.msra.mxu0 %v3910
          %4584 = vmatprep.subr.bf16.mxu0 %v3919
          %4585 = vmatpush1.bf16.msra.mxu0 %v3918
          %4586 = vmatprep.subr.bf16.mxu0 %v3927
          %4587 = vmatpush1.bf16.msra.mxu0 %v3926
          %4588 = vmatprep.subr.bf16.mxu0 %v3935
          %4589 = vmatpush1.bf16.msra.mxu0 %v3934
          %4590 = vmatprep.subr.bf16.mxu0 %v3943
          %4591 = vmatpush1.bf16.msra.mxu0 %v3942
          %4592 = vmatprep.subr.bf16.mxu0 %v3951
          %4593 = vmatpush1.bf16.msra.mxu0 %v3950
          %4594 = vmatprep.subr.bf16.mxu0 %v3959
          %4595 = vmatpush1.bf16.msra.mxu0 %v3958
          %4596 = vmatprep.subr.bf16.mxu0 %v3967
          %4597 = vmatpush1.bf16.msra.mxu0 %v3966
          %4598 = vmatprep.mubr.bf16.mxu0 %v4143
          %4599 = vmatmul.mubr.bf16.gmra.mrb[0].mxu0 %v4129
          %v4600 = vpop.f32.mrb[0].mxu0
          %v4601 = vadd.f32 %v4560, %v4600
          %v4602 = vpop.f32.mrb[0].mxu0
          %v4603 = vadd.f32 %v4562, %v4602
          %v4604 = vpop.f32.mrb[0].mxu0
          %v4605 = vpop.f32.mrb[0].mxu0
          %4606 = vdwg.mxu0
          %4607 = vmatprep.subr.bf16.mxu0 %v3975
          %4608 = vmatpush1.bf16.msra.mxu0 %v3974
          %4609 = vmatprep.subr.bf16.mxu0 %v3983
          %4610 = vmatpush1.bf16.msra.mxu0 %v3982
          %4611 = vmatprep.subr.bf16.mxu0 %v3991
          %4612 = vmatpush1.bf16.msra.mxu0 %v3990
          %4613 = vmatprep.subr.bf16.mxu0 %v3999
          %4614 = vmatpush1.bf16.msra.mxu0 %v3998
          %4615 = vmatprep.subr.bf16.mxu0 %v4007
          %4616 = vmatpush1.bf16.msra.mxu0 %v4006
          %4617 = vmatprep.subr.bf16.mxu0 %v4015
          %4618 = vmatpush1.bf16.msra.mxu0 %v4014
          %4619 = vmatprep.subr.bf16.mxu0 %v4023
          %4620 = vmatpush1.bf16.msra.mxu0 %v4022
          %4621 = vmatprep.subr.bf16.mxu0 %v4031
          %4622 = vmatpush1.bf16.msra.mxu0 %v4030
          %4623 = vmatprep.subr.bf16.mxu0 %v4039
          %4624 = vmatpush1.bf16.msra.mxu0 %v4038
          %4625 = vmatprep.subr.bf16.mxu0 %v4047
          %4626 = vmatpush1.bf16.msra.mxu0 %v4046
          %4627 = vmatprep.subr.bf16.mxu0 %v4055
          %4628 = vmatpush1.bf16.msra.mxu0 %v4054
          %4629 = vmatprep.subr.bf16.mxu0 %v4063
          %4630 = vmatpush1.bf16.msra.mxu0 %v4062
          %4631 = vmatprep.subr.bf16.mxu0 %v4071
          %4632 = vmatpush1.bf16.msra.mxu0 %v4070
          %4633 = vmatprep.subr.bf16.mxu0 %v4079
          %4634 = vmatpush1.bf16.msra.mxu0 %v4078
          %4635 = vmatprep.subr.bf16.mxu0 %v4087
          %4636 = vmatpush1.bf16.msra.mxu0 %v4086
          %4637 = vmatprep.subr.bf16.mxu0 %v4095
          %4638 = vmatpush1.bf16.msra.mxu0 %v4094
          %4639 = vmatprep.mubr.bf16.mxu0 %v4147
          %4640 = vmatmul.mubr.bf16.gmra.mrb[0].mxu0 %v4145
          %v4641 = vpop.f32.mrb[0].mxu0
          %v4642 = vadd.f32 %v4601, %v4641
          %v4643 = vpop.f32.mrb[0].mxu0
          %v4644 = vadd.f32 %v4603, %v4643
          %v4645 = vpop.f32.mrb[0].mxu0
          %v4646 = vpop.f32.mrb[0].mxu0
          %4647 = vdwg.mxu0
          %4648 = vmatprep.subr.bf16.mxu0 %v3593
          %4649 = vmatpush1.bf16.msra.mxu0 %v3592
          %4650 = vmatprep.subr.bf16.mxu0 %v3601
          %4651 = vmatpush1.bf16.msra.mxu0 %v3600
          %4652 = vmatprep.subr.bf16.mxu0 %v3609
          %4653 = vmatpush1.bf16.msra.mxu0 %v3608
          %4654 = vmatprep.subr.bf16.mxu0 %v3617
          %4655 = vmatpush1.bf16.msra.mxu0 %v3616
          %4656 = vmatprep.subr.bf16.mxu0 %v3625
          %4657 = vmatpush1.bf16.msra.mxu0 %v3624
          %4658 = vmatprep.subr.bf16.mxu0 %v3633
          %4659 = vmatpush1.bf16.msra.mxu0 %v3632
          %4660 = vmatprep.subr.bf16.mxu0 %v3641
          %4661 = vmatpush1.bf16.msra.mxu0 %v3640
          %4662 = vmatprep.subr.bf16.mxu0 %v3649
          %4663 = vmatpush1.bf16.msra.mxu0 %v3648
          %4664 = vmatprep.subr.bf16.mxu0 %v3657
          %4665 = vmatpush1.bf16.msra.mxu0 %v3656
          %4666 = vmatprep.subr.bf16.mxu0 %v3665
          %4667 = vmatpush1.bf16.msra.mxu0 %v3664
          %4668 = vmatprep.subr.bf16.mxu0 %v3673
          %4669 = vmatpush1.bf16.msra.mxu0 %v3672
          %4670 = vmatprep.subr.bf16.mxu0 %v3681
          %4671 = vmatpush1.bf16.msra.mxu0 %v3680
          %4672 = vmatprep.subr.bf16.mxu0 %v3689
          %4673 = vmatpush1.bf16.msra.mxu0 %v3688
          %4674 = vmatprep.subr.bf16.mxu0 %v3697
          %4675 = vmatpush1.bf16.msra.mxu0 %v3696
          %4676 = vmatprep.subr.bf16.mxu0 %v3705
          %4677 = vmatpush1.bf16.msra.mxu0 %v3704
          %4678 = vmatprep.subr.bf16.mxu0 %v3713
          %4679 = vmatpush1.bf16.msra.mxu0 %v3712
          %4680 = vmatprep.mubr.bf16.mxu0 %v4136
          %4681 = vmatmul.mubr.bf16.gmra.mrb[0].mxu0 %v4122
          %v4682 = vpop.f32.mrb[0].mxu0
          %v4683 = vadd.f32 0.0, %v4682
          %v4684 = vpop.f32.mrb[0].mxu0
          %v4685 = vadd.f32 0.0, %v4684
          %v4686 = vpop.f32.mrb[0].mxu0
          %v4687 = vpop.f32.mrb[0].mxu0
          %4688 = vdwg.mxu0
          %4689 = vmatprep.subr.bf16.mxu0 %v3721
          %4690 = vmatpush1.bf16.msra.mxu0 %v3720
          %4691 = vmatprep.subr.bf16.mxu0 %v3729
          %4692 = vmatpush1.bf16.msra.mxu0 %v3728
          %4693 = vmatprep.subr.bf16.mxu0 %v3737
          %4694 = vmatpush1.bf16.msra.mxu0 %v3736
          %4695 = vmatprep.subr.bf16.mxu0 %v3745
          %4696 = vmatpush1.bf16.msra.mxu0 %v3744
          %4697 = vmatprep.subr.bf16.mxu0 %v3753
          %4698 = vmatpush1.bf16.msra.mxu0 %v3752
          %4699 = vmatprep.subr.bf16.mxu0 %v3761
          %4700 = vmatpush1.bf16.msra.mxu0 %v3760
          %4701 = vmatprep.subr.bf16.mxu0 %v3769
          %4702 = vmatpush1.bf16.msra.mxu0 %v3768
          %4703 = vmatprep.subr.bf16.mxu0 %v3777
          %4704 = vmatpush1.bf16.msra.mxu0 %v3776
          %4705 = vmatprep.subr.bf16.mxu0 %v3785
          %4706 = vmatpush1.bf16.msra.mxu0 %v3784
          %4707 = vmatprep.subr.bf16.mxu0 %v3793
          %4708 = vmatpush1.bf16.msra.mxu0 %v3792
          %4709 = vmatprep.subr.bf16.mxu0 %v3801
          %4710 = vmatpush1.bf16.msra.mxu0 %v3800
          %4711 = vmatprep.subr.bf16.mxu0 %v3809
          %4712 = vmatpush1.bf16.msra.mxu0 %v3808
          %4713 = vmatprep.subr.bf16.mxu0 %v3817
          %4714 = vmatpush1.bf16.msra.mxu0 %v3816
          %4715 = vmatprep.subr.bf16.mxu0 %v3825
          %4716 = vmatpush1.bf16.msra.mxu0 %v3824
          %4717 = vmatprep.subr.bf16.mxu0 %v3833
          %4718 = vmatpush1.bf16.msra.mxu0 %v3832
          %4719 = vmatprep.subr.bf16.mxu0 %v3841
          %4720 = vmatpush1.bf16.msra.mxu0 %v3840
          %4721 = vmatprep.mubr.bf16.mxu0 %v4146
          %4722 = vmatmul.mubr.bf16.gmra.mrb[0].mxu0 %v4144
          %v4723 = vpop.f32.mrb[0].mxu0
          %v4724 = vadd.f32 %v4683, %v4723
          %v4725 = vpop.f32.mrb[0].mxu0
          %v4726 = vadd.f32 %v4685, %v4725
          %v4727 = vpop.f32.mrb[0].mxu0
          %v4728 = vpop.f32.mrb[0].mxu0
          %4729 = vdwg.mxu0
          %4730 = vmatprep.subr.bf16.mxu0 %v3849
          %4731 = vmatpush1.bf16.msra.mxu0 %v3848
          %4732 = vmatprep.subr.bf16.mxu0 %v3857
          %4733 = vmatpush1.bf16.msra.mxu0 %v3856
          %4734 = vmatprep.subr.bf16.mxu0 %v3865
          %4735 = vmatpush1.bf16.msra.mxu0 %v3864
          %4736 = vmatprep.subr.bf16.mxu0 %v3873
          %4737 = vmatpush1.bf16.msra.mxu0 %v3872
          %4738 = vmatprep.subr.bf16.mxu0 %v3881
          %4739 = vmatpush1.bf16.msra.mxu0 %v3880
          %4740 = vmatprep.subr.bf16.mxu0 %v3889
          %4741 = vmatpush1.bf16.msra.mxu0 %v3888
          %4742 = vmatprep.subr.bf16.mxu0 %v3897
          %4743 = vmatpush1.bf16.msra.mxu0 %v3896
          %4744 = vmatprep.subr.bf16.mxu0 %v3905
          %4745 = vmatpush1.bf16.msra.mxu0 %v3904
          %4746 = vmatprep.subr.bf16.mxu0 %v3913
          %4747 = vmatpush1.bf16.msra.mxu0 %v3912
          %4748 = vmatprep.subr.bf16.mxu0 %v3921
          %4749 = vmatpush1.bf16.msra.mxu0 %v3920
          %4750 = vmatprep.subr.bf16.mxu0 %v3929
          %4751 = vmatpush1.bf16.msra.mxu0 %v3928
          %4752 = vmatprep.subr.bf16.mxu0 %v3937
          %4753 = vmatpush1.bf16.msra.mxu0 %v3936
          %4754 = vmatprep.subr.bf16.mxu0 %v3945
          %4755 = vmatpush1.bf16.msra.mxu0 %v3944
          %4756 = vmatprep.subr.bf16.mxu0 %v3953
          %4757 = vmatpush1.bf16.msra.mxu0 %v3952
          %4758 = vmatprep.subr.bf16.mxu0 %v3961
          %4759 = vmatpush1.bf16.msra.mxu0 %v3960
          %4760 = vmatprep.subr.bf16.mxu0 %v3969
          %4761 = vmatpush1.bf16.msra.mxu0 %v3968
          %4762 = vmatprep.mubr.bf16.mxu0 %v4143
          %4763 = vmatmul.mubr.bf16.gmra.mrb[0].mxu0 %v4129
          %v4764 = vpop.f32.mrb[0].mxu0
          %v4765 = vadd.f32 %v4724, %v4764
          %v4766 = vpop.f32.mrb[0].mxu0
          %v4767 = vadd.f32 %v4726, %v4766
          %v4768 = vpop.f32.mrb[0].mxu0
          %v4769 = vpop.f32.mrb[0].mxu0
          %4770 = vdwg.mxu0
          %4771 = vmatprep.subr.bf16.mxu0 %v3977
          %4772 = vmatpush1.bf16.msra.mxu0 %v3976
          %4773 = vmatprep.subr.bf16.mxu0 %v3985
          %4774 = vmatpush1.bf16.msra.mxu0 %v3984
          %4775 = vmatprep.subr.bf16.mxu0 %v3993
          %4776 = vmatpush1.bf16.msra.mxu0 %v3992
          %4777 = vmatprep.subr.bf16.mxu0 %v4001
          %4778 = vmatpush1.bf16.msra.mxu0 %v4000
          %4779 = vmatprep.subr.bf16.mxu0 %v4009
          %4780 = vmatpush1.bf16.msra.mxu0 %v4008
          %4781 = vmatprep.subr.bf16.mxu0 %v4017
          %4782 = vmatpush1.bf16.msra.mxu0 %v4016
          %4783 = vmatprep.subr.bf16.mxu0 %v4025
          %4784 = vmatpush1.bf16.msra.mxu0 %v4024
          %4785 = vmatprep.subr.bf16.mxu0 %v4033
          %4786 = vmatpush1.bf16.msra.mxu0 %v4032
          %4787 = vmatprep.subr.bf16.mxu0 %v4041
          %4788 = vmatpush1.bf16.msra.mxu0 %v4040
          %4789 = vmatprep.subr.bf16.mxu0 %v4049
          %4790 = vmatpush1.bf16.msra.mxu0 %v4048
          %4791 = vmatprep.subr.bf16.mxu0 %v4057
          %4792 = vmatpush1.bf16.msra.mxu0 %v4056
          %4793 = vmatprep.subr.bf16.mxu0 %v4065
          %4794 = vmatpush1.bf16.msra.mxu0 %v4064
          %4795 = vmatprep.subr.bf16.mxu0 %v4073
          %4796 = vmatpush1.bf16.msra.mxu0 %v4072
          %4797 = vmatprep.subr.bf16.mxu0 %v4081
          %4798 = vmatpush1.bf16.msra.mxu0 %v4080
          %4799 = vmatprep.subr.bf16.mxu0 %v4089
          %4800 = vmatpush1.bf16.msra.mxu0 %v4088
          %4801 = vmatprep.subr.bf16.mxu0 %v4097
          %4802 = vmatpush1.bf16.msra.mxu0 %v4096
          %4803 = vmatprep.mubr.bf16.mxu0 %v4147
          %4804 = vmatmul.mubr.bf16.gmra.mrb[0].mxu0 %v4145
          %v4805 = vpop.f32.mrb[0].mxu0
          %v4806 = vadd.f32 %v4765, %v4805
          %v4807 = vpop.f32.mrb[0].mxu0
          %v4808 = vadd.f32 %v4767, %v4807
          %v4809 = vpop.f32.mrb[0].mxu0
          %v4810 = vpop.f32.mrb[0].mxu0
          %4811 = vdwg.mxu0
          %s4812 = scalar_lea.vmem %s788, %s3326 [#allocation28]
          %v4813 = vld [vmem:[%s4812] sm:$0xff]
          %v4815 = vlaneseq
          %v4816 = vshrl.u32 %v4815, 7
          %v4817 = vsub.s32 0, %v4816
          %v4818 = vrot.slane %v4813, %v4817
          %v4819 = vlaneseq
          %v4820 = vshrl.u32 %v4819, 7
          %v4821 = vsub.s32 1, %v4820
          %v4822 = vrot.slane %v4813, %v4821
          %v4823 = vlaneseq
          %v4824 = vshrl.u32 %v4823, 7
          %v4825 = vsub.s32 2, %v4824
          %v4826 = vrot.slane %v4813, %v4825
          %v4827 = vlaneseq
          %v4828 = vshrl.u32 %v4827, 7
          %v4829 = vsub.s32 3, %v4828
          %v4830 = vrot.slane %v4813, %v4829
          %v4831 = vlaneseq
          %v4832 = vshrl.u32 %v4831, 7
          %v4833 = vsub.s32 4, %v4832
          %v4834 = vrot.slane %v4813, %v4833
          %v4835 = vlaneseq
          %v4836 = vshrl.u32 %v4835, 7
          %v4837 = vsub.s32 5, %v4836
          %v4838 = vrot.slane %v4813, %v4837
          %v4839 = vlaneseq
          %v4840 = vshrl.u32 %v4839, 7
          %v4841 = vsub.s32 6, %v4840
          %v4842 = vrot.slane %v4813, %v4841
          %v4843 = vlaneseq
          %v4844 = vshrl.u32 %v4843, 7
          %v4845 = vsub.s32 7, %v4844
          %v4846 = vrot.slane %v4813, %v4845
          %v4855 = vmul.f32 %v4314, %v4818
          %v4856 = vmul.f32 %v4316, %v4822
          %v4857 = vmul.f32 %v4478, %v4826
          %v4858 = vmul.f32 %v4480, %v4830
          %v4859 = vmul.f32 %v4642, %v4834
          %v4860 = vmul.f32 %v4644, %v4838
          %v4861 = vmul.f32 %v4806, %v4842
          %v4862 = vmul.f32 %v4808, %v4846
          %s4863 = scalar_lea.vmem %s797, %s3326 [#allocation29]
          %v4864 = vld [vmem:[%s4863] sm:$0xff]
          %v4866 = vlaneseq
          %v4867 = vshrl.u32 %v4866, 7
          %v4868 = vsub.s32 0, %v4867
          %v4869 = vrot.slane %v4864, %v4868
          %v4870 = vlaneseq
          %v4871 = vshrl.u32 %v4870, 7
          %v4872 = vsub.s32 1, %v4871
          %v4873 = vrot.slane %v4864, %v4872
          %v4874 = vlaneseq
          %v4875 = vshrl.u32 %v4874, 7
          %v4876 = vsub.s32 2, %v4875
          %v4877 = vrot.slane %v4864, %v4876
          %v4878 = vlaneseq
          %v4879 = vshrl.u32 %v4878, 7
          %v4880 = vsub.s32 3, %v4879
          %v4881 = vrot.slane %v4864, %v4880
          %v4882 = vlaneseq
          %v4883 = vshrl.u32 %v4882, 7
          %v4884 = vsub.s32 4, %v4883
          %v4885 = vrot.slane %v4864, %v4884
          %v4886 = vlaneseq
          %v4887 = vshrl.u32 %v4886, 7
          %v4888 = vsub.s32 5, %v4887
          %v4889 = vrot.slane %v4864, %v4888
          %v4890 = vlaneseq
          %v4891 = vshrl.u32 %v4890, 7
          %v4892 = vsub.s32 6, %v4891
          %v4893 = vrot.slane %v4864, %v4892
          %v4894 = vlaneseq
          %v4895 = vshrl.u32 %v4894, 7
          %v4896 = vsub.s32 7, %v4895
          %v4897 = vrot.slane %v4864, %v4896
          %v4906 = vadd.f32 %v4855, %v4869
          %v4907 = vadd.f32 %v4856, %v4873
          %v4908 = vadd.f32 %v4857, %v4877
          %v4909 = vadd.f32 %v4858, %v4881
          %v4910 = vadd.f32 %v4859, %v4885
          %v4911 = vadd.f32 %v4860, %v4889
          %v4912 = vadd.f32 %v4861, %v4893
          %v4913 = vadd.f32 %v4862, %v4897
          %v4914 = vtanh.pop %v4906
          %v4915 = vtanh.pop %v4907
          %v4916 = vtanh.pop %v4908
          %v4917 = vtanh.pop %v4909
          %v4918 = vtanh.pop %v4910
          %v4919 = vtanh.pop %v4911
          %v4920 = vtanh.pop %v4912
          %v4921 = vtanh.pop %v4913
          %v4930 = vcombine.low %v4914, %v4915
          %v4931 = vcombine.low %v4916, %v4917
          %v4933 = vunpack.c.l.s4 1983009808
          %v4934 = vunpack.c.0.s8 %v4933
          %v4935 = vlaneseq
          %v4936 = vshrl.u32 %v4935, 7
          %v4937 = vsub.s32 %v4934, %v4936
          %v4938 = vrot.slane %v4930, %v4937
          %v4940 = vunpack.c.l.s4 1983009808
          %v4941 = vunpack.c.0.s8 %v4940
          %v4942 = vlaneseq
          %v4943 = vshrl.u32 %v4942, 7
          %v4944 = vsub.s32 %v4941, %v4943
          %v4945 = vrot.slane %v4931, %v4944
          %v4946 = vcombine.low %v4938, %v4945
          %v4947 = vcombine.low %v4918, %v4919
          %v4948 = vcombine.low %v4920, %v4921
          %v4950 = vunpack.c.l.s4 1983009808
          %v4951 = vunpack.c.0.s8 %v4950
          %v4952 = vlaneseq
          %v4953 = vshrl.u32 %v4952, 7
          %v4954 = vsub.s32 %v4951, %v4953
          %v4955 = vrot.slane %v4947, %v4954
          %v4957 = vunpack.c.l.s4 1983009808
          %v4958 = vunpack.c.0.s8 %v4957
          %v4959 = vlaneseq
          %v4960 = vshrl.u32 %v4959, 7
          %v4961 = vsub.s32 %v4958, %v4960
          %v4962 = vrot.slane %v4948, %v4961
          %v4963 = vcombine.low %v4955, %v4962
          %s4966 = smul.addr %s3326, 2
          %s4967 = scalar_lea.vmem %s866, %s4966
          %4968 = vst [vmem:[%s4967] sm:$0xff] %v4946
          %4969 = vst [vmem:[%s4967 + $0x8] sm:$0xff] %v4963
        $region173: #{generator_forward.1} parent=91 // loop_footer
          %s3324 = sadd.s32 1, %s3320
        $region174: #{generator_forward.1} parent=91 // loop_footer_branch
          %3319 = sbr.rel target = $region170
        $region175: #{generator_forward.1} parent=91 // loop_exit
          _
        %s4970 = smul.u32 64, %s43
        %p4971 = scmp.lt.s32.totalorder %s4970, 383
        %s4972 = scalar_select %p4971, %s4970, 383
        %s4973 = smul.addr %s4972, 2
        %s4974 = scalar_lea.vmem %s18, %s4973
        // Predicated region
        $region176: #{generator_forward.1} parent=91 // pred_check
          %p4975 = pneg %p454
        $region177: #{generator_forward.1} parent=91 // pred_check_branch
          %4977 = sbr.rel (%p4975) target = $region179
        $region178: #{generator_forward.1} parent=91 // pred_region
          %s4978 = smul.u32 64, %s43
        $region179: #{generator_forward.1} parent=91 // pred_fallthru
          _
      $region92: #{generator_forward.1} parent=5 // pred_fallthru
        _
      %p4979 = scmp.le.s32.totalorder 2, %s38
      // Predicated region
      $region180: #{generator_forward.1} parent=5 // pred_check
        %p4980 = pneg %p4979
      $region181: #{generator_forward.1} parent=5 // pred_check_branch
        %4982 = sbr.rel (%p4980) target = $region183
      $region182: #{generator_forward.1} parent=5 // pred_region
        %s4983 = ssub.s32 %s38, 2
        // Predicated region
        $region184: #{generator_forward.1} parent=182 // pred_check
          %p4984 = pneg %p460
        $region185: #{generator_forward.1} parent=182 // pred_check_branch
          %4986 = sbr.rel (%p4984) target = $region187
        $region186: #{generator_forward.1} parent=182 // pred_region
          %s4987 = smul.u32 64, %s44
          %p4988 = scmp.lt.s32.totalorder %s4987, 383
          %s4989 = scalar_select %p4988, %s4987, 383
          %s4990 = smul.addr %s4989, 2
          %s4991 = scalar_lea.vmem %s18, %s4990
        $region187: #{generator_forward.1} parent=182 // pred_fallthru
          _
      $region183: #{generator_forward.1} parent=5 // pred_fallthru
        _
    $region6: #{generator_forward.1} parent=1 // loop_footer
      %s42 = sadd.s32 1, %s38
    $region7: #{generator_forward.1} parent=1 // loop_footer_branch
      %37 = sbr.rel target = $region3
    $region8: #{generator_forward.1} parent=1 // loop_exit
      _
    %4992 = vsyncpa [#allocation4], 1
    %s4993 = scalar_lea.sflag [#allocation4], 1
    %4994 = vsyncpa %s4993, 1
    %4995 = vsyncpa [#allocation6], 1
    %4996 = vsyncpa [#allocation9], 1
    %4997 = vsyncpa [#allocation12], 1
    %4998 = vsyncpa [#allocation15], 1
    %4999 = vsyncpa [#allocation18], 1
    %5000 = vsyncpa [#allocation21], 1
    %5001 = vsyncpa [#allocation24], 1
    %5002 = vsyncpa [#allocation27], 1
    %s5003 = scalar_lea.sflag [#allocation27], 1
    %5004 = vsyncpa %s5003, 1
    %5005 = vsyncpa [#allocation30], 1
    %s5006 = scalar_lea.sflag [#allocation30], 1
    %5007 = vsyncpa %s5006, 1

</llo_original>
